<compile_context>
chip_gen: v6e
topology: v6e:2x2x1
jax: 0.10.0
libtpu: 0.0.40
codegen_flags: <defaults>
</compile_context>

<pallas_src>
import functools

import jax
import jax.numpy as jnp
import numpy as np
from jax import lax
from jax.experimental import pallas as pl
from jax.experimental.pallas import tpu as pltpu

EPS = 1e-5


# ----------------------------------------------------------------------------
# Fused Pallas kernel: entire ResNetModified forward for one batch element
# ----------------------------------------------------------------------------
def _resnet_fused_kernel(x_ref, wf_ref, bf_ref, wm_ref, sm_ref, bm_ref,
                         wl_ref, bl_ref, o_ref, *, H, W):
    """
    x_ref : (1, H, W)            network input (Cin=1), folded layout (H, W*1)
    wf_ref: (3, W, W*C)          conv_first banded weights (per dy tap)
    bf_ref: (1, W*C)             conv_first bias, tiled over W
    wm_ref: (8, 3, W*C, W*C)     8 middle convs (4 blocks x 2), banded, BN folded
    sm_ref: (8, 1, W*C)          folded BN scale per middle conv
    bm_ref: (8, 1, W*C)          folded BN bias + conv bias per middle conv
    wl_ref: (3, W*C, W)          conv_last banded weights
    bl_ref: (1, W)               conv_last bias, tiled over W
    o_ref : (1, H, W)            network output (Cout=1)
    """
    f32 = jnp.float32

    def pad_rows(a):
        # one zero row top+bottom -> vertical 'same' padding (stays in VMEM)
        z = jnp.zeros((1, a.shape[1]), f32)
        return jnp.concatenate([z, a, z], axis=0)

    def conv(act, w0, w1, w2, scale, bias):
        # act: (H, K) lane-dense activation; w*: (K, M) banded weights.
        p = pad_rows(act)                                       # (H+2, K)
        acc = jnp.dot(p[0:H], w0, preferred_element_type=f32)
        acc = acc + jnp.dot(p[1:H + 1], w1, preferred_element_type=f32)
        acc = acc + jnp.dot(p[2:H + 2], w2, preferred_element_type=f32)
        if scale is not None:
            acc = acc * scale
        return acc + bias

    x = x_ref[0]                                                # (H, W)

    # conv_first (no BN, no ReLU)
    out1 = conv(x, wf_ref[0], wf_ref[1], wf_ref[2], None, bf_ref[...])

    def res_block(act, j):
        # conv1 + bn1 + relu
        h = conv(act, wm_ref[j, 0], wm_ref[j, 1], wm_ref[j, 2],
                 sm_ref[j], bm_ref[j])
        h = jnp.maximum(h, 0.0)
        # conv2 + bn2 + residual + relu
        h = conv(h, wm_ref[j + 1, 0], wm_ref[j + 1, 1], wm_ref[j + 1, 2],
                 sm_ref[j + 1], bm_ref[j + 1])
        return jnp.maximum(h + act, 0.0)

    out2 = res_block(out1, 0)
    out3 = res_block(out2, 2)
    out3 = jnp.maximum(out3 + out1, 0.0)          # fused skip add + ReLU
    out4 = res_block(out3, 4)
    out5 = res_block(out4, 6)
    out5 = jnp.maximum(out5 + out3, 0.0)          # fused skip add + ReLU

    # conv_last (no BN) + skip from the network input + ReLU
    out = conv(out5, wl_ref[0], wl_ref[1], wl_ref[2], None, bl_ref[...])
    out = jnp.maximum(out + x, 0.0)                              # (H, W)
    o_ref[...] = out.reshape(1, H, W).astype(o_ref.dtype)


# ----------------------------------------------------------------------------
# Wrapper: one pallas_call for the whole network
# ----------------------------------------------------------------------------
def resnet_forward(x_nchw, p):
    N, Cin, H, W = x_nchw.shape
    assert Cin == 1
    WC = p["wm"].shape[-1]                        # W * num_filters
    x = x_nchw.reshape(N, H, W)                   # Cin == 1 -> free squeeze

    kernel = functools.partial(_resnet_fused_kernel, H=H, W=W)
    out = pl.pallas_call(
        kernel,
        out_shape=jax.ShapeDtypeStruct((N, H, W), jnp.float32),
        grid=(N,),
        in_specs=[
            pl.BlockSpec((1, H, W), lambda n: (n, 0, 0)),
            pl.BlockSpec((3, W, WC), lambda n: (0, 0, 0)),
            pl.BlockSpec((1, WC), lambda n: (0, 0)),
            pl.BlockSpec((8, 3, WC, WC), lambda n: (0, 0, 0, 0)),
            pl.BlockSpec((8, 1, WC), lambda n: (0, 0, 0)),
            pl.BlockSpec((8, 1, WC), lambda n: (0, 0, 0)),
            pl.BlockSpec((3, WC, W), lambda n: (0, 0, 0)),
            pl.BlockSpec((1, W), lambda n: (0, 0)),
        ],
        out_specs=pl.BlockSpec((1, H, W), lambda n: (n, 0, 0)),
        compiler_params=pltpu.CompilerParams(
            dimension_semantics=("parallel",)),
    )(x, p["wf"], p["bf"], p["wm"], p["sm"], p["bm"], p["wl"], p["bl"])
    return out.reshape(N, 1, H, W)


# ----------------------------------------------------------------------------
# Parameter construction (deterministic, synthetic) + folding for the kernel
# ----------------------------------------------------------------------------
def make_conv(key, cin, cout):
    kw, kb = jax.random.split(key)
    bound = 1.0 / float(np.sqrt(cin * 9))
    w = jax.random.uniform(kw, (cout, cin, 3, 3), jnp.float32, -bound, bound)
    b = jax.random.uniform(kb, (cout,), jnp.float32, -bound, bound)
    return w, b


def make_bn(key, c):
    k1, k2, k3, k4 = jax.random.split(key, 4)
    gamma = 1.0 + 0.1 * jax.random.normal(k1, (c,), jnp.float32)
    beta = 0.1 * jax.random.normal(k2, (c,), jnp.float32)
    mean = 0.1 * jax.random.normal(k3, (c,), jnp.float32)
    var = 1.0 + 0.5 * jax.random.uniform(k4, (c,), jnp.float32)
    return gamma, beta, mean, var


def make_raw_params(num_filters, key):
    keys = iter(jax.random.split(key, 32))
    raw = {"conv_first": make_conv(next(keys), 1, num_filters)}
    blocks = []
    for _ in range(4):
        w1, b1 = make_conv(next(keys), num_filters, num_filters)
        bn1 = make_bn(next(keys), num_filters)
        w2, b2 = make_conv(next(keys), num_filters, num_filters)
        bn2 = make_bn(next(keys), num_filters)
        blocks.append(((w1, b1, bn1), (w2, b2, bn2)))
    raw["blocks"] = blocks
    raw["conv_last"] = make_conv(next(keys), num_filters, 1)
    return raw


def build_banded(w_pt, W):
    """(Cout, Cin, 3, 3) -> (3, W*Cin, W*Cout) banded matrices (one per dy).

    BW[dy][(x+dx-1)*Cin + ci, x*Cout + co] = w[dy, dx, ci, co] for valid
    x+dx-1 in [0, W); horizontal 'same' padding = zero entries.
    """
    cout, cin = w_pt.shape[0], w_pt.shape[1]
    w_hwio = jnp.transpose(w_pt, (2, 3, 1, 0))          # (3, 3, Cin, Cout)
    shifts = np.zeros((3, W, W), np.float32)
    for dx in range(3):
        for x in range(W):
            xp = x + dx - 1
            if 0 <= xp < W:
                shifts[dx, xp, x] = 1.0
    bw = jnp.einsum("dpx,ydio->ypixo", jnp.asarray(shifts), w_hwio)
    return bw.reshape(3, W * cin, W * cout)


def tile_over_w(v, W):
    # folded index x*C + c picks v[c]  ->  tile over W positions
    return jnp.tile(v, W).reshape(1, -1)


def build_pallas_params(raw, W):
    wf_pt, bf = raw["conv_first"]
    wl_pt, bl = raw["conv_last"]

    wm_list, sm_list, bm_list = [], [], []
    for blk in raw["blocks"]:
        for (w, b, bn) in blk:
            gamma, beta, mean, var = bn
            scale = gamma / jnp.sqrt(var + EPS)
            bias = beta + scale * (b - mean)
            wm_list.append(build_banded(w, W))
            sm_list.append(tile_over_w(scale, W))
            bm_list.append(tile_over_w(bias, W))

    return {
        "wf": build_banded(wf_pt, W),              # (3, W, W*C)
        "bf": tile_over_w(bf, W),                  # (1, W*C)
        "wm": jnp.stack(wm_list),                  # (8, 3, W*C, W*C)
        "sm": jnp.stack(sm_list),                  # (8, 1, W*C)
        "bm": jnp.stack(bm_list),                  # (8, 1, W*C)
        "wl": build_banded(wl_pt, W),              # (3, W*C, W)
        "bl": tile_over_w(bl, W),                  # (1, W)
    }


# ----------------------------------------------------------------------------
# Pure-JAX reference (from raw, unfolded parameters)
# ----------------------------------------------------------------------------
def ref_conv_bn(x_nhwc, w_pt, b, bn=None):
    w_hwio = jnp.transpose(w_pt, (2, 3, 1, 0))
    y = lax.conv_general_dilated(
        x_nhwc, w_hwio, (1, 1), "SAME",
        dimension_numbers=("NHWC", "HWIO", "NHWC")) + b
    if bn is not None:
        gamma, beta, mean, var = bn
        y = (y - mean) * (gamma / jnp.sqrt(var + EPS)) + beta
    return y


def ref_forward(x_nchw, raw):
    x = jnp.transpose(x_nchw, (0, 2, 3, 1))

    def block(h, bp):
        (w1, b1, bn1), (w2, b2, bn2) = bp
        t = jax.nn.relu(ref_conv_bn(h, w1, b1, bn1))
        return jax.nn.relu(ref_conv_bn(t, w2, b2, bn2) + h)

    out1 = ref_conv_bn(x, *raw["conv_first"])
    out2 = block(out1, raw["blocks"][0])
    out3 = block(out2, raw["blocks"][1])
    out3 = jax.nn.relu(out3 + out1)
    out4 = block(out3, raw["blocks"][2])
    out5 = block(out4, raw["blocks"][3])
    out5 = jax.nn.relu(out5 + out3)
    out = jax.nn.relu(ref_conv_bn(out5, *raw["conv_last"]) + x)
    return jnp.transpose(out, (0, 3, 1, 2))


# ----------------------------------------------------------------------------
if __name__ == "__main__":
    N, H, W = 2, 16, 16
    NUM_FILTERS = 8            # W * NUM_FILTERS = 128 -> lane-dense activations

    key = jax.random.PRNGKey(0)
    kx, kp = jax.random.split(key)
    x = jax.random.normal(kx, (N, 1, H, W), jnp.float32)   # PyTorch NCHW input

    raw = make_raw_params(NUM_FILTERS, kp)
    pparams = build_pallas_params(raw, W)

    out = jax.block_until_ready(resnet_forward(x, pparams))
    assert out.shape == (N, 1, H, W), out.shape

    ref = jax.block_until_ready(ref_forward(x, raw))
    np.testing.assert_allclose(np.asarray(out), np.asarray(ref),
                               rtol=1e-4, atol=1e-4)

    print("KERNEL_OK")
</pallas_src>

<mosaic_0001>
module attributes {stable_mosaic.version = 11 : i64} {
  func.func @_resnet_fused_kernel(%arg0: i32, %arg1: memref<1x16x16xf32, #tpu.memory_space<vmem>>, %arg2: memref<3x16x128xf32, #tpu.memory_space<vmem>>, %arg3: memref<1x128xf32, #tpu.memory_space<vmem>>, %arg4: memref<8x3x128x128xf32, #tpu.memory_space<vmem>>, %arg5: memref<8x1x128xf32, #tpu.memory_space<vmem>>, %arg6: memref<8x1x128xf32, #tpu.memory_space<vmem>>, %arg7: memref<3x128x16xf32, #tpu.memory_space<vmem>>, %arg8: memref<1x16xf32, #tpu.memory_space<vmem>>, %arg9: memref<1x16x16xf32, #tpu.memory_space<vmem>>) attributes {dimension_semantics = [#tpu.dimension_semantics<parallel>], iteration_bounds = array<i64: 2>, scalar_prefetch = 0 : i64, scratch_operands = 0 : i64, tpu.core_type = #tpu.core_type<tc>, window_params = [{transform_indices = @transform_0, window_bounds = array<i64: 1, 16, 16>}, {pipeline_mode = #tpu.pipeline_mode<synchronous>, transform_indices = @transform_1, window_bounds = array<i64: 3, 16, 128>}, {pipeline_mode = #tpu.pipeline_mode<synchronous>, transform_indices = @transform_2, window_bounds = array<i64: 1, 128>}, {pipeline_mode = #tpu.pipeline_mode<synchronous>, transform_indices = @transform_3, window_bounds = array<i64: 8, 3, 128, 128>}, {pipeline_mode = #tpu.pipeline_mode<synchronous>, transform_indices = @transform_4, window_bounds = array<i64: 8, 1, 128>}, {pipeline_mode = #tpu.pipeline_mode<synchronous>, transform_indices = @transform_5, window_bounds = array<i64: 8, 1, 128>}, {pipeline_mode = #tpu.pipeline_mode<synchronous>, transform_indices = @transform_6, window_bounds = array<i64: 3, 128, 16>}, {pipeline_mode = #tpu.pipeline_mode<synchronous>, transform_indices = @transform_7, window_bounds = array<i64: 1, 16>}, {transform_indices = @transform_8, window_bounds = array<i64: 1, 16, 16>}]} {
    %c0 = arith.constant 0 : index
    %c0_0 = arith.constant 0 : index
    %c0_1 = arith.constant 0 : index
    %0 = vector.load %arg1[%c0, %c0_0, %c0_1] : memref<1x16x16xf32, #tpu.memory_space<vmem>>, vector<1x16x16xf32>
    %1 = vector.shape_cast %0 : vector<1x16x16xf32> to vector<16x16xf32>
    %c0_2 = arith.constant 0 : index
    %c0_3 = arith.constant 0 : index
    %c0_4 = arith.constant 0 : index
    %2 = vector.load %arg2[%c0_2, %c0_3, %c0_4] : memref<3x16x128xf32, #tpu.memory_space<vmem>>, vector<1x16x128xf32>
    %3 = vector.shape_cast %2 : vector<1x16x128xf32> to vector<16x128xf32>
    %c1 = arith.constant 1 : index
    %c0_5 = arith.constant 0 : index
    %c0_6 = arith.constant 0 : index
    %4 = vector.load %arg2[%c1, %c0_5, %c0_6] : memref<3x16x128xf32, #tpu.memory_space<vmem>>, vector<1x16x128xf32>
    %5 = vector.shape_cast %4 : vector<1x16x128xf32> to vector<16x128xf32>
    %c2 = arith.constant 2 : index
    %c0_7 = arith.constant 0 : index
    %c0_8 = arith.constant 0 : index
    %6 = vector.load %arg2[%c2, %c0_7, %c0_8] : memref<3x16x128xf32, #tpu.memory_space<vmem>>, vector<1x16x128xf32>
    %7 = vector.shape_cast %6 : vector<1x16x128xf32> to vector<16x128xf32>
    %c0_9 = arith.constant 0 : index
    %c0_10 = arith.constant 0 : index
    %8 = vector.load %arg3[%c0_9, %c0_10] : memref<1x128xf32, #tpu.memory_space<vmem>>, vector<1x128xf32>
    %cst = arith.constant 0.000000e+00 : f32
    %9 = vector.broadcast %cst : f32 to vector<1x16xf32>
    %10 = tpu.concatenate %9, %1, %9 in 0 : vector<1x16xf32>, vector<16x16xf32>, vector<1x16xf32> -> vector<18x16xf32>
    %11 = vector.extract_strided_slice %10 {offsets = [0, 0], sizes = [16, 16], strides = [1, 1]} : vector<18x16xf32> to vector<16x16xf32>
    %cst_11 = arith.constant dense<0.000000e+00> : vector<16x128xf32>
    %12 = tpu.matmul %11, %3, %cst_11 {dimension_numbers = #tpu.dot_dimension_numbers<[1], [0], [0], [1], [0, 0, 1, 1], [], []>} : vector<16x16xf32>, vector<16x128xf32>, vector<16x128xf32> -> vector<16x128xf32>
    %13 = vector.extract_strided_slice %10 {offsets = [1, 0], sizes = [16, 16], strides = [1, 1]} : vector<18x16xf32> to vector<16x16xf32>
    %cst_12 = arith.constant dense<0.000000e+00> : vector<16x128xf32>
    %14 = tpu.matmul %13, %5, %cst_12 {dimension_numbers = #tpu.dot_dimension_numbers<[1], [0], [0], [1], [0, 0, 1, 1], [], []>} : vector<16x16xf32>, vector<16x128xf32>, vector<16x128xf32> -> vector<16x128xf32>
    %15 = arith.addf %12, %14 : vector<16x128xf32>
    %16 = vector.extract_strided_slice %10 {offsets = [2, 0], sizes = [16, 16], strides = [1, 1]} : vector<18x16xf32> to vector<16x16xf32>
    %cst_13 = arith.constant dense<0.000000e+00> : vector<16x128xf32>
    %17 = tpu.matmul %16, %7, %cst_13 {dimension_numbers = #tpu.dot_dimension_numbers<[1], [0], [0], [1], [0, 0, 1, 1], [], []>} : vector<16x16xf32>, vector<16x128xf32>, vector<16x128xf32> -> vector<16x128xf32>
    %18 = arith.addf %15, %17 : vector<16x128xf32>
    %19 = vector.broadcast %8 : vector<1x128xf32> to vector<16x128xf32>
    %20 = arith.addf %18, %19 : vector<16x128xf32>
    %c0_14 = arith.constant 0 : index
    %c0_15 = arith.constant 0 : index
    %c0_16 = arith.constant 0 : index
    %c0_17 = arith.constant 0 : index
    %21 = vector.load %arg4[%c0_14, %c0_15, %c0_16, %c0_17] : memref<8x3x128x128xf32, #tpu.memory_space<vmem>>, vector<1x1x128x128xf32>
    %22 = vector.shape_cast %21 : vector<1x1x128x128xf32> to vector<128x128xf32>
    %c0_18 = arith.constant 0 : index
    %c1_19 = arith.constant 1 : index
    %c0_20 = arith.constant 0 : index
    %c0_21 = arith.constant 0 : index
    %23 = vector.load %arg4[%c0_18, %c1_19, %c0_20, %c0_21] : memref<8x3x128x128xf32, #tpu.memory_space<vmem>>, vector<1x1x128x128xf32>
    %24 = vector.shape_cast %23 : vector<1x1x128x128xf32> to vector<128x128xf32>
    %c0_22 = arith.constant 0 : index
    %c2_23 = arith.constant 2 : index
    %c0_24 = arith.constant 0 : index
    %c0_25 = arith.constant 0 : index
    %25 = vector.load %arg4[%c0_22, %c2_23, %c0_24, %c0_25] : memref<8x3x128x128xf32, #tpu.memory_space<vmem>>, vector<1x1x128x128xf32>
    %26 = vector.shape_cast %25 : vector<1x1x128x128xf32> to vector<128x128xf32>
    %c0_26 = arith.constant 0 : index
    %c0_27 = arith.constant 0 : index
    %c0_28 = arith.constant 0 : index
    %27 = vector.load %arg5[%c0_26, %c0_27, %c0_28] : memref<8x1x128xf32, #tpu.memory_space<vmem>>, vector<1x1x128xf32>
    %28 = vector.shape_cast %27 : vector<1x1x128xf32> to vector<1x128xf32>
    %c0_29 = arith.constant 0 : index
    %c0_30 = arith.constant 0 : index
    %c0_31 = arith.constant 0 : index
    %29 = vector.load %arg6[%c0_29, %c0_30, %c0_31] : memref<8x1x128xf32, #tpu.memory_space<vmem>>, vector<1x1x128xf32>
    %30 = vector.shape_cast %29 : vector<1x1x128xf32> to vector<1x128xf32>
    %cst_32 = arith.constant 0.000000e+00 : f32
    %31 = vector.broadcast %cst_32 : f32 to vector<1x128xf32>
    %32 = tpu.concatenate %31, %20, %31 in 0 : vector<1x128xf32>, vector<16x128xf32>, vector<1x128xf32> -> vector<18x128xf32>
    %33 = vector.extract_strided_slice %32 {offsets = [0, 0], sizes = [16, 128], strides = [1, 1]} : vector<18x128xf32> to vector<16x128xf32>
    %cst_33 = arith.constant dense<0.000000e+00> : vector<16x128xf32>
    %34 = tpu.matmul %33, %22, %cst_33 {dimension_numbers = #tpu.dot_dimension_numbers<[1], [0], [0], [1], [0, 0, 1, 1], [], []>} : vector<16x128xf32>, vector<128x128xf32>, vector<16x128xf32> -> vector<16x128xf32>
    %35 = vector.extract_strided_slice %32 {offsets = [1, 0], sizes = [16, 128], strides = [1, 1]} : vector<18x128xf32> to vector<16x128xf32>
    %cst_34 = arith.constant dense<0.000000e+00> : vector<16x128xf32>
    %36 = tpu.matmul %35, %24, %cst_34 {dimension_numbers = #tpu.dot_dimension_numbers<[1], [0], [0], [1], [0, 0, 1, 1], [], []>} : vector<16x128xf32>, vector<128x128xf32>, vector<16x128xf32> -> vector<16x128xf32>
    %37 = arith.addf %34, %36 : vector<16x128xf32>
    %38 = vector.extract_strided_slice %32 {offsets = [2, 0], sizes = [16, 128], strides = [1, 1]} : vector<18x128xf32> to vector<16x128xf32>
    %cst_35 = arith.constant dense<0.000000e+00> : vector<16x128xf32>
    %39 = tpu.matmul %38, %26, %cst_35 {dimension_numbers = #tpu.dot_dimension_numbers<[1], [0], [0], [1], [0, 0, 1, 1], [], []>} : vector<16x128xf32>, vector<128x128xf32>, vector<16x128xf32> -> vector<16x128xf32>
    %40 = arith.addf %37, %39 : vector<16x128xf32>
    %41 = vector.broadcast %28 : vector<1x128xf32> to vector<16x128xf32>
    %42 = arith.mulf %40, %41 : vector<16x128xf32>
    %43 = vector.broadcast %30 : vector<1x128xf32> to vector<16x128xf32>
    %44 = arith.addf %42, %43 : vector<16x128xf32>
    %cst_36 = arith.constant 0.000000e+00 : f32
    %45 = vector.broadcast %cst_36 : f32 to vector<16x128xf32>
    %46 = arith.maximumf %44, %45 : vector<16x128xf32>
    %c1_37 = arith.constant 1 : index
    %c0_38 = arith.constant 0 : index
    %c0_39 = arith.constant 0 : index
    %c0_40 = arith.constant 0 : index
    %47 = vector.load %arg4[%c1_37, %c0_38, %c0_39, %c0_40] : memref<8x3x128x128xf32, #tpu.memory_space<vmem>>, vector<1x1x128x128xf32>
    %48 = vector.shape_cast %47 : vector<1x1x128x128xf32> to vector<128x128xf32>
    %c1_41 = arith.constant 1 : index
    %c1_42 = arith.constant 1 : index
    %c0_43 = arith.constant 0 : index
    %c0_44 = arith.constant 0 : index
    %49 = vector.load %arg4[%c1_41, %c1_42, %c0_43, %c0_44] : memref<8x3x128x128xf32, #tpu.memory_space<vmem>>, vector<1x1x128x128xf32>
    %50 = vector.shape_cast %49 : vector<1x1x128x128xf32> to vector<128x128xf32>
    %c1_45 = arith.constant 1 : index
    %c2_46 = arith.constant 2 : index
    %c0_47 = arith.constant 0 : index
    %c0_48 = arith.constant 0 : index
    %51 = vector.load %arg4[%c1_45, %c2_46, %c0_47, %c0_48] : memref<8x3x128x128xf32, #tpu.memory_space<vmem>>, vector<1x1x128x128xf32>
    %52 = vector.shape_cast %51 : vector<1x1x128x128xf32> to vector<128x128xf32>
    %c1_49 = arith.constant 1 : index
    %c0_50 = arith.constant 0 : index
    %c0_51 = arith.constant 0 : index
    %53 = vector.load %arg5[%c1_49, %c0_50, %c0_51] : memref<8x1x128xf32, #tpu.memory_space<vmem>>, vector<1x1x128xf32>
    %54 = vector.shape_cast %53 : vector<1x1x128xf32> to vector<1x128xf32>
    %c1_52 = arith.constant 1 : index
    %c0_53 = arith.constant 0 : index
    %c0_54 = arith.constant 0 : index
    %55 = vector.load %arg6[%c1_52, %c0_53, %c0_54] : memref<8x1x128xf32, #tpu.memory_space<vmem>>, vector<1x1x128xf32>
    %56 = vector.shape_cast %55 : vector<1x1x128xf32> to vector<1x128xf32>
    %cst_55 = arith.constant 0.000000e+00 : f32
    %57 = vector.broadcast %cst_55 : f32 to vector<1x128xf32>
    %58 = tpu.concatenate %57, %46, %57 in 0 : vector<1x128xf32>, vector<16x128xf32>, vector<1x128xf32> -> vector<18x128xf32>
    %59 = vector.extract_strided_slice %58 {offsets = [0, 0], sizes = [16, 128], strides = [1, 1]} : vector<18x128xf32> to vector<16x128xf32>
    %cst_56 = arith.constant dense<0.000000e+00> : vector<16x128xf32>
    %60 = tpu.matmul %59, %48, %cst_56 {dimension_numbers = #tpu.dot_dimension_numbers<[1], [0], [0], [1], [0, 0, 1, 1], [], []>} : vector<16x128xf32>, vector<128x128xf32>, vector<16x128xf32> -> vector<16x128xf32>
    %61 = vector.extract_strided_slice %58 {offsets = [1, 0], sizes = [16, 128], strides = [1, 1]} : vector<18x128xf32> to vector<16x128xf32>
    %cst_57 = arith.constant dense<0.000000e+00> : vector<16x128xf32>
    %62 = tpu.matmul %61, %50, %cst_57 {dimension_numbers = #tpu.dot_dimension_numbers<[1], [0], [0], [1], [0, 0, 1, 1], [], []>} : vector<16x128xf32>, vector<128x128xf32>, vector<16x128xf32> -> vector<16x128xf32>
    %63 = arith.addf %60, %62 : vector<16x128xf32>
    %64 = vector.extract_strided_slice %58 {offsets = [2, 0], sizes = [16, 128], strides = [1, 1]} : vector<18x128xf32> to vector<16x128xf32>
    %cst_58 = arith.constant dense<0.000000e+00> : vector<16x128xf32>
    %65 = tpu.matmul %64, %52, %cst_58 {dimension_numbers = #tpu.dot_dimension_numbers<[1], [0], [0], [1], [0, 0, 1, 1], [], []>} : vector<16x128xf32>, vector<128x128xf32>, vector<16x128xf32> -> vector<16x128xf32>
    %66 = arith.addf %63, %65 : vector<16x128xf32>
    %67 = vector.broadcast %54 : vector<1x128xf32> to vector<16x128xf32>
    %68 = arith.mulf %66, %67 : vector<16x128xf32>
    %69 = vector.broadcast %56 : vector<1x128xf32> to vector<16x128xf32>
    %70 = arith.addf %68, %69 : vector<16x128xf32>
    %71 = arith.addf %70, %20 : vector<16x128xf32>
    %cst_59 = arith.constant 0.000000e+00 : f32
    %72 = vector.broadcast %cst_59 : f32 to vector<16x128xf32>
    %73 = arith.maximumf %71, %72 : vector<16x128xf32>
    %c2_60 = arith.constant 2 : index
    %c0_61 = arith.constant 0 : index
    %c0_62 = arith.constant 0 : index
    %c0_63 = arith.constant 0 : index
    %74 = vector.load %arg4[%c2_60, %c0_61, %c0_62, %c0_63] : memref<8x3x128x128xf32, #tpu.memory_space<vmem>>, vector<1x1x128x128xf32>
    %75 = vector.shape_cast %74 : vector<1x1x128x128xf32> to vector<128x128xf32>
    %c2_64 = arith.constant 2 : index
    %c1_65 = arith.constant 1 : index
    %c0_66 = arith.constant 0 : index
    %c0_67 = arith.constant 0 : index
    %76 = vector.load %arg4[%c2_64, %c1_65, %c0_66, %c0_67] : memref<8x3x128x128xf32, #tpu.memory_space<vmem>>, vector<1x1x128x128xf32>
    %77 = vector.shape_cast %76 : vector<1x1x128x128xf32> to vector<128x128xf32>
    %c2_68 = arith.constant 2 : index
    %c2_69 = arith.constant 2 : index
    %c0_70 = arith.constant 0 : index
    %c0_71 = arith.constant 0 : index
    %78 = vector.load %arg4[%c2_68, %c2_69, %c0_70, %c0_71] : memref<8x3x128x128xf32, #tpu.memory_space<vmem>>, vector<1x1x128x128xf32>
    %79 = vector.shape_cast %78 : vector<1x1x128x128xf32> to vector<128x128xf32>
    %c2_72 = arith.constant 2 : index
    %c0_73 = arith.constant 0 : index
    %c0_74 = arith.constant 0 : index
    %80 = vector.load %arg5[%c2_72, %c0_73, %c0_74] : memref<8x1x128xf32, #tpu.memory_space<vmem>>, vector<1x1x128xf32>
    %81 = vector.shape_cast %80 : vector<1x1x128xf32> to vector<1x128xf32>
    %c2_75 = arith.constant 2 : index
    %c0_76 = arith.constant 0 : index
    %c0_77 = arith.constant 0 : index
    %82 = vector.load %arg6[%c2_75, %c0_76, %c0_77] : memref<8x1x128xf32, #tpu.memory_space<vmem>>, vector<1x1x128xf32>
    %83 = vector.shape_cast %82 : vector<1x1x128xf32> to vector<1x128xf32>
    %cst_78 = arith.constant 0.000000e+00 : f32
    %84 = vector.broadcast %cst_78 : f32 to vector<1x128xf32>
    %85 = tpu.concatenate %84, %73, %84 in 0 : vector<1x128xf32>, vector<16x128xf32>, vector<1x128xf32> -> vector<18x128xf32>
    %86 = vector.extract_strided_slice %85 {offsets = [0, 0], sizes = [16, 128], strides = [1, 1]} : vector<18x128xf32> to vector<16x128xf32>
    %cst_79 = arith.constant dense<0.000000e+00> : vector<16x128xf32>
    %87 = tpu.matmul %86, %75, %cst_79 {dimension_numbers = #tpu.dot_dimension_numbers<[1], [0], [0], [1], [0, 0, 1, 1], [], []>} : vector<16x128xf32>, vector<128x128xf32>, vector<16x128xf32> -> vector<16x128xf32>
    %88 = vector.extract_strided_slice %85 {offsets = [1, 0], sizes = [16, 128], strides = [1, 1]} : vector<18x128xf32> to vector<16x128xf32>
    %cst_80 = arith.constant dense<0.000000e+00> : vector<16x128xf32>
    %89 = tpu.matmul %88, %77, %cst_80 {dimension_numbers = #tpu.dot_dimension_numbers<[1], [0], [0], [1], [0, 0, 1, 1], [], []>} : vector<16x128xf32>, vector<128x128xf32>, vector<16x128xf32> -> vector<16x128xf32>
    %90 = arith.addf %87, %89 : vector<16x128xf32>
    %91 = vector.extract_strided_slice %85 {offsets = [2, 0], sizes = [16, 128], strides = [1, 1]} : vector<18x128xf32> to vector<16x128xf32>
    %cst_81 = arith.constant dense<0.000000e+00> : vector<16x128xf32>
    %92 = tpu.matmul %91, %79, %cst_81 {dimension_numbers = #tpu.dot_dimension_numbers<[1], [0], [0], [1], [0, 0, 1, 1], [], []>} : vector<16x128xf32>, vector<128x128xf32>, vector<16x128xf32> -> vector<16x128xf32>
    %93 = arith.addf %90, %92 : vector<16x128xf32>
    %94 = vector.broadcast %81 : vector<1x128xf32> to vector<16x128xf32>
    %95 = arith.mulf %93, %94 : vector<16x128xf32>
    %96 = vector.broadcast %83 : vector<1x128xf32> to vector<16x128xf32>
    %97 = arith.addf %95, %96 : vector<16x128xf32>
    %cst_82 = arith.constant 0.000000e+00 : f32
    %98 = vector.broadcast %cst_82 : f32 to vector<16x128xf32>
    %99 = arith.maximumf %97, %98 : vector<16x128xf32>
    %c3 = arith.constant 3 : index
    %c0_83 = arith.constant 0 : index
    %c0_84 = arith.constant 0 : index
    %c0_85 = arith.constant 0 : index
    %100 = vector.load %arg4[%c3, %c0_83, %c0_84, %c0_85] : memref<8x3x128x128xf32, #tpu.memory_space<vmem>>, vector<1x1x128x128xf32>
    %101 = vector.shape_cast %100 : vector<1x1x128x128xf32> to vector<128x128xf32>
    %c3_86 = arith.constant 3 : index
    %c1_87 = arith.constant 1 : index
    %c0_88 = arith.constant 0 : index
    %c0_89 = arith.constant 0 : index
    %102 = vector.load %arg4[%c3_86, %c1_87, %c0_88, %c0_89] : memref<8x3x128x128xf32, #tpu.memory_space<vmem>>, vector<1x1x128x128xf32>
    %103 = vector.shape_cast %102 : vector<1x1x128x128xf32> to vector<128x128xf32>
    %c3_90 = arith.constant 3 : index
    %c2_91 = arith.constant 2 : index
    %c0_92 = arith.constant 0 : index
    %c0_93 = arith.constant 0 : index
    %104 = vector.load %arg4[%c3_90, %c2_91, %c0_92, %c0_93] : memref<8x3x128x128xf32, #tpu.memory_space<vmem>>, vector<1x1x128x128xf32>
    %105 = vector.shape_cast %104 : vector<1x1x128x128xf32> to vector<128x128xf32>
    %c3_94 = arith.constant 3 : index
    %c0_95 = arith.constant 0 : index
    %c0_96 = arith.constant 0 : index
    %106 = vector.load %arg5[%c3_94, %c0_95, %c0_96] : memref<8x1x128xf32, #tpu.memory_space<vmem>>, vector<1x1x128xf32>
    %107 = vector.shape_cast %106 : vector<1x1x128xf32> to vector<1x128xf32>
    %c3_97 = arith.constant 3 : index
    %c0_98 = arith.constant 0 : index
    %c0_99 = arith.constant 0 : index
    %108 = vector.load %arg6[%c3_97, %c0_98, %c0_99] : memref<8x1x128xf32, #tpu.memory_space<vmem>>, vector<1x1x128xf32>
    %109 = vector.shape_cast %108 : vector<1x1x128xf32> to vector<1x128xf32>
    %cst_100 = arith.constant 0.000000e+00 : f32
    %110 = vector.broadcast %cst_100 : f32 to vector<1x128xf32>
    %111 = tpu.concatenate %110, %99, %110 in 0 : vector<1x128xf32>, vector<16x128xf32>, vector<1x128xf32> -> vector<18x128xf32>
    %112 = vector.extract_strided_slice %111 {offsets = [0, 0], sizes = [16, 128], strides = [1, 1]} : vector<18x128xf32> to vector<16x128xf32>
    %cst_101 = arith.constant dense<0.000000e+00> : vector<16x128xf32>
    %113 = tpu.matmul %112, %101, %cst_101 {dimension_numbers = #tpu.dot_dimension_numbers<[1], [0], [0], [1], [0, 0, 1, 1], [], []>} : vector<16x128xf32>, vector<128x128xf32>, vector<16x128xf32> -> vector<16x128xf32>
    %114 = vector.extract_strided_slice %111 {offsets = [1, 0], sizes = [16, 128], strides = [1, 1]} : vector<18x128xf32> to vector<16x128xf32>
    %cst_102 = arith.constant dense<0.000000e+00> : vector<16x128xf32>
    %115 = tpu.matmul %114, %103, %cst_102 {dimension_numbers = #tpu.dot_dimension_numbers<[1], [0], [0], [1], [0, 0, 1, 1], [], []>} : vector<16x128xf32>, vector<128x128xf32>, vector<16x128xf32> -> vector<16x128xf32>
    %116 = arith.addf %113, %115 : vector<16x128xf32>
    %117 = vector.extract_strided_slice %111 {offsets = [2, 0], sizes = [16, 128], strides = [1, 1]} : vector<18x128xf32> to vector<16x128xf32>
    %cst_103 = arith.constant dense<0.000000e+00> : vector<16x128xf32>
    %118 = tpu.matmul %117, %105, %cst_103 {dimension_numbers = #tpu.dot_dimension_numbers<[1], [0], [0], [1], [0, 0, 1, 1], [], []>} : vector<16x128xf32>, vector<128x128xf32>, vector<16x128xf32> -> vector<16x128xf32>
    %119 = arith.addf %116, %118 : vector<16x128xf32>
    %120 = vector.broadcast %107 : vector<1x128xf32> to vector<16x128xf32>
    %121 = arith.mulf %119, %120 : vector<16x128xf32>
    %122 = vector.broadcast %109 : vector<1x128xf32> to vector<16x128xf32>
    %123 = arith.addf %121, %122 : vector<16x128xf32>
    %124 = arith.addf %123, %73 : vector<16x128xf32>
    %cst_104 = arith.constant 0.000000e+00 : f32
    %125 = vector.broadcast %cst_104 : f32 to vector<16x128xf32>
    %126 = arith.maximumf %124, %125 : vector<16x128xf32>
    %127 = arith.addf %126, %20 : vector<16x128xf32>
    %cst_105 = arith.constant 0.000000e+00 : f32
    %128 = vector.broadcast %cst_105 : f32 to vector<16x128xf32>
    %129 = arith.maximumf %127, %128 : vector<16x128xf32>
    %c4 = arith.constant 4 : index
    %c0_106 = arith.constant 0 : index
    %c0_107 = arith.constant 0 : index
    %c0_108 = arith.constant 0 : index
    %130 = vector.load %arg4[%c4, %c0_106, %c0_107, %c0_108] : memref<8x3x128x128xf32, #tpu.memory_space<vmem>>, vector<1x1x128x128xf32>
    %131 = vector.shape_cast %130 : vector<1x1x128x128xf32> to vector<128x128xf32>
    %c4_109 = arith.constant 4 : index
    %c1_110 = arith.constant 1 : index
    %c0_111 = arith.constant 0 : index
    %c0_112 = arith.constant 0 : index
    %132 = vector.load %arg4[%c4_109, %c1_110, %c0_111, %c0_112] : memref<8x3x128x128xf32, #tpu.memory_space<vmem>>, vector<1x1x128x128xf32>
    %133 = vector.shape_cast %132 : vector<1x1x128x128xf32> to vector<128x128xf32>
    %c4_113 = arith.constant 4 : index
    %c2_114 = arith.constant 2 : index
    %c0_115 = arith.constant 0 : index
    %c0_116 = arith.constant 0 : index
    %134 = vector.load %arg4[%c4_113, %c2_114, %c0_115, %c0_116] : memref<8x3x128x128xf32, #tpu.memory_space<vmem>>, vector<1x1x128x128xf32>
    %135 = vector.shape_cast %134 : vector<1x1x128x128xf32> to vector<128x128xf32>
    %c4_117 = arith.constant 4 : index
    %c0_118 = arith.constant 0 : index
    %c0_119 = arith.constant 0 : index
    %136 = vector.load %arg5[%c4_117, %c0_118, %c0_119] : memref<8x1x128xf32, #tpu.memory_space<vmem>>, vector<1x1x128xf32>
    %137 = vector.shape_cast %136 : vector<1x1x128xf32> to vector<1x128xf32>
    %c4_120 = arith.constant 4 : index
    %c0_121 = arith.constant 0 : index
    %c0_122 = arith.constant 0 : index
    %138 = vector.load %arg6[%c4_120, %c0_121, %c0_122] : memref<8x1x128xf32, #tpu.memory_space<vmem>>, vector<1x1x128xf32>
    %139 = vector.shape_cast %138 : vector<1x1x128xf32> to vector<1x128xf32>
    %cst_123 = arith.constant 0.000000e+00 : f32
    %140 = vector.broadcast %cst_123 : f32 to vector<1x128xf32>
    %141 = tpu.concatenate %140, %129, %140 in 0 : vector<1x128xf32>, vector<16x128xf32>, vector<1x128xf32> -> vector<18x128xf32>
    %142 = vector.extract_strided_slice %141 {offsets = [0, 0], sizes = [16, 128], strides = [1, 1]} : vector<18x128xf32> to vector<16x128xf32>
    %cst_124 = arith.constant dense<0.000000e+00> : vector<16x128xf32>
    %143 = tpu.matmul %142, %131, %cst_124 {dimension_numbers = #tpu.dot_dimension_numbers<[1], [0], [0], [1], [0, 0, 1, 1], [], []>} : vector<16x128xf32>, vector<128x128xf32>, vector<16x128xf32> -> vector<16x128xf32>
    %144 = vector.extract_strided_slice %141 {offsets = [1, 0], sizes = [16, 128], strides = [1, 1]} : vector<18x128xf32> to vector<16x128xf32>
    %cst_125 = arith.constant dense<0.000000e+00> : vector<16x128xf32>
    %145 = tpu.matmul %144, %133, %cst_125 {dimension_numbers = #tpu.dot_dimension_numbers<[1], [0], [0], [1], [0, 0, 1, 1], [], []>} : vector<16x128xf32>, vector<128x128xf32>, vector<16x128xf32> -> vector<16x128xf32>
    %146 = arith.addf %143, %145 : vector<16x128xf32>
    %147 = vector.extract_strided_slice %141 {offsets = [2, 0], sizes = [16, 128], strides = [1, 1]} : vector<18x128xf32> to vector<16x128xf32>
    %cst_126 = arith.constant dense<0.000000e+00> : vector<16x128xf32>
    %148 = tpu.matmul %147, %135, %cst_126 {dimension_numbers = #tpu.dot_dimension_numbers<[1], [0], [0], [1], [0, 0, 1, 1], [], []>} : vector<16x128xf32>, vector<128x128xf32>, vector<16x128xf32> -> vector<16x128xf32>
    %149 = arith.addf %146, %148 : vector<16x128xf32>
    %150 = vector.broadcast %137 : vector<1x128xf32> to vector<16x128xf32>
    %151 = arith.mulf %149, %150 : vector<16x128xf32>
    %152 = vector.broadcast %139 : vector<1x128xf32> to vector<16x128xf32>
    %153 = arith.addf %151, %152 : vector<16x128xf32>
    %cst_127 = arith.constant 0.000000e+00 : f32
    %154 = vector.broadcast %cst_127 : f32 to vector<16x128xf32>
    %155 = arith.maximumf %153, %154 : vector<16x128xf32>
    %c5 = arith.constant 5 : index
    %c0_128 = arith.constant 0 : index
    %c0_129 = arith.constant 0 : index
    %c0_130 = arith.constant 0 : index
    %156 = vector.load %arg4[%c5, %c0_128, %c0_129, %c0_130] : memref<8x3x128x128xf32, #tpu.memory_space<vmem>>, vector<1x1x128x128xf32>
    %157 = vector.shape_cast %156 : vector<1x1x128x128xf32> to vector<128x128xf32>
    %c5_131 = arith.constant 5 : index
    %c1_132 = arith.constant 1 : index
    %c0_133 = arith.constant 0 : index
    %c0_134 = arith.constant 0 : index
    %158 = vector.load %arg4[%c5_131, %c1_132, %c0_133, %c0_134] : memref<8x3x128x128xf32, #tpu.memory_space<vmem>>, vector<1x1x128x128xf32>
    %159 = vector.shape_cast %158 : vector<1x1x128x128xf32> to vector<128x128xf32>
    %c5_135 = arith.constant 5 : index
    %c2_136 = arith.constant 2 : index
    %c0_137 = arith.constant 0 : index
    %c0_138 = arith.constant 0 : index
    %160 = vector.load %arg4[%c5_135, %c2_136, %c0_137, %c0_138] : memref<8x3x128x128xf32, #tpu.memory_space<vmem>>, vector<1x1x128x128xf32>
    %161 = vector.shape_cast %160 : vector<1x1x128x128xf32> to vector<128x128xf32>
    %c5_139 = arith.constant 5 : index
    %c0_140 = arith.constant 0 : index
    %c0_141 = arith.constant 0 : index
    %162 = vector.load %arg5[%c5_139, %c0_140, %c0_141] : memref<8x1x128xf32, #tpu.memory_space<vmem>>, vector<1x1x128xf32>
    %163 = vector.shape_cast %162 : vector<1x1x128xf32> to vector<1x128xf32>
    %c5_142 = arith.constant 5 : index
    %c0_143 = arith.constant 0 : index
    %c0_144 = arith.constant 0 : index
    %164 = vector.load %arg6[%c5_142, %c0_143, %c0_144] : memref<8x1x128xf32, #tpu.memory_space<vmem>>, vector<1x1x128xf32>
    %165 = vector.shape_cast %164 : vector<1x1x128xf32> to vector<1x128xf32>
    %cst_145 = arith.constant 0.000000e+00 : f32
    %166 = vector.broadcast %cst_145 : f32 to vector<1x128xf32>
    %167 = tpu.concatenate %166, %155, %166 in 0 : vector<1x128xf32>, vector<16x128xf32>, vector<1x128xf32> -> vector<18x128xf32>
    %168 = vector.extract_strided_slice %167 {offsets = [0, 0], sizes = [16, 128], strides = [1, 1]} : vector<18x128xf32> to vector<16x128xf32>
    %cst_146 = arith.constant dense<0.000000e+00> : vector<16x128xf32>
    %169 = tpu.matmul %168, %157, %cst_146 {dimension_numbers = #tpu.dot_dimension_numbers<[1], [0], [0], [1], [0, 0, 1, 1], [], []>} : vector<16x128xf32>, vector<128x128xf32>, vector<16x128xf32> -> vector<16x128xf32>
    %170 = vector.extract_strided_slice %167 {offsets = [1, 0], sizes = [16, 128], strides = [1, 1]} : vector<18x128xf32> to vector<16x128xf32>
    %cst_147 = arith.constant dense<0.000000e+00> : vector<16x128xf32>
    %171 = tpu.matmul %170, %159, %cst_147 {dimension_numbers = #tpu.dot_dimension_numbers<[1], [0], [0], [1], [0, 0, 1, 1], [], []>} : vector<16x128xf32>, vector<128x128xf32>, vector<16x128xf32> -> vector<16x128xf32>
    %172 = arith.addf %169, %171 : vector<16x128xf32>
    %173 = vector.extract_strided_slice %167 {offsets = [2, 0], sizes = [16, 128], strides = [1, 1]} : vector<18x128xf32> to vector<16x128xf32>
    %cst_148 = arith.constant dense<0.000000e+00> : vector<16x128xf32>
    %174 = tpu.matmul %173, %161, %cst_148 {dimension_numbers = #tpu.dot_dimension_numbers<[1], [0], [0], [1], [0, 0, 1, 1], [], []>} : vector<16x128xf32>, vector<128x128xf32>, vector<16x128xf32> -> vector<16x128xf32>
    %175 = arith.addf %172, %174 : vector<16x128xf32>
    %176 = vector.broadcast %163 : vector<1x128xf32> to vector<16x128xf32>
    %177 = arith.mulf %175, %176 : vector<16x128xf32>
    %178 = vector.broadcast %165 : vector<1x128xf32> to vector<16x128xf32>
    %179 = arith.addf %177, %178 : vector<16x128xf32>
    %180 = arith.addf %179, %129 : vector<16x128xf32>
    %cst_149 = arith.constant 0.000000e+00 : f32
    %181 = vector.broadcast %cst_149 : f32 to vector<16x128xf32>
    %182 = arith.maximumf %180, %181 : vector<16x128xf32>
    %c6 = arith.constant 6 : index
    %c0_150 = arith.constant 0 : index
    %c0_151 = arith.constant 0 : index
    %c0_152 = arith.constant 0 : index
    %183 = vector.load %arg4[%c6, %c0_150, %c0_151, %c0_152] : memref<8x3x128x128xf32, #tpu.memory_space<vmem>>, vector<1x1x128x128xf32>
    %184 = vector.shape_cast %183 : vector<1x1x128x128xf32> to vector<128x128xf32>
    %c6_153 = arith.constant 6 : index
    %c1_154 = arith.constant 1 : index
    %c0_155 = arith.constant 0 : index
    %c0_156 = arith.constant 0 : index
    %185 = vector.load %arg4[%c6_153, %c1_154, %c0_155, %c0_156] : memref<8x3x128x128xf32, #tpu.memory_space<vmem>>, vector<1x1x128x128xf32>
    %186 = vector.shape_cast %185 : vector<1x1x128x128xf32> to vector<128x128xf32>
    %c6_157 = arith.constant 6 : index
    %c2_158 = arith.constant 2 : index
    %c0_159 = arith.constant 0 : index
    %c0_160 = arith.constant 0 : index
    %187 = vector.load %arg4[%c6_157, %c2_158, %c0_159, %c0_160] : memref<8x3x128x128xf32, #tpu.memory_space<vmem>>, vector<1x1x128x128xf32>
    %188 = vector.shape_cast %187 : vector<1x1x128x128xf32> to vector<128x128xf32>
    %c6_161 = arith.constant 6 : index
    %c0_162 = arith.constant 0 : index
    %c0_163 = arith.constant 0 : index
    %189 = vector.load %arg5[%c6_161, %c0_162, %c0_163] : memref<8x1x128xf32, #tpu.memory_space<vmem>>, vector<1x1x128xf32>
    %190 = vector.shape_cast %189 : vector<1x1x128xf32> to vector<1x128xf32>
    %c6_164 = arith.constant 6 : index
    %c0_165 = arith.constant 0 : index
    %c0_166 = arith.constant 0 : index
    %191 = vector.load %arg6[%c6_164, %c0_165, %c0_166] : memref<8x1x128xf32, #tpu.memory_space<vmem>>, vector<1x1x128xf32>
    %192 = vector.shape_cast %191 : vector<1x1x128xf32> to vector<1x128xf32>
    %cst_167 = arith.constant 0.000000e+00 : f32
    %193 = vector.broadcast %cst_167 : f32 to vector<1x128xf32>
    %194 = tpu.concatenate %193, %182, %193 in 0 : vector<1x128xf32>, vector<16x128xf32>, vector<1x128xf32> -> vector<18x128xf32>
    %195 = vector.extract_strided_slice %194 {offsets = [0, 0], sizes = [16, 128], strides = [1, 1]} : vector<18x128xf32> to vector<16x128xf32>
    %cst_168 = arith.constant dense<0.000000e+00> : vector<16x128xf32>
    %196 = tpu.matmul %195, %184, %cst_168 {dimension_numbers = #tpu.dot_dimension_numbers<[1], [0], [0], [1], [0, 0, 1, 1], [], []>} : vector<16x128xf32>, vector<128x128xf32>, vector<16x128xf32> -> vector<16x128xf32>
    %197 = vector.extract_strided_slice %194 {offsets = [1, 0], sizes = [16, 128], strides = [1, 1]} : vector<18x128xf32> to vector<16x128xf32>
    %cst_169 = arith.constant dense<0.000000e+00> : vector<16x128xf32>
    %198 = tpu.matmul %197, %186, %cst_169 {dimension_numbers = #tpu.dot_dimension_numbers<[1], [0], [0], [1], [0, 0, 1, 1], [], []>} : vector<16x128xf32>, vector<128x128xf32>, vector<16x128xf32> -> vector<16x128xf32>
    %199 = arith.addf %196, %198 : vector<16x128xf32>
    %200 = vector.extract_strided_slice %194 {offsets = [2, 0], sizes = [16, 128], strides = [1, 1]} : vector<18x128xf32> to vector<16x128xf32>
    %cst_170 = arith.constant dense<0.000000e+00> : vector<16x128xf32>
    %201 = tpu.matmul %200, %188, %cst_170 {dimension_numbers = #tpu.dot_dimension_numbers<[1], [0], [0], [1], [0, 0, 1, 1], [], []>} : vector<16x128xf32>, vector<128x128xf32>, vector<16x128xf32> -> vector<16x128xf32>
    %202 = arith.addf %199, %201 : vector<16x128xf32>
    %203 = vector.broadcast %190 : vector<1x128xf32> to vector<16x128xf32>
    %204 = arith.mulf %202, %203 : vector<16x128xf32>
    %205 = vector.broadcast %192 : vector<1x128xf32> to vector<16x128xf32>
    %206 = arith.addf %204, %205 : vector<16x128xf32>
    %cst_171 = arith.constant 0.000000e+00 : f32
    %207 = vector.broadcast %cst_171 : f32 to vector<16x128xf32>
    %208 = arith.maximumf %206, %207 : vector<16x128xf32>
    %c7 = arith.constant 7 : index
    %c0_172 = arith.constant 0 : index
    %c0_173 = arith.constant 0 : index
    %c0_174 = arith.constant 0 : index
    %209 = vector.load %arg4[%c7, %c0_172, %c0_173, %c0_174] : memref<8x3x128x128xf32, #tpu.memory_space<vmem>>, vector<1x1x128x128xf32>
    %210 = vector.shape_cast %209 : vector<1x1x128x128xf32> to vector<128x128xf32>
    %c7_175 = arith.constant 7 : index
    %c1_176 = arith.constant 1 : index
    %c0_177 = arith.constant 0 : index
    %c0_178 = arith.constant 0 : index
    %211 = vector.load %arg4[%c7_175, %c1_176, %c0_177, %c0_178] : memref<8x3x128x128xf32, #tpu.memory_space<vmem>>, vector<1x1x128x128xf32>
    %212 = vector.shape_cast %211 : vector<1x1x128x128xf32> to vector<128x128xf32>
    %c7_179 = arith.constant 7 : index
    %c2_180 = arith.constant 2 : index
    %c0_181 = arith.constant 0 : index
    %c0_182 = arith.constant 0 : index
    %213 = vector.load %arg4[%c7_179, %c2_180, %c0_181, %c0_182] : memref<8x3x128x128xf32, #tpu.memory_space<vmem>>, vector<1x1x128x128xf32>
    %214 = vector.shape_cast %213 : vector<1x1x128x128xf32> to vector<128x128xf32>
    %c7_183 = arith.constant 7 : index
    %c0_184 = arith.constant 0 : index
    %c0_185 = arith.constant 0 : index
    %215 = vector.load %arg5[%c7_183, %c0_184, %c0_185] : memref<8x1x128xf32, #tpu.memory_space<vmem>>, vector<1x1x128xf32>
    %216 = vector.shape_cast %215 : vector<1x1x128xf32> to vector<1x128xf32>
    %c7_186 = arith.constant 7 : index
    %c0_187 = arith.constant 0 : index
    %c0_188 = arith.constant 0 : index
    %217 = vector.load %arg6[%c7_186, %c0_187, %c0_188] : memref<8x1x128xf32, #tpu.memory_space<vmem>>, vector<1x1x128xf32>
    %218 = vector.shape_cast %217 : vector<1x1x128xf32> to vector<1x128xf32>
    %cst_189 = arith.constant 0.000000e+00 : f32
    %219 = vector.broadcast %cst_189 : f32 to vector<1x128xf32>
    %220 = tpu.concatenate %219, %208, %219 in 0 : vector<1x128xf32>, vector<16x128xf32>, vector<1x128xf32> -> vector<18x128xf32>
    %221 = vector.extract_strided_slice %220 {offsets = [0, 0], sizes = [16, 128], strides = [1, 1]} : vector<18x128xf32> to vector<16x128xf32>
    %cst_190 = arith.constant dense<0.000000e+00> : vector<16x128xf32>
    %222 = tpu.matmul %221, %210, %cst_190 {dimension_numbers = #tpu.dot_dimension_numbers<[1], [0], [0], [1], [0, 0, 1, 1], [], []>} : vector<16x128xf32>, vector<128x128xf32>, vector<16x128xf32> -> vector<16x128xf32>
    %223 = vector.extract_strided_slice %220 {offsets = [1, 0], sizes = [16, 128], strides = [1, 1]} : vector<18x128xf32> to vector<16x128xf32>
    %cst_191 = arith.constant dense<0.000000e+00> : vector<16x128xf32>
    %224 = tpu.matmul %223, %212, %cst_191 {dimension_numbers = #tpu.dot_dimension_numbers<[1], [0], [0], [1], [0, 0, 1, 1], [], []>} : vector<16x128xf32>, vector<128x128xf32>, vector<16x128xf32> -> vector<16x128xf32>
    %225 = arith.addf %222, %224 : vector<16x128xf32>
    %226 = vector.extract_strided_slice %220 {offsets = [2, 0], sizes = [16, 128], strides = [1, 1]} : vector<18x128xf32> to vector<16x128xf32>
    %cst_192 = arith.constant dense<0.000000e+00> : vector<16x128xf32>
    %227 = tpu.matmul %226, %214, %cst_192 {dimension_numbers = #tpu.dot_dimension_numbers<[1], [0], [0], [1], [0, 0, 1, 1], [], []>} : vector<16x128xf32>, vector<128x128xf32>, vector<16x128xf32> -> vector<16x128xf32>
    %228 = arith.addf %225, %227 : vector<16x128xf32>
    %229 = vector.broadcast %216 : vector<1x128xf32> to vector<16x128xf32>
    %230 = arith.mulf %228, %229 : vector<16x128xf32>
    %231 = vector.broadcast %218 : vector<1x128xf32> to vector<16x128xf32>
    %232 = arith.addf %230, %231 : vector<16x128xf32>
    %233 = arith.addf %232, %182 : vector<16x128xf32>
    %cst_193 = arith.constant 0.000000e+00 : f32
    %234 = vector.broadcast %cst_193 : f32 to vector<16x128xf32>
    %235 = arith.maximumf %233, %234 : vector<16x128xf32>
    %236 = arith.addf %235, %129 : vector<16x128xf32>
    %cst_194 = arith.constant 0.000000e+00 : f32
    %237 = vector.broadcast %cst_194 : f32 to vector<16x128xf32>
    %238 = arith.maximumf %236, %237 : vector<16x128xf32>
    %c0_195 = arith.constant 0 : index
    %c0_196 = arith.constant 0 : index
    %c0_197 = arith.constant 0 : index
    %239 = vector.load %arg7[%c0_195, %c0_196, %c0_197] : memref<3x128x16xf32, #tpu.memory_space<vmem>>, vector<1x128x16xf32>
    %240 = vector.shape_cast %239 : vector<1x128x16xf32> to vector<128x16xf32>
    %c1_198 = arith.constant 1 : index
    %c0_199 = arith.constant 0 : index
    %c0_200 = arith.constant 0 : index
    %241 = vector.load %arg7[%c1_198, %c0_199, %c0_200] : memref<3x128x16xf32, #tpu.memory_space<vmem>>, vector<1x128x16xf32>
    %242 = vector.shape_cast %241 : vector<1x128x16xf32> to vector<128x16xf32>
    %c2_201 = arith.constant 2 : index
    %c0_202 = arith.constant 0 : index
    %c0_203 = arith.constant 0 : index
    %243 = vector.load %arg7[%c2_201, %c0_202, %c0_203] : memref<3x128x16xf32, #tpu.memory_space<vmem>>, vector<1x128x16xf32>
    %244 = vector.shape_cast %243 : vector<1x128x16xf32> to vector<128x16xf32>
    %c0_204 = arith.constant 0 : index
    %c0_205 = arith.constant 0 : index
    %245 = vector.load %arg8[%c0_204, %c0_205] : memref<1x16xf32, #tpu.memory_space<vmem>>, vector<1x16xf32>
    %cst_206 = arith.constant 0.000000e+00 : f32
    %246 = vector.broadcast %cst_206 : f32 to vector<1x128xf32>
    %247 = tpu.concatenate %246, %238, %246 in 0 : vector<1x128xf32>, vector<16x128xf32>, vector<1x128xf32> -> vector<18x128xf32>
    %248 = vector.extract_strided_slice %247 {offsets = [0, 0], sizes = [16, 128], strides = [1, 1]} : vector<18x128xf32> to vector<16x128xf32>
    %cst_207 = arith.constant dense<0.000000e+00> : vector<16x16xf32>
    %249 = tpu.matmul %248, %240, %cst_207 {dimension_numbers = #tpu.dot_dimension_numbers<[1], [0], [0], [1], [0, 0, 1, 1], [], []>} : vector<16x128xf32>, vector<128x16xf32>, vector<16x16xf32> -> vector<16x16xf32>
    %250 = vector.extract_strided_slice %247 {offsets = [1, 0], sizes = [16, 128], strides = [1, 1]} : vector<18x128xf32> to vector<16x128xf32>
    %cst_208 = arith.constant dense<0.000000e+00> : vector<16x16xf32>
    %251 = tpu.matmul %250, %242, %cst_208 {dimension_numbers = #tpu.dot_dimension_numbers<[1], [0], [0], [1], [0, 0, 1, 1], [], []>} : vector<16x128xf32>, vector<128x16xf32>, vector<16x16xf32> -> vector<16x16xf32>
    %252 = arith.addf %249, %251 : vector<16x16xf32>
    %253 = vector.extract_strided_slice %247 {offsets = [2, 0], sizes = [16, 128], strides = [1, 1]} : vector<18x128xf32> to vector<16x128xf32>
    %cst_209 = arith.constant dense<0.000000e+00> : vector<16x16xf32>
    %254 = tpu.matmul %253, %244, %cst_209 {dimension_numbers = #tpu.dot_dimension_numbers<[1], [0], [0], [1], [0, 0, 1, 1], [], []>} : vector<16x128xf32>, vector<128x16xf32>, vector<16x16xf32> -> vector<16x16xf32>
    %255 = arith.addf %252, %254 : vector<16x16xf32>
    %256 = vector.broadcast %245 : vector<1x16xf32> to vector<16x16xf32>
    %257 = arith.addf %255, %256 : vector<16x16xf32>
    %258 = arith.addf %257, %1 : vector<16x16xf32>
    %cst_210 = arith.constant 0.000000e+00 : f32
    %259 = vector.broadcast %cst_210 : f32 to vector<16x16xf32>
    %260 = arith.maximumf %258, %259 : vector<16x16xf32>
    %261 = vector.shape_cast %260 : vector<16x16xf32> to vector<1x16x16xf32>
    %c0_211 = arith.constant 0 : index
    %c0_212 = arith.constant 0 : index
    %c0_213 = arith.constant 0 : index
    %262 = vector.load %arg9[%c0_211, %c0_212, %c0_213] : memref<1x16x16xf32, #tpu.memory_space<vmem>>, vector<1x16x16xf32>
    tpu.vector_store %arg9[%c0_211, %c0_212, %c0_213], %261 {strides = array<i32>} : memref<1x16x16xf32, #tpu.memory_space<vmem>>, vector<1x16x16xf32>,
    return
  }
  func.func @transform_0(%arg0: i32) -> (i32, i32, i32) {
    %c0_i32 = arith.constant 0 : i32
    %c0_i32_0 = arith.constant 0 : i32
    %c0_i32_1 = arith.constant 0 : i32
    return %arg0, %c0_i32, %c0_i32_0 : i32, i32, i32
  }
  func.func @transform_1(%arg0: i32) -> (i32, i32, i32) {
    %c0_i32 = arith.constant 0 : i32
    %c0_i32_0 = arith.constant 0 : i32
    %c0_i32_1 = arith.constant 0 : i32
    %c0_i32_2 = arith.constant 0 : i32
    return %c0_i32, %c0_i32_0, %c0_i32_1 : i32, i32, i32
  }
  func.func @transform_2(%arg0: i32) -> (i32, i32) {
    %c0_i32 = arith.constant 0 : i32
    %c0_i32_0 = arith.constant 0 : i32
    %c0_i32_1 = arith.constant 0 : i32
    return %c0_i32, %c0_i32_0 : i32, i32
  }
  func.func @transform_3(%arg0: i32) -> (i32, i32, i32, i32) {
    %c0_i32 = arith.constant 0 : i32
    %c0_i32_0 = arith.constant 0 : i32
    %c0_i32_1 = arith.constant 0 : i32
    %c0_i32_2 = arith.constant 0 : i32
    %c0_i32_3 = arith.constant 0 : i32
    return %c0_i32, %c0_i32_0, %c0_i32_1, %c0_i32_2 : i32, i32, i32, i32
  }
  func.func @transform_4(%arg0: i32) -> (i32, i32, i32) {
    %c0_i32 = arith.constant 0 : i32
    %c0_i32_0 = arith.constant 0 : i32
    %c0_i32_1 = arith.constant 0 : i32
    %c0_i32_2 = arith.constant 0 : i32
    return %c0_i32, %c0_i32_0, %c0_i32_1 : i32, i32, i32
  }
  func.func @transform_5(%arg0: i32) -> (i32, i32, i32) {
    %c0_i32 = arith.constant 0 : i32
    %c0_i32_0 = arith.constant 0 : i32
    %c0_i32_1 = arith.constant 0 : i32
    %c0_i32_2 = arith.constant 0 : i32
    return %c0_i32, %c0_i32_0, %c0_i32_1 : i32, i32, i32
  }
  func.func @transform_6(%arg0: i32) -> (i32, i32, i32) {
    %c0_i32 = arith.constant 0 : i32
    %c0_i32_0 = arith.constant 0 : i32
    %c0_i32_1 = arith.constant 0 : i32
    %c0_i32_2 = arith.constant 0 : i32
    return %c0_i32, %c0_i32_0, %c0_i32_1 : i32, i32, i32
  }
  func.func @transform_7(%arg0: i32) -> (i32, i32) {
    %c0_i32 = arith.constant 0 : i32
    %c0_i32_0 = arith.constant 0 : i32
    %c0_i32_1 = arith.constant 0 : i32
    return %c0_i32, %c0_i32_0 : i32, i32
  }
  func.func @transform_8(%arg0: i32) -> (i32, i32, i32) {
    %c0_i32 = arith.constant 0 : i32
    %c0_i32_0 = arith.constant 0 : i32
    %c0_i32_1 = arith.constant 0 : i32
    return %arg0, %c0_i32, %c0_i32_0 : i32, i32, i32
  }
}

</mosaic_0001>

<llo_original>
// kernel: tpu_custom_call.1
$region0: #{tpu_custom_call.1}
  #allocation0 [shape = 'u32[]', space=smem, size = 0x4, offset = 0x4, fixed_abs, tag = 'smem constant byte address 0x4 - core index']
  #allocation1 [shape = 'u32[144,128]{1,0:T(1,128)}', space=vmem, size = 0x12000, scoped, tag = 'internal scratch']
  %s0 = inlined_call_operand.hbm [shape: f32[2,16,16], index: 0, kind: input, shape index: {}]
  %s1 = inlined_call_operand.hbm [shape: f32[3,16,128], index: 1, kind: input, shape index: {}]
  %s2 = inlined_call_operand.hbm [shape: f32[1,128], index: 2, kind: input, shape index: {}]
  %s3 = inlined_call_operand.hbm [shape: f32[8,3,128,128], index: 3, kind: input, shape index: {}]
  %s4 = inlined_call_operand.hbm [shape: f32[8,1,128], index: 4, kind: input, shape index: {}]
  %s5 = inlined_call_operand.hbm [shape: f32[8,1,128], index: 5, kind: input, shape index: {}]
  %s6 = inlined_call_operand.vmem [shape: f32[3,128,16], index: 6, kind: input, shape index: {}]
  %s7 = inlined_call_operand.hbm [shape: f32[1,16], index: 7, kind: input, shape index: {}]
  %s8 = inlined_call_operand.hbm [shape: f32[2,16,16], index: 8, kind: output, shape index: {}]
  %s9 = sld [smem:[#allocation0]]
  $region93: #{tpu_custom_call.1} parent=0
    _
  %s11 = ssub.s32 1, %s9
  %s12 = scalar_select 0, %s11, %s9
  $region1: #{tpu_custom_call.1} parent=0
    #allocation2 [shape = 'u8[16384]{0}', space=vmem, size = 0x4000, scoped, tag = 'input window, operand 0']
    #allocation3 [shape = 's32[2]{0}', space=sflag, size = 0x8, scoped, tag = 'scoped memory for tpu_custom_call.1']
    #allocation4 [shape = 's32[2]{0}', space=sflag, size = 0x8, scoped, tag = 'scoped memory for tpu_custom_call.1']
    #allocation5 [shape = 'u8[24576]{0}', space=vmem, size = 0x6000, scoped, tag = 'input window, operand 1, single buffered']
    #allocation6 [shape = 's32[1]{0}', space=sflag, size = 0x4, scoped, tag = 'scoped memory for tpu_custom_call.1']
    #allocation7 [shape = 'u8[512]{0}', space=vmem, size = 0x400, scoped, tag = 'input window, operand 2, single buffered']
    #allocation8 [shape = 'u8[1572864]{0}', space=vmem, size = 0x180000, scoped, tag = 'input window, operand 3, single buffered']
    #allocation9 [shape = 's32[1]{0}', space=sflag, size = 0x4, scoped, tag = 'scoped memory for tpu_custom_call.1']
    #allocation10 [shape = 'u8[4096]{0}', space=vmem, size = 0x1000, scoped, tag = 'input window, operand 4, single buffered']
    #allocation11 [shape = 'u8[4096]{0}', space=vmem, size = 0x1000, scoped, tag = 'input window, operand 5, single buffered']
    #allocation12 [shape = 's32[1]{0}', space=sflag, size = 0x4, scoped, tag = 'scoped memory for tpu_custom_call.1']
    #allocation13 [shape = 'u8[512]{0}', space=vmem, size = 0x400, scoped, tag = 'input window, operand 7, single buffered']
    #allocation14 [shape = 'u8[16384]{0}', space=vmem, size = 0x4000, scoped, tag = 'output window, operand 0']
    %13 = vsyncpa [#allocation3], 0
    %s14 = scalar_lea.sflag [#allocation3], 1
    %15 = vsyncpa %s14, 0
    %16 = vsyncpa [#allocation6], 0
    %17 = vsyncpa [#allocation9], 0
    %18 = vsyncpa [#allocation12], 0
    %19 = vsyncpa [#allocation4], 0
    %s20 = scalar_lea.sflag [#allocation4], 1
    %21 = vsyncpa %s20, 0
    loop: start=0, step=1, limit=4
    $region2: #{tpu_custom_call.1} parent=1 // loop_pre_header
      _
    $region3: #{tpu_custom_call.1} parent=1 // loop_header
      %s23 = sphi 0, %s27
      %p24 = scmp.ge.s32.totalorder %s23, 4
      %s33 = sphi 0, %s35
      %s36 = sphi 0, %s33
      %s37 = sphi 0, %s36
      %s53 = sphi 0, %s37
      %s57 = sphi 0, %s57
      %s59 = sphi 0, %s57
      %s60 = sphi 0, %s59
      %s74 = sphi 0, %s60
      %s78 = sphi 0, %s78
      %s80 = sphi 0, %s78
      %s81 = sphi 0, %s80
      %s95 = sphi 0, %s81
      %s99 = sphi 0, %s99
      %s101 = sphi 0, %s99
      %s102 = sphi 0, %s101
      %s116 = sphi 0, %s102
      %s120 = sphi 0, %s120
      %s122 = sphi 0, %s120
      %s123 = sphi 0, %s122
      %s137 = sphi 0, %s123
      %s141 = sphi 0, %s141
      %s143 = sphi 0, %s141
      %s144 = sphi 0, %s143
      %s158 = sphi 0, %s144
      %s162 = sphi 0, %s162
      %s164 = sphi 0, %s162
      %s165 = sphi 0, %s164
      %s179 = sphi 0, %s165
      %s183 = sphi 0, %s183
      %s185 = sphi 0, %s183
      %s186 = sphi 0, %s185
      %s200 = sphi 0, %s186
      %s206 = sphi 0, %s208
      %s209 = sphi 0, %s206
      %s210 = sphi 0, %s209
      %s226 = sphi 0, %s210
    $region4: #{tpu_custom_call.1} parent=1 // loop_header_branch
      %26 = sbr.rel (%p24) target = $region8
    $region5: #{tpu_custom_call.1} parent=1 // loop_body
      %s28 = ssub.s32 %s23, 1
      %s29 = ssub.s32 %s23, 2
      %s30 = sadd.s32 %s23, 1
      %s31 = ssub.s32 %s23, %s30
      %p32 = scmp.eq.s32.totalorder %s31, 0
      %s34 = sadd.s32 %s33, 1
      %s35 = scalar_select %p32, %s33, %s34
      %p38 = pneg %p32
      %p39 = scmp.eq.s32.totalorder %s23, 1
      %p40 = por %p38, %p39
      %p41 = scmp.ne.s32.totalorder %s33, %s36
      %p42 = scmp.eq.s32.totalorder %s23, 0
      %p43 = por %p41, %p42
      %p44 = scmp.ne.s32.totalorder %s33, %s36
      %p45 = scmp.eq.s32.totalorder %s28, 1
      %p46 = por %p44, %p45
      %p47 = scmp.ne.s32.totalorder %s36, %s37
      %p48 = scmp.eq.s32.totalorder %s28, 0
      %p49 = por %p47, %p48
      %p50 = scmp.ne.s32.totalorder %s36, %s37
      %p51 = scmp.eq.s32.totalorder %s29, 1
      %p52 = por %p50, %p51
      %p54 = scmp.ne.s32.totalorder %s37, %s53
      %p55 = scmp.eq.s32.totalorder %s29, 0
      %p56 = por %p54, %p55
      %s58 = sadd.s32 %s57, 1
      %p61 = scmp.eq.s32.totalorder %s23, 1
      %p62 = scmp.ne.s32.totalorder %s57, %s59
      %p63 = scmp.eq.s32.totalorder %s23, 0
      %p64 = por %p62, %p63
      %p65 = scmp.ne.s32.totalorder %s57, %s59
      %p66 = scmp.eq.s32.totalorder %s28, 1
      %p67 = por %p65, %p66
      %p68 = scmp.ne.s32.totalorder %s59, %s60
      %p69 = scmp.eq.s32.totalorder %s28, 0
      %p70 = por %p68, %p69
      %p71 = scmp.ne.s32.totalorder %s59, %s60
      %p72 = scmp.eq.s32.totalorder %s29, 1
      %p73 = por %p71, %p72
      %p75 = scmp.ne.s32.totalorder %s60, %s74
      %p76 = scmp.eq.s32.totalorder %s29, 0
      %p77 = por %p75, %p76
      %s79 = sadd.s32 %s78, 1
      %p82 = scmp.eq.s32.totalorder %s23, 1
      %p83 = scmp.ne.s32.totalorder %s78, %s80
      %p84 = scmp.eq.s32.totalorder %s23, 0
      %p85 = por %p83, %p84
      %p86 = scmp.ne.s32.totalorder %s78, %s80
      %p87 = scmp.eq.s32.totalorder %s28, 1
      %p88 = por %p86, %p87
      %p89 = scmp.ne.s32.totalorder %s80, %s81
      %p90 = scmp.eq.s32.totalorder %s28, 0
      %p91 = por %p89, %p90
      %p92 = scmp.ne.s32.totalorder %s80, %s81
      %p93 = scmp.eq.s32.totalorder %s29, 1
      %p94 = por %p92, %p93
      %p96 = scmp.ne.s32.totalorder %s81, %s95
      %p97 = scmp.eq.s32.totalorder %s29, 0
      %p98 = por %p96, %p97
      %s100 = sadd.s32 %s99, 1
      %p103 = scmp.eq.s32.totalorder %s23, 1
      %p104 = scmp.ne.s32.totalorder %s99, %s101
      %p105 = scmp.eq.s32.totalorder %s23, 0
      %p106 = por %p104, %p105
      %p107 = scmp.ne.s32.totalorder %s99, %s101
      %p108 = scmp.eq.s32.totalorder %s28, 1
      %p109 = por %p107, %p108
      %p110 = scmp.ne.s32.totalorder %s101, %s102
      %p111 = scmp.eq.s32.totalorder %s28, 0
      %p112 = por %p110, %p111
      %p113 = scmp.ne.s32.totalorder %s101, %s102
      %p114 = scmp.eq.s32.totalorder %s29, 1
      %p115 = por %p113, %p114
      %p117 = scmp.ne.s32.totalorder %s102, %s116
      %p118 = scmp.eq.s32.totalorder %s29, 0
      %p119 = por %p117, %p118
      %s121 = sadd.s32 %s120, 1
      %p124 = scmp.eq.s32.totalorder %s23, 1
      %p125 = scmp.ne.s32.totalorder %s120, %s122
      %p126 = scmp.eq.s32.totalorder %s23, 0
      %p127 = por %p125, %p126
      %p128 = scmp.ne.s32.totalorder %s120, %s122
      %p129 = scmp.eq.s32.totalorder %s28, 1
      %p130 = por %p128, %p129
      %p131 = scmp.ne.s32.totalorder %s122, %s123
      %p132 = scmp.eq.s32.totalorder %s28, 0
      %p133 = por %p131, %p132
      %p134 = scmp.ne.s32.totalorder %s122, %s123
      %p135 = scmp.eq.s32.totalorder %s29, 1
      %p136 = por %p134, %p135
      %p138 = scmp.ne.s32.totalorder %s123, %s137
      %p139 = scmp.eq.s32.totalorder %s29, 0
      %p140 = por %p138, %p139
      %s142 = sadd.s32 %s141, 1
      %p145 = scmp.eq.s32.totalorder %s23, 1
      %p146 = scmp.ne.s32.totalorder %s141, %s143
      %p147 = scmp.eq.s32.totalorder %s23, 0
      %p148 = por %p146, %p147
      %p149 = scmp.ne.s32.totalorder %s141, %s143
      %p150 = scmp.eq.s32.totalorder %s28, 1
      %p151 = por %p149, %p150
      %p152 = scmp.ne.s32.totalorder %s143, %s144
      %p153 = scmp.eq.s32.totalorder %s28, 0
      %p154 = por %p152, %p153
      %p155 = scmp.ne.s32.totalorder %s143, %s144
      %p156 = scmp.eq.s32.totalorder %s29, 1
      %p157 = por %p155, %p156
      %p159 = scmp.ne.s32.totalorder %s144, %s158
      %p160 = scmp.eq.s32.totalorder %s29, 0
      %p161 = por %p159, %p160
      %s163 = sadd.s32 %s162, 1
      %p166 = scmp.eq.s32.totalorder %s23, 1
      %p167 = scmp.ne.s32.totalorder %s162, %s164
      %p168 = scmp.eq.s32.totalorder %s23, 0
      %p169 = por %p167, %p168
      %p170 = scmp.ne.s32.totalorder %s162, %s164
      %p171 = scmp.eq.s32.totalorder %s28, 1
      %p172 = por %p170, %p171
      %p173 = scmp.ne.s32.totalorder %s164, %s165
      %p174 = scmp.eq.s32.totalorder %s28, 0
      %p175 = por %p173, %p174
      %p176 = scmp.ne.s32.totalorder %s164, %s165
      %p177 = scmp.eq.s32.totalorder %s29, 1
      %p178 = por %p176, %p177
      %p180 = scmp.ne.s32.totalorder %s165, %s179
      %p181 = scmp.eq.s32.totalorder %s29, 0
      %p182 = por %p180, %p181
      %s184 = sadd.s32 %s183, 1
      %p187 = scmp.eq.s32.totalorder %s23, 1
      %p188 = scmp.ne.s32.totalorder %s183, %s185
      %p189 = scmp.eq.s32.totalorder %s23, 0
      %p190 = por %p188, %p189
      %p191 = scmp.ne.s32.totalorder %s183, %s185
      %p192 = scmp.eq.s32.totalorder %s28, 1
      %p193 = por %p191, %p192
      %p194 = scmp.ne.s32.totalorder %s185, %s186
      %p195 = scmp.eq.s32.totalorder %s28, 0
      %p196 = por %p194, %p195
      %p197 = scmp.ne.s32.totalorder %s185, %s186
      %p198 = scmp.eq.s32.totalorder %s29, 1
      %p199 = por %p197, %p198
      %p201 = scmp.ne.s32.totalorder %s186, %s200
      %p202 = scmp.eq.s32.totalorder %s29, 0
      %p203 = por %p201, %p202
      %s204 = ssub.s32 %s23, %s30
      %p205 = scmp.eq.s32.totalorder %s204, 0
      %s207 = sadd.s32 %s206, 1
      %s208 = scalar_select %p205, %s206, %s207
      %p211 = pneg %p205
      %p212 = scmp.eq.s32.totalorder %s23, 1
      %p213 = por %p211, %p212
      %p214 = scmp.ne.s32.totalorder %s206, %s209
      %p215 = scmp.eq.s32.totalorder %s23, 0
      %p216 = por %p214, %p215
      %p217 = scmp.ne.s32.totalorder %s206, %s209
      %p218 = scmp.eq.s32.totalorder %s28, 1
      %p219 = por %p217, %p218
      %p220 = scmp.ne.s32.totalorder %s209, %s210
      %p221 = scmp.eq.s32.totalorder %s28, 0
      %p222 = por %p220, %p221
      %p223 = scmp.ne.s32.totalorder %s209, %s210
      %p224 = scmp.eq.s32.totalorder %s29, 1
      %p225 = por %p223, %p224
      %p227 = scmp.ne.s32.totalorder %s210, %s226
      %p228 = scmp.eq.s32.totalorder %s29, 0
      %p229 = por %p227, %p228
      %p230 = scmp.le.s32.totalorder 1, %s23
      %p231 = scmp.lt.s32.totalorder %s23, 3
      %p232 = pnand %p230, %p231
      %p233 = pneg %p232
      // Predicated region
      $region9: #{tpu_custom_call.1} parent=5 // pred_check
        _
      $region10: #{tpu_custom_call.1} parent=5 // pred_check_branch
        %235 = sbr.rel (%p232) target = $region12
      $region11: #{tpu_custom_call.1} parent=5 // pred_region
        %s236 = ssub.s32 %s23, 1
        // Predicated region
        $region13: #{tpu_custom_call.1} parent=11 // pred_check
          %p237 = pneg %p70
        $region14: #{tpu_custom_call.1} parent=11 // pred_check_branch
          %239 = sbr.rel (%p237) target = $region16
        $region15: #{tpu_custom_call.1} parent=11 // pred_region
          %s241 = ssub.s32 768, 768
          %242 = vsyncadd [#allocation6], %s241
          %s243 = sshll.u32 [#allocation5], 4
          %s244 = int_to_ptr.vmem [resolvable:$true] %s243
          %249 = dma.hbm_to_vmem [thread:$0]  %s1, 768, %s244, [#allocation6], 128, 128, 8
        $region16: #{tpu_custom_call.1} parent=11 // pred_fallthru
          _
        // Predicated region
        $region17: #{tpu_custom_call.1} parent=11 // pred_check
          %p250 = pneg %p91
        $region18: #{tpu_custom_call.1} parent=11 // pred_check_branch
          %252 = sbr.rel (%p250) target = $region20
        $region19: #{tpu_custom_call.1} parent=11 // pred_region
          %s254 = ssub.s32 16, 16
          %255 = vsyncadd [#allocation6], %s254
          %s257 = sshll.u32 [#allocation7], 4
          %s258 = int_to_ptr.vmem [resolvable:$true] %s257
          %260 = dma.hbm_to_vmem [thread:$0]  %s2, 16, %s258, [#allocation6]
        $region20: #{tpu_custom_call.1} parent=11 // pred_fallthru
          _
        // Predicated region
        $region21: #{tpu_custom_call.1} parent=11 // pred_check
          %p261 = pneg %p112
        $region22: #{tpu_custom_call.1} parent=11 // pred_check_branch
          %263 = sbr.rel (%p261) target = $region24
        $region23: #{tpu_custom_call.1} parent=11 // pred_region
          %s265 = ssub.s32 49152, 49152
          %266 = vsyncadd [#allocation9], %s265
          %s267 = sshll.u32 [#allocation8], 4
          %s268 = int_to_ptr.vmem [resolvable:$true] %s267
          %273 = dma.hbm_to_vmem [thread:$0]  %s3, 49152, %s268, [#allocation9], 128, 128, 8
        $region24: #{tpu_custom_call.1} parent=11 // pred_fallthru
          _
        // Predicated region
        $region25: #{tpu_custom_call.1} parent=11 // pred_check
          %p274 = pneg %p133
        $region26: #{tpu_custom_call.1} parent=11 // pred_check_branch
          %276 = sbr.rel (%p274) target = $region28
        $region27: #{tpu_custom_call.1} parent=11 // pred_region
          %s278 = ssub.s32 128, 128
          %279 = vsyncadd [#allocation9], %s278
          %s280 = sshll.u32 [#allocation10], 4
          %s281 = int_to_ptr.vmem [resolvable:$true] %s280
          %286 = dma.hbm_to_vmem [thread:$0]  %s4, 128, %s281, [#allocation9], 16, 16, 1
        $region28: #{tpu_custom_call.1} parent=11 // pred_fallthru
          _
        // Predicated region
        $region29: #{tpu_custom_call.1} parent=11 // pred_check
          %p287 = pneg %p154
        $region30: #{tpu_custom_call.1} parent=11 // pred_check_branch
          %289 = sbr.rel (%p287) target = $region32
        $region31: #{tpu_custom_call.1} parent=11 // pred_region
          %s291 = ssub.s32 128, 128
          %292 = vsyncadd [#allocation12], %s291
          %s293 = sshll.u32 [#allocation11], 4
          %s294 = int_to_ptr.vmem [resolvable:$true] %s293
          %299 = dma.hbm_to_vmem [thread:$0]  %s5, 128, %s294, [#allocation12], 16, 16, 1
        $region32: #{tpu_custom_call.1} parent=11 // pred_fallthru
          _
        // Predicated region
        $region33: #{tpu_custom_call.1} parent=11 // pred_check
          %p300 = pneg %p175
        $region34: #{tpu_custom_call.1} parent=11 // pred_check_branch
          %302 = sbr.rel (%p300) target = $region36
        $region35: #{tpu_custom_call.1} parent=11 // pred_region
          _
        $region36: #{tpu_custom_call.1} parent=11 // pred_fallthru
          _
        // Predicated region
        $region37: #{tpu_custom_call.1} parent=11 // pred_check
          %p303 = pneg %p196
        $region38: #{tpu_custom_call.1} parent=11 // pred_check_branch
          %305 = sbr.rel (%p303) target = $region40
        $region39: #{tpu_custom_call.1} parent=11 // pred_region
          %s307 = ssub.s32 16, 16
          %308 = vsyncadd [#allocation12], %s307
          %s310 = sshll.u32 [#allocation13], 4
          %s311 = int_to_ptr.vmem [resolvable:$true] %s310
          %313 = dma.hbm_to_vmem [thread:$0]  %s7, 16, %s311, [#allocation12]
        $region40: #{tpu_custom_call.1} parent=11 // pred_fallthru
          _
      $region12: #{tpu_custom_call.1} parent=5 // pred_fallthru
        _
      %p314 = scmp.lt.s32.totalorder %s23, 2
      // Predicated region
      $region41: #{tpu_custom_call.1} parent=5 // pred_check
        %p315 = pneg %p314
      $region42: #{tpu_custom_call.1} parent=5 // pred_check_branch
        %317 = sbr.rel (%p315) target = $region44
      $region43: #{tpu_custom_call.1} parent=5 // pred_region
        // Predicated region
        $region45: #{tpu_custom_call.1} parent=43 // pred_check
          %p318 = pneg %p43
        $region46: #{tpu_custom_call.1} parent=43 // pred_check_branch
          %320 = sbr.rel (%p318) target = $region48
        $region47: #{tpu_custom_call.1} parent=43 // pred_region
          %s321 = sand.u32 %s33, 1
          %s322 = scalar_lea.sflag [#allocation3], %s321
          %s323 = sand.u32 %s33, 1
          %s324 = smul.addr %s323, 16
          %s325 = scalar_lea.vmem [#allocation2], %s324
          %s327 = ssub.s32 256, 256
          %328 = vsyncadd %s322, %s327
          %s329 = smul.addr %s23, 2
          %s330 = smul.addr %s329, 128
          %s331 = scalar_lea.hbm %s0, %s330
          %s332 = sshll.u32 %s325, 4
          %s333 = int_to_ptr.vmem [resolvable:$true] %s332
          %338 = dma.hbm_to_vmem [thread:$0]  %s331, 256, %s333, %s322, 128, 128, 8
        $region48: #{tpu_custom_call.1} parent=43 // pred_fallthru
          _
      $region44: #{tpu_custom_call.1} parent=5 // pred_fallthru
        _
      %p339 = scmp.le.s32.totalorder 1, %s23
      %p340 = scmp.lt.s32.totalorder %s23, 3
      %p341 = pnand %p339, %p340
      %p342 = pneg %p341
      // Predicated region
      $region49: #{tpu_custom_call.1} parent=5 // pred_check
        _
      $region50: #{tpu_custom_call.1} parent=5 // pred_check_branch
        %344 = sbr.rel (%p341) target = $region52
      $region51: #{tpu_custom_call.1} parent=5 // pred_region
        %s345 = ssub.s32 %s23, 1
        %s346 = sand.u32 %s36, 1
        %s347 = scalar_lea.sflag [#allocation3], %s346
        %s348 = sand.u32 %s36, 1
        %s349 = smul.addr %s348, 16
        %s350 = scalar_lea.vmem [#allocation2], %s349
        // Predicated region
        $region53: #{tpu_custom_call.1} parent=51 // pred_check
          %p351 = pneg %p49
        $region54: #{tpu_custom_call.1} parent=51 // pred_check_branch
          %353 = sbr.rel (%p351) target = $region56
        $region55: #{tpu_custom_call.1} parent=51 // pred_region
          %354 = dma.done %s347, 256
        $region56: #{tpu_custom_call.1} parent=51 // pred_fallthru
          _
        // Predicated region
        $region57: #{tpu_custom_call.1} parent=51 // pred_check
          %p355 = pneg %p70
        $region58: #{tpu_custom_call.1} parent=51 // pred_check_branch
          %357 = sbr.rel (%p355) target = $region60
        $region59: #{tpu_custom_call.1} parent=51 // pred_region
          %358 = dma.done [#allocation6], 768
        $region60: #{tpu_custom_call.1} parent=51 // pred_fallthru
          _
        // Predicated region
        $region61: #{tpu_custom_call.1} parent=51 // pred_check
          %p359 = pneg %p91
        $region62: #{tpu_custom_call.1} parent=51 // pred_check_branch
          %361 = sbr.rel (%p359) target = $region64
        $region63: #{tpu_custom_call.1} parent=51 // pred_region
          %362 = dma.done [#allocation6], 16
        $region64: #{tpu_custom_call.1} parent=51 // pred_fallthru
          _
        // Predicated region
        $region65: #{tpu_custom_call.1} parent=51 // pred_check
          %p363 = pneg %p112
        $region66: #{tpu_custom_call.1} parent=51 // pred_check_branch
          %365 = sbr.rel (%p363) target = $region68
        $region67: #{tpu_custom_call.1} parent=51 // pred_region
          %366 = dma.done [#allocation9], 49152
        $region68: #{tpu_custom_call.1} parent=51 // pred_fallthru
          _
        // Predicated region
        $region69: #{tpu_custom_call.1} parent=51 // pred_check
          %p367 = pneg %p133
        $region70: #{tpu_custom_call.1} parent=51 // pred_check_branch
          %369 = sbr.rel (%p367) target = $region72
        $region71: #{tpu_custom_call.1} parent=51 // pred_region
          %370 = dma.done [#allocation9], 128
        $region72: #{tpu_custom_call.1} parent=51 // pred_fallthru
          _
        // Predicated region
        $region73: #{tpu_custom_call.1} parent=51 // pred_check
          %p371 = pneg %p154
        $region74: #{tpu_custom_call.1} parent=51 // pred_check_branch
          %373 = sbr.rel (%p371) target = $region76
        $region75: #{tpu_custom_call.1} parent=51 // pred_region
          %374 = dma.done [#allocation12], 128
        $region76: #{tpu_custom_call.1} parent=51 // pred_fallthru
          _
        // Predicated region
        $region77: #{tpu_custom_call.1} parent=51 // pred_check
          %p375 = pneg %p196
        $region78: #{tpu_custom_call.1} parent=51 // pred_check_branch
          %377 = sbr.rel (%p375) target = $region80
        $region79: #{tpu_custom_call.1} parent=51 // pred_region
          %378 = dma.done [#allocation12], 16
        $region80: #{tpu_custom_call.1} parent=51 // pred_fallthru
          _
        %s379 = sand.u32 %s36, 1
        %s380 = scalar_lea.sflag [#allocation3], %s379
        %s381 = sand.u32 %s36, 1
        %s382 = smul.addr %s381, 16
        %s383 = scalar_lea.vmem [#allocation2], %s382
        %p384 = pneg %p49
        %p385 = pneg %p46
        %p386 = pneg %p70
        %p387 = pneg %p67
        %p388 = pneg %p91
        %p389 = pneg %p88
        %p390 = pneg %p112
        %p391 = pneg %p109
        %p392 = pneg %p133
        %p393 = pneg %p130
        %p394 = pneg %p154
        %p395 = pneg %p151
        %p396 = pneg %p175
        %p397 = pneg %p172
        %p398 = pneg %p196
        %p399 = pneg %p193
        %p400 = pneg %p222
        %p401 = pneg %p219
        %s402 = sand.u32 %s209, 1
        %s403 = scalar_lea.sflag [#allocation4], %s402
        %s404 = sand.u32 %s209, 1
        %s405 = smul.addr %s404, 16
        %s406 = scalar_lea.vmem [#allocation14], %s405
        %v407 = vld [vmem:[%s350] sm:$0xff]
        %v408 = vld [vmem:[%s350 + $0x8] sm:$0xff]
        %v409 = vld [vmem:[#allocation5] sm:$0xff]
        %v410 = vld [vmem:[#allocation5 + $0x8] sm:$0xff]
        %s411 = scalar_lea.vmem [#allocation5], 16
        %v412 = vld [vmem:[%s411] sm:$0xff]
        %v413 = vld [vmem:[%s411 + $0x8] sm:$0xff]
        %s414 = scalar_lea.vmem [#allocation5], 32
        %v415 = vld [vmem:[%s414] sm:$0xff]
        %v416 = vld [vmem:[%s414 + $0x8] sm:$0xff]
        %v417 = vld [vmem:[#allocation7] sm:$0x1]
        %vm420 = vcmask 1040384
        %v421 = vrot.slane %v407, 7
        %v422 = vrot.slane %v408, 7
        %v423 = vsel %vm420, %v421, %v422
        %v426 = vsel %vm420, 0.0, %v421
        %v427 = vsel %vm420, %v422, 0.0
        %vm430 = vcmask 1046528
        %v431 = vrot.slane %v426, 1
        %v432 = vrot.slane %v423, 1
        %v433 = vsel %vm430, %v431, %v432
        %v434 = vrot.slane %v427, 1
        %v435 = vsel %vm430, %v432, %v434
        %vm436 = vcmask 130048
        %v437 = vsel %vm436, %v433, 0
        %v439 = vsel %vm436, %v435, 0
        %441 = vmatprep.subr.mxu0 0.0
        %442 = vmatpush1.msra.mxu0 0.0
        %443 = vmatprep.subr.mxu0 0.0
        %444 = vmatpush1.msra.mxu0 0.0
        %445 = vmatprep.subr.mxu0 0.0
        %446 = vmatpush1.msra.mxu0 0.0
        %447 = vmatprep.subr.mxu0 0.0
        %448 = vmatpush1.msra.mxu0 0.0
        %449 = vmatprep.subr.mxu0 0.0
        %450 = vmatpush1.msra.mxu0 0.0
        %451 = vmatprep.subr.mxu0 0.0
        %452 = vmatpush1.msra.mxu0 0.0
        %453 = vmatprep.subr.mxu0 0.0
        %454 = vmatpush1.msra.mxu0 0.0
        %455 = vmatprep.subr.mxu0 0.0
        %456 = vmatpush1.msra.mxu0 0.0
        %457 = vmatprep.subr.mxu0 0.0
        %458 = vmatpush1.msra.mxu0 0.0
        %459 = vmatprep.subr.mxu0 0.0
        %460 = vmatpush1.msra.mxu0 0.0
        %461 = vmatprep.subr.mxu0 0.0
        %462 = vmatpush1.msra.mxu0 0.0
        %463 = vmatprep.subr.mxu0 0.0
        %464 = vmatpush1.msra.mxu0 0.0
        %465 = vmatprep.subr.mxu0 0.0
        %466 = vmatpush1.msra.mxu0 0.0
        %467 = vmatprep.subr.mxu0 0.0
        %468 = vmatpush1.msra.mxu0 0.0
        %469 = vmatprep.subr.mxu0 0.0
        %470 = vmatpush1.msra.mxu0 %v413
        %471 = vmatprep.subr.mxu0 0.0
        %472 = vmatpush1.msra.mxu0 %v412
        %473 = vmatprep.subr.mxu0 0.0
        %474 = vmatpush2.msra.mxu0 0.0
        %475 = vmatprep.subr.mxu0 0.0
        %476 = vmatpush2.msra.mxu0 0.0
        %477 = vmatprep.subr.mxu0 0.0
        %478 = vmatpush2.msra.mxu0 0.0
        %479 = vmatprep.subr.mxu0 0.0
        %480 = vmatpush2.msra.mxu0 0.0
        %481 = vmatprep.subr.mxu0 0.0
        %482 = vmatpush2.msra.mxu0 0.0
        %483 = vmatprep.subr.mxu0 0.0
        %484 = vmatpush2.msra.mxu0 0.0
        %485 = vmatprep.subr.mxu0 0.0
        %486 = vmatpush2.msra.mxu0 0.0
        %487 = vmatprep.subr.mxu0 0.0
        %488 = vmatpush2.msra.mxu0 0.0
        %489 = vmatprep.subr.mxu0 0.0
        %490 = vmatpush2.msra.mxu0 0.0
        %491 = vmatprep.subr.mxu0 0.0
        %492 = vmatpush2.msra.mxu0 0.0
        %493 = vmatprep.subr.mxu0 0.0
        %494 = vmatpush2.msra.mxu0 0.0
        %495 = vmatprep.subr.mxu0 0.0
        %496 = vmatpush2.msra.mxu0 0.0
        %497 = vmatprep.subr.mxu0 0.0
        %498 = vmatpush2.msra.mxu0 0.0
        %499 = vmatprep.subr.mxu0 0.0
        %500 = vmatpush2.msra.mxu0 0.0
        %501 = vmatprep.subr.mxu0 0.0
        %502 = vmatpush2.msra.mxu0 0.0
        %503 = vmatprep.subr.mxu0 0.0
        %504 = vmatpush2.msra.mxu0 0.0
        %505 = vmatprep.mubr.f32.mxu0 0.0
        %506 = vmatmul.mubr.f32.gmra.mxu0 %v437
        %v507 = vpop.f32.mrf.mxu0
        %v508 = vadd.f32 0.0, %v507
        %v509 = vpop.f32.mrf.mxu0
        %510 = vmatprep.mubr.f32.mxu0 0.0
        %511 = vmatmul.mubr.f32.gmra.mxu0 %v439
        %v512 = vpop.f32.mrf.mxu0
        %v513 = vadd.f32 0.0, %v512
        %v514 = vpop.f32.mrf.mxu0
        %515 = vdwg.mxu0
        %v516 = vsel %vm436, %v426, 0
        %v518 = vsel %vm436, %v423, 0
        %520 = vmatprep.subr.mxu0 0.0
        %521 = vmatpush1.msra.mxu0 0.0
        %522 = vmatprep.subr.mxu0 0.0
        %523 = vmatpush1.msra.mxu0 0.0
        %524 = vmatprep.subr.mxu0 0.0
        %525 = vmatpush1.msra.mxu0 0.0
        %526 = vmatprep.subr.mxu0 0.0
        %527 = vmatpush1.msra.mxu0 0.0
        %528 = vmatprep.subr.mxu0 0.0
        %529 = vmatpush1.msra.mxu0 0.0
        %530 = vmatprep.subr.mxu0 0.0
        %531 = vmatpush1.msra.mxu0 0.0
        %532 = vmatprep.subr.mxu0 0.0
        %533 = vmatpush1.msra.mxu0 0.0
        %534 = vmatprep.subr.mxu0 0.0
        %535 = vmatpush1.msra.mxu0 0.0
        %536 = vmatprep.subr.mxu0 0.0
        %537 = vmatpush1.msra.mxu0 0.0
        %538 = vmatprep.subr.mxu0 0.0
        %539 = vmatpush1.msra.mxu0 0.0
        %540 = vmatprep.subr.mxu0 0.0
        %541 = vmatpush1.msra.mxu0 0.0
        %542 = vmatprep.subr.mxu0 0.0
        %543 = vmatpush1.msra.mxu0 0.0
        %544 = vmatprep.subr.mxu0 0.0
        %545 = vmatpush1.msra.mxu0 0.0
        %546 = vmatprep.subr.mxu0 0.0
        %547 = vmatpush1.msra.mxu0 0.0
        %548 = vmatprep.subr.mxu0 0.0
        %549 = vmatpush1.msra.mxu0 %v410
        %550 = vmatprep.subr.mxu0 0.0
        %551 = vmatpush1.msra.mxu0 %v409
        %552 = vmatprep.subr.mxu0 0.0
        %553 = vmatpush2.msra.mxu0 0.0
        %554 = vmatprep.subr.mxu0 0.0
        %555 = vmatpush2.msra.mxu0 0.0
        %556 = vmatprep.subr.mxu0 0.0
        %557 = vmatpush2.msra.mxu0 0.0
        %558 = vmatprep.subr.mxu0 0.0
        %559 = vmatpush2.msra.mxu0 0.0
        %560 = vmatprep.subr.mxu0 0.0
        %561 = vmatpush2.msra.mxu0 0.0
        %562 = vmatprep.subr.mxu0 0.0
        %563 = vmatpush2.msra.mxu0 0.0
        %564 = vmatprep.subr.mxu0 0.0
        %565 = vmatpush2.msra.mxu0 0.0
        %566 = vmatprep.subr.mxu0 0.0
        %567 = vmatpush2.msra.mxu0 0.0
        %568 = vmatprep.subr.mxu0 0.0
        %569 = vmatpush2.msra.mxu0 0.0
        %570 = vmatprep.subr.mxu0 0.0
        %571 = vmatpush2.msra.mxu0 0.0
        %572 = vmatprep.subr.mxu0 0.0
        %573 = vmatpush2.msra.mxu0 0.0
        %574 = vmatprep.subr.mxu0 0.0
        %575 = vmatpush2.msra.mxu0 0.0
        %576 = vmatprep.subr.mxu0 0.0
        %577 = vmatpush2.msra.mxu0 0.0
        %578 = vmatprep.subr.mxu0 0.0
        %579 = vmatpush2.msra.mxu0 0.0
        %580 = vmatprep.subr.mxu0 0.0
        %581 = vmatpush2.msra.mxu0 0.0
        %582 = vmatprep.subr.mxu0 0.0
        %583 = vmatpush2.msra.mxu0 0.0
        %584 = vmatprep.mubr.f32.mxu0 0.0
        %585 = vmatmul.mubr.f32.gmra.mxu0 %v516
        %v586 = vpop.f32.mrf.mxu0
        %v587 = vadd.f32 %v508, %v586
        %v588 = vpop.f32.mrf.mxu0
        %589 = vmatprep.mubr.f32.mxu0 0.0
        %590 = vmatmul.mubr.f32.gmra.mxu0 %v518
        %v591 = vpop.f32.mrf.mxu0
        %v592 = vadd.f32 %v513, %v591
        %v593 = vpop.f32.mrf.mxu0
        %594 = vdwg.mxu0
        %vm595 = vcmask 1045504
        %v596 = vrot.slane %v426, 2
        %v597 = vrot.slane %v423, 2
        %v598 = vsel %vm595, %v596, %v597
        %v599 = vrot.slane %v427, 2
        %v600 = vsel %vm595, %v597, %v599
        %v601 = vsel %vm436, %v598, 0
        %v603 = vsel %vm436, %v600, 0
        %605 = vmatprep.subr.mxu0 0.0
        %606 = vmatpush1.msra.mxu0 0.0
        %607 = vmatprep.subr.mxu0 0.0
        %608 = vmatpush1.msra.mxu0 0.0
        %609 = vmatprep.subr.mxu0 0.0
        %610 = vmatpush1.msra.mxu0 0.0
        %611 = vmatprep.subr.mxu0 0.0
        %612 = vmatpush1.msra.mxu0 0.0
        %613 = vmatprep.subr.mxu0 0.0
        %614 = vmatpush1.msra.mxu0 0.0
        %615 = vmatprep.subr.mxu0 0.0
        %616 = vmatpush1.msra.mxu0 0.0
        %617 = vmatprep.subr.mxu0 0.0
        %618 = vmatpush1.msra.mxu0 0.0
        %619 = vmatprep.subr.mxu0 0.0
        %620 = vmatpush1.msra.mxu0 0.0
        %621 = vmatprep.subr.mxu0 0.0
        %622 = vmatpush1.msra.mxu0 0.0
        %623 = vmatprep.subr.mxu0 0.0
        %624 = vmatpush1.msra.mxu0 0.0
        %625 = vmatprep.subr.mxu0 0.0
        %626 = vmatpush1.msra.mxu0 0.0
        %627 = vmatprep.subr.mxu0 0.0
        %628 = vmatpush1.msra.mxu0 0.0
        %629 = vmatprep.subr.mxu0 0.0
        %630 = vmatpush1.msra.mxu0 0.0
        %631 = vmatprep.subr.mxu0 0.0
        %632 = vmatpush1.msra.mxu0 0.0
        %633 = vmatprep.subr.mxu0 0.0
        %634 = vmatpush1.msra.mxu0 %v416
        %635 = vmatprep.subr.mxu0 0.0
        %636 = vmatpush1.msra.mxu0 %v415
        %637 = vmatprep.subr.mxu0 0.0
        %638 = vmatpush2.msra.mxu0 0.0
        %639 = vmatprep.subr.mxu0 0.0
        %640 = vmatpush2.msra.mxu0 0.0
        %641 = vmatprep.subr.mxu0 0.0
        %642 = vmatpush2.msra.mxu0 0.0
        %643 = vmatprep.subr.mxu0 0.0
        %644 = vmatpush2.msra.mxu0 0.0
        %645 = vmatprep.subr.mxu0 0.0
        %646 = vmatpush2.msra.mxu0 0.0
        %647 = vmatprep.subr.mxu0 0.0
        %648 = vmatpush2.msra.mxu0 0.0
        %649 = vmatprep.subr.mxu0 0.0
        %650 = vmatpush2.msra.mxu0 0.0
        %651 = vmatprep.subr.mxu0 0.0
        %652 = vmatpush2.msra.mxu0 0.0
        %653 = vmatprep.subr.mxu0 0.0
        %654 = vmatpush2.msra.mxu0 0.0
        %655 = vmatprep.subr.mxu0 0.0
        %656 = vmatpush2.msra.mxu0 0.0
        %657 = vmatprep.subr.mxu0 0.0
        %658 = vmatpush2.msra.mxu0 0.0
        %659 = vmatprep.subr.mxu0 0.0
        %660 = vmatpush2.msra.mxu0 0.0
        %661 = vmatprep.subr.mxu0 0.0
        %662 = vmatpush2.msra.mxu0 0.0
        %663 = vmatprep.subr.mxu0 0.0
        %664 = vmatpush2.msra.mxu0 0.0
        %665 = vmatprep.subr.mxu0 0.0
        %666 = vmatpush2.msra.mxu0 0.0
        %667 = vmatprep.subr.mxu0 0.0
        %668 = vmatpush2.msra.mxu0 0.0
        %669 = vmatprep.mubr.f32.mxu0 0.0
        %670 = vmatmul.mubr.f32.gmra.mxu0 %v601
        %v671 = vpop.f32.mrf.mxu0
        %v672 = vadd.f32 0.0, %v671
        %v673 = vpop.f32.mrf.mxu0
        %674 = vmatprep.mubr.f32.mxu0 0.0
        %675 = vmatmul.mubr.f32.gmra.mxu0 %v603
        %v676 = vpop.f32.mrf.mxu0
        %v677 = vadd.f32 0.0, %v676
        %v678 = vpop.f32.mrf.mxu0
        %679 = vdwg.mxu0
        %v680 = vadd.f32 %v587, %v672
        %v681 = vadd.f32 %v592, %v677
        %v683 = vlaneseq
        %v684 = vshrl.u32 %v683, 7
        %v685 = vsub.s32 0, %v684
        %v686 = vrot.slane %v417, %v685
        %v688 = vadd.f32 %v680, %v686
        %v689 = vadd.f32 %v681, %v686
        %v690 = vld [vmem:[#allocation8] sm:$0xff]
        %v691 = vld [vmem:[#allocation8 + $0x8] sm:$0xff]
        %v692 = vld [vmem:[#allocation8 + $0x10] sm:$0xff]
        %v693 = vld [vmem:[#allocation8 + $0x18] sm:$0xff]
        %v694 = vld [vmem:[#allocation8 + $0x20] sm:$0xff]
        %v695 = vld [vmem:[#allocation8 + $0x28] sm:$0xff]
        %v696 = vld [vmem:[#allocation8 + $0x30] sm:$0xff]
        %v697 = vld [vmem:[#allocation8 + $0x38] sm:$0xff]
        %v698 = vld [vmem:[#allocation8 + $0x40] sm:$0xff]
        %v699 = vld [vmem:[#allocation8 + $0x48] sm:$0xff]
        %v700 = vld [vmem:[#allocation8 + $0x50] sm:$0xff]
        %v701 = vld [vmem:[#allocation8 + $0x58] sm:$0xff]
        %v702 = vld [vmem:[#allocation8 + $0x60] sm:$0xff]
        %v703 = vld [vmem:[#allocation8 + $0x68] sm:$0xff]
        %v704 = vld [vmem:[#allocation8 + $0x70] sm:$0xff]
        %v705 = vld [vmem:[#allocation8 + $0x78] sm:$0xff]
        %s706 = scalar_lea.vmem [#allocation8], 128
        %v707 = vld [vmem:[%s706] sm:$0xff]
        %v708 = vld [vmem:[%s706 + $0x8] sm:$0xff]
        %v709 = vld [vmem:[%s706 + $0x10] sm:$0xff]
        %v710 = vld [vmem:[%s706 + $0x18] sm:$0xff]
        %v711 = vld [vmem:[%s706 + $0x20] sm:$0xff]
        %v712 = vld [vmem:[%s706 + $0x28] sm:$0xff]
        %v713 = vld [vmem:[%s706 + $0x30] sm:$0xff]
        %v714 = vld [vmem:[%s706 + $0x38] sm:$0xff]
        %v715 = vld [vmem:[%s706 + $0x40] sm:$0xff]
        %v716 = vld [vmem:[%s706 + $0x48] sm:$0xff]
        %v717 = vld [vmem:[%s706 + $0x50] sm:$0xff]
        %v718 = vld [vmem:[%s706 + $0x58] sm:$0xff]
        %v719 = vld [vmem:[%s706 + $0x60] sm:$0xff]
        %v720 = vld [vmem:[%s706 + $0x68] sm:$0xff]
        %v721 = vld [vmem:[%s706 + $0x70] sm:$0xff]
        %v722 = vld [vmem:[%s706 + $0x78] sm:$0xff]
        %s723 = scalar_lea.vmem [#allocation8], 256
        %v724 = vld [vmem:[%s723] sm:$0xff]
        %v725 = vld [vmem:[%s723 + $0x8] sm:$0xff]
        %v726 = vld [vmem:[%s723 + $0x10] sm:$0xff]
        %v727 = vld [vmem:[%s723 + $0x18] sm:$0xff]
        %v728 = vld [vmem:[%s723 + $0x20] sm:$0xff]
        %v729 = vld [vmem:[%s723 + $0x28] sm:$0xff]
        %v730 = vld [vmem:[%s723 + $0x30] sm:$0xff]
        %v731 = vld [vmem:[%s723 + $0x38] sm:$0xff]
        %v732 = vld [vmem:[%s723 + $0x40] sm:$0xff]
        %v733 = vld [vmem:[%s723 + $0x48] sm:$0xff]
        %v734 = vld [vmem:[%s723 + $0x50] sm:$0xff]
        %v735 = vld [vmem:[%s723 + $0x58] sm:$0xff]
        %v736 = vld [vmem:[%s723 + $0x60] sm:$0xff]
        %v737 = vld [vmem:[%s723 + $0x68] sm:$0xff]
        %v738 = vld [vmem:[%s723 + $0x70] sm:$0xff]
        %v739 = vld [vmem:[%s723 + $0x78] sm:$0xff]
        %v740 = vld [vmem:[#allocation10] sm:$0x1]
        %v741 = vld [vmem:[#allocation11] sm:$0x1]
        %v744 = vrot.slane %v688, 7
        %v745 = vrot.slane %v689, 7
        %v746 = vsel %vm420, %v744, %v745
        %v750 = vsel %vm420, 0.0, %v744
        %v751 = vsel %vm420, %v745, 0.0
        %v754 = vrot.slane %v750, 1
        %v755 = vrot.slane %v746, 1
        %v756 = vsel %vm430, %v754, %v755
        %v757 = vrot.slane %v751, 1
        %v758 = vsel %vm430, %v755, %v757
        %761 = vmatprep.subr.mxu0 0.0
        %762 = vmatpush1.msra.mxu0 %v722
        %763 = vmatprep.subr.mxu0 0.0
        %764 = vmatpush1.msra.mxu0 %v721
        %765 = vmatprep.subr.mxu0 0.0
        %766 = vmatpush1.msra.mxu0 %v720
        %767 = vmatprep.subr.mxu0 0.0
        %768 = vmatpush1.msra.mxu0 %v719
        %769 = vmatprep.subr.mxu0 0.0
        %770 = vmatpush1.msra.mxu0 %v718
        %771 = vmatprep.subr.mxu0 0.0
        %772 = vmatpush1.msra.mxu0 %v717
        %773 = vmatprep.subr.mxu0 0.0
        %774 = vmatpush1.msra.mxu0 %v716
        %775 = vmatprep.subr.mxu0 0.0
        %776 = vmatpush1.msra.mxu0 %v715
        %777 = vmatprep.subr.mxu0 0.0
        %778 = vmatpush1.msra.mxu0 %v714
        %779 = vmatprep.subr.mxu0 0.0
        %780 = vmatpush1.msra.mxu0 %v713
        %781 = vmatprep.subr.mxu0 0.0
        %782 = vmatpush1.msra.mxu0 %v712
        %783 = vmatprep.subr.mxu0 0.0
        %784 = vmatpush1.msra.mxu0 %v711
        %785 = vmatprep.subr.mxu0 0.0
        %786 = vmatpush1.msra.mxu0 %v710
        %787 = vmatprep.subr.mxu0 0.0
        %788 = vmatpush1.msra.mxu0 %v709
        %789 = vmatprep.subr.mxu0 0.0
        %790 = vmatpush1.msra.mxu0 %v708
        %791 = vmatprep.subr.mxu0 0.0
        %792 = vmatpush1.msra.mxu0 %v707
        %793 = vmatprep.subr.mxu0 0.0
        %794 = vmatpush2.msra.mxu0 0.0
        %795 = vmatprep.subr.mxu0 0.0
        %796 = vmatpush2.msra.mxu0 0.0
        %797 = vmatprep.subr.mxu0 0.0
        %798 = vmatpush2.msra.mxu0 0.0
        %799 = vmatprep.subr.mxu0 0.0
        %800 = vmatpush2.msra.mxu0 0.0
        %801 = vmatprep.subr.mxu0 0.0
        %802 = vmatpush2.msra.mxu0 0.0
        %803 = vmatprep.subr.mxu0 0.0
        %804 = vmatpush2.msra.mxu0 0.0
        %805 = vmatprep.subr.mxu0 0.0
        %806 = vmatpush2.msra.mxu0 0.0
        %807 = vmatprep.subr.mxu0 0.0
        %808 = vmatpush2.msra.mxu0 0.0
        %809 = vmatprep.subr.mxu0 0.0
        %810 = vmatpush2.msra.mxu0 0.0
        %811 = vmatprep.subr.mxu0 0.0
        %812 = vmatpush2.msra.mxu0 0.0
        %813 = vmatprep.subr.mxu0 0.0
        %814 = vmatpush2.msra.mxu0 0.0
        %815 = vmatprep.subr.mxu0 0.0
        %816 = vmatpush2.msra.mxu0 0.0
        %817 = vmatprep.subr.mxu0 0.0
        %818 = vmatpush2.msra.mxu0 0.0
        %819 = vmatprep.subr.mxu0 0.0
        %820 = vmatpush2.msra.mxu0 0.0
        %821 = vmatprep.subr.mxu0 0.0
        %822 = vmatpush2.msra.mxu0 0.0
        %823 = vmatprep.subr.mxu0 0.0
        %824 = vmatpush2.msra.mxu0 0.0
        %825 = vmatprep.mubr.f32.mxu0 0.0
        %826 = vmatmul.mubr.f32.gmra.mxu0 %v756
        %v827 = vpop.f32.mrf.mxu0
        %v828 = vadd.f32 0.0, %v827
        %v829 = vpop.f32.mrf.mxu0
        %830 = vmatprep.mubr.f32.mxu0 0.0
        %831 = vmatmul.mubr.f32.gmra.mxu0 %v758
        %v832 = vpop.f32.mrf.mxu0
        %v833 = vadd.f32 0.0, %v832
        %v834 = vpop.f32.mrf.mxu0
        %835 = vdwg.mxu0
        %836 = vmatprep.subr.mxu0 0.0
        %837 = vmatpush1.msra.mxu0 %v705
        %838 = vmatprep.subr.mxu0 0.0
        %839 = vmatpush1.msra.mxu0 %v704
        %840 = vmatprep.subr.mxu0 0.0
        %841 = vmatpush1.msra.mxu0 %v703
        %842 = vmatprep.subr.mxu0 0.0
        %843 = vmatpush1.msra.mxu0 %v702
        %844 = vmatprep.subr.mxu0 0.0
        %845 = vmatpush1.msra.mxu0 %v701
        %846 = vmatprep.subr.mxu0 0.0
        %847 = vmatpush1.msra.mxu0 %v700
        %848 = vmatprep.subr.mxu0 0.0
        %849 = vmatpush1.msra.mxu0 %v699
        %850 = vmatprep.subr.mxu0 0.0
        %851 = vmatpush1.msra.mxu0 %v698
        %852 = vmatprep.subr.mxu0 0.0
        %853 = vmatpush1.msra.mxu0 %v697
        %854 = vmatprep.subr.mxu0 0.0
        %855 = vmatpush1.msra.mxu0 %v696
        %856 = vmatprep.subr.mxu0 0.0
        %857 = vmatpush1.msra.mxu0 %v695
        %858 = vmatprep.subr.mxu0 0.0
        %859 = vmatpush1.msra.mxu0 %v694
        %860 = vmatprep.subr.mxu0 0.0
        %861 = vmatpush1.msra.mxu0 %v693
        %862 = vmatprep.subr.mxu0 0.0
        %863 = vmatpush1.msra.mxu0 %v692
        %864 = vmatprep.subr.mxu0 0.0
        %865 = vmatpush1.msra.mxu0 %v691
        %866 = vmatprep.subr.mxu0 0.0
        %867 = vmatpush1.msra.mxu0 %v690
        %868 = vmatprep.subr.mxu0 0.0
        %869 = vmatpush2.msra.mxu0 0.0
        %870 = vmatprep.subr.mxu0 0.0
        %871 = vmatpush2.msra.mxu0 0.0
        %872 = vmatprep.subr.mxu0 0.0
        %873 = vmatpush2.msra.mxu0 0.0
        %874 = vmatprep.subr.mxu0 0.0
        %875 = vmatpush2.msra.mxu0 0.0
        %876 = vmatprep.subr.mxu0 0.0
        %877 = vmatpush2.msra.mxu0 0.0
        %878 = vmatprep.subr.mxu0 0.0
        %879 = vmatpush2.msra.mxu0 0.0
        %880 = vmatprep.subr.mxu0 0.0
        %881 = vmatpush2.msra.mxu0 0.0
        %882 = vmatprep.subr.mxu0 0.0
        %883 = vmatpush2.msra.mxu0 0.0
        %884 = vmatprep.subr.mxu0 0.0
        %885 = vmatpush2.msra.mxu0 0.0
        %886 = vmatprep.subr.mxu0 0.0
        %887 = vmatpush2.msra.mxu0 0.0
        %888 = vmatprep.subr.mxu0 0.0
        %889 = vmatpush2.msra.mxu0 0.0
        %890 = vmatprep.subr.mxu0 0.0
        %891 = vmatpush2.msra.mxu0 0.0
        %892 = vmatprep.subr.mxu0 0.0
        %893 = vmatpush2.msra.mxu0 0.0
        %894 = vmatprep.subr.mxu0 0.0
        %895 = vmatpush2.msra.mxu0 0.0
        %896 = vmatprep.subr.mxu0 0.0
        %897 = vmatpush2.msra.mxu0 0.0
        %898 = vmatprep.subr.mxu0 0.0
        %899 = vmatpush2.msra.mxu0 0.0
        %900 = vmatprep.mubr.f32.mxu0 0.0
        %901 = vmatmul.mubr.f32.gmra.mxu0 %v750
        %v902 = vpop.f32.mrf.mxu0
        %v903 = vadd.f32 %v828, %v902
        %v904 = vpop.f32.mrf.mxu0
        %905 = vmatprep.mubr.f32.mxu0 0.0
        %906 = vmatmul.mubr.f32.gmra.mxu0 %v746
        %v907 = vpop.f32.mrf.mxu0
        %v908 = vadd.f32 %v833, %v907
        %v909 = vpop.f32.mrf.mxu0
        %910 = vdwg.mxu0
        %v911 = vrot.slane %v750, 2
        %v912 = vrot.slane %v746, 2
        %v913 = vsel %vm595, %v911, %v912
        %v914 = vrot.slane %v751, 2
        %v915 = vsel %vm595, %v912, %v914
        %918 = vmatprep.subr.mxu0 0.0
        %919 = vmatpush1.msra.mxu0 %v739
        %920 = vmatprep.subr.mxu0 0.0
        %921 = vmatpush1.msra.mxu0 %v738
        %922 = vmatprep.subr.mxu0 0.0
        %923 = vmatpush1.msra.mxu0 %v737
        %924 = vmatprep.subr.mxu0 0.0
        %925 = vmatpush1.msra.mxu0 %v736
        %926 = vmatprep.subr.mxu0 0.0
        %927 = vmatpush1.msra.mxu0 %v735
        %928 = vmatprep.subr.mxu0 0.0
        %929 = vmatpush1.msra.mxu0 %v734
        %930 = vmatprep.subr.mxu0 0.0
        %931 = vmatpush1.msra.mxu0 %v733
        %932 = vmatprep.subr.mxu0 0.0
        %933 = vmatpush1.msra.mxu0 %v732
        %934 = vmatprep.subr.mxu0 0.0
        %935 = vmatpush1.msra.mxu0 %v731
        %936 = vmatprep.subr.mxu0 0.0
        %937 = vmatpush1.msra.mxu0 %v730
        %938 = vmatprep.subr.mxu0 0.0
        %939 = vmatpush1.msra.mxu0 %v729
        %940 = vmatprep.subr.mxu0 0.0
        %941 = vmatpush1.msra.mxu0 %v728
        %942 = vmatprep.subr.mxu0 0.0
        %943 = vmatpush1.msra.mxu0 %v727
        %944 = vmatprep.subr.mxu0 0.0
        %945 = vmatpush1.msra.mxu0 %v726
        %946 = vmatprep.subr.mxu0 0.0
        %947 = vmatpush1.msra.mxu0 %v725
        %948 = vmatprep.subr.mxu0 0.0
        %949 = vmatpush1.msra.mxu0 %v724
        %950 = vmatprep.subr.mxu0 0.0
        %951 = vmatpush2.msra.mxu0 0.0
        %952 = vmatprep.subr.mxu0 0.0
        %953 = vmatpush2.msra.mxu0 0.0
        %954 = vmatprep.subr.mxu0 0.0
        %955 = vmatpush2.msra.mxu0 0.0
        %956 = vmatprep.subr.mxu0 0.0
        %957 = vmatpush2.msra.mxu0 0.0
        %958 = vmatprep.subr.mxu0 0.0
        %959 = vmatpush2.msra.mxu0 0.0
        %960 = vmatprep.subr.mxu0 0.0
        %961 = vmatpush2.msra.mxu0 0.0
        %962 = vmatprep.subr.mxu0 0.0
        %963 = vmatpush2.msra.mxu0 0.0
        %964 = vmatprep.subr.mxu0 0.0
        %965 = vmatpush2.msra.mxu0 0.0
        %966 = vmatprep.subr.mxu0 0.0
        %967 = vmatpush2.msra.mxu0 0.0
        %968 = vmatprep.subr.mxu0 0.0
        %969 = vmatpush2.msra.mxu0 0.0
        %970 = vmatprep.subr.mxu0 0.0
        %971 = vmatpush2.msra.mxu0 0.0
        %972 = vmatprep.subr.mxu0 0.0
        %973 = vmatpush2.msra.mxu0 0.0
        %974 = vmatprep.subr.mxu0 0.0
        %975 = vmatpush2.msra.mxu0 0.0
        %976 = vmatprep.subr.mxu0 0.0
        %977 = vmatpush2.msra.mxu0 0.0
        %978 = vmatprep.subr.mxu0 0.0
        %979 = vmatpush2.msra.mxu0 0.0
        %980 = vmatprep.subr.mxu0 0.0
        %981 = vmatpush2.msra.mxu0 0.0
        %982 = vmatprep.mubr.f32.mxu0 0.0
        %983 = vmatmul.mubr.f32.gmra.mxu0 %v913
        %v984 = vpop.f32.mrf.mxu0
        %v985 = vadd.f32 0.0, %v984
        %v986 = vpop.f32.mrf.mxu0
        %987 = vmatprep.mubr.f32.mxu0 0.0
        %988 = vmatmul.mubr.f32.gmra.mxu0 %v915
        %v989 = vpop.f32.mrf.mxu0
        %v990 = vadd.f32 0.0, %v989
        %v991 = vpop.f32.mrf.mxu0
        %992 = vdwg.mxu0
        %v993 = vadd.f32 %v903, %v985
        %v994 = vadd.f32 %v908, %v990
        %v996 = vlaneseq
        %v997 = vshrl.u32 %v996, 7
        %v998 = vsub.s32 0, %v997
        %v999 = vrot.slane %v740, %v998
        %v1001 = vmul.f32 %v993, %v999
        %v1002 = vmul.f32 %v994, %v999
        %v1004 = vlaneseq
        %v1005 = vshrl.u32 %v1004, 7
        %v1006 = vsub.s32 0, %v1005
        %v1007 = vrot.slane %v741, %v1006
        %v1009 = vadd.f32 %v1001, %v1007
        %v1010 = vadd.f32 %v1002, %v1007
        %v1011 = vmax.f32 %v1009, 0.0
        %v1012 = vmax.f32 %v1010, 0.0
        %s1013 = scalar_lea.vmem [#allocation8], 384
        %v1014 = vld [vmem:[%s1013] sm:$0xff]
        %v1015 = vld [vmem:[%s1013 + $0x8] sm:$0xff]
        %v1016 = vld [vmem:[%s1013 + $0x10] sm:$0xff]
        %v1017 = vld [vmem:[%s1013 + $0x18] sm:$0xff]
        %v1018 = vld [vmem:[%s1013 + $0x20] sm:$0xff]
        %v1019 = vld [vmem:[%s1013 + $0x28] sm:$0xff]
        %v1020 = vld [vmem:[%s1013 + $0x30] sm:$0xff]
        %v1021 = vld [vmem:[%s1013 + $0x38] sm:$0xff]
        %v1022 = vld [vmem:[%s1013 + $0x40] sm:$0xff]
        %v1023 = vld [vmem:[%s1013 + $0x48] sm:$0xff]
        %v1024 = vld [vmem:[%s1013 + $0x50] sm:$0xff]
        %v1025 = vld [vmem:[%s1013 + $0x58] sm:$0xff]
        %v1026 = vld [vmem:[%s1013 + $0x60] sm:$0xff]
        %v1027 = vld [vmem:[%s1013 + $0x68] sm:$0xff]
        %v1028 = vld [vmem:[%s1013 + $0x70] sm:$0xff]
        %v1029 = vld [vmem:[%s1013 + $0x78] sm:$0xff]
        %s1030 = scalar_lea.vmem [#allocation8], 512
        %v1031 = vld [vmem:[%s1030] sm:$0xff]
        %v1032 = vld [vmem:[%s1030 + $0x8] sm:$0xff]
        %v1033 = vld [vmem:[%s1030 + $0x10] sm:$0xff]
        %v1034 = vld [vmem:[%s1030 + $0x18] sm:$0xff]
        %v1035 = vld [vmem:[%s1030 + $0x20] sm:$0xff]
        %v1036 = vld [vmem:[%s1030 + $0x28] sm:$0xff]
        %v1037 = vld [vmem:[%s1030 + $0x30] sm:$0xff]
        %v1038 = vld [vmem:[%s1030 + $0x38] sm:$0xff]
        %v1039 = vld [vmem:[%s1030 + $0x40] sm:$0xff]
        %v1040 = vld [vmem:[%s1030 + $0x48] sm:$0xff]
        %v1041 = vld [vmem:[%s1030 + $0x50] sm:$0xff]
        %v1042 = vld [vmem:[%s1030 + $0x58] sm:$0xff]
        %v1043 = vld [vmem:[%s1030 + $0x60] sm:$0xff]
        %v1044 = vld [vmem:[%s1030 + $0x68] sm:$0xff]
        %v1045 = vld [vmem:[%s1030 + $0x70] sm:$0xff]
        %v1046 = vld [vmem:[%s1030 + $0x78] sm:$0xff]
        %s1047 = scalar_lea.vmem [#allocation8], 640
        %v1048 = vld [vmem:[%s1047] sm:$0xff]
        %v1049 = vld [vmem:[%s1047 + $0x8] sm:$0xff]
        %v1050 = vld [vmem:[%s1047 + $0x10] sm:$0xff]
        %v1051 = vld [vmem:[%s1047 + $0x18] sm:$0xff]
        %v1052 = vld [vmem:[%s1047 + $0x20] sm:$0xff]
        %v1053 = vld [vmem:[%s1047 + $0x28] sm:$0xff]
        %v1054 = vld [vmem:[%s1047 + $0x30] sm:$0xff]
        %v1055 = vld [vmem:[%s1047 + $0x38] sm:$0xff]
        %v1056 = vld [vmem:[%s1047 + $0x40] sm:$0xff]
        %v1057 = vld [vmem:[%s1047 + $0x48] sm:$0xff]
        %v1058 = vld [vmem:[%s1047 + $0x50] sm:$0xff]
        %v1059 = vld [vmem:[%s1047 + $0x58] sm:$0xff]
        %v1060 = vld [vmem:[%s1047 + $0x60] sm:$0xff]
        %v1061 = vld [vmem:[%s1047 + $0x68] sm:$0xff]
        %v1062 = vld [vmem:[%s1047 + $0x70] sm:$0xff]
        %v1063 = vld [vmem:[%s1047 + $0x78] sm:$0xff]
        %s1064 = scalar_lea.vmem [#allocation10], 1
        %v1065 = vld [vmem:[%s1064] sm:$0x1]
        %s1066 = scalar_lea.vmem [#allocation11], 1
        %v1067 = vld [vmem:[%s1066] sm:$0x1]
        %v1070 = vrot.slane %v1011, 7
        %v1071 = vrot.slane %v1012, 7
        %v1072 = vsel %vm420, %v1070, %v1071
        %v1076 = vsel %vm420, 0.0, %v1070
        %v1077 = vsel %vm420, %v1071, 0.0
        %v1080 = vrot.slane %v1076, 1
        %v1081 = vrot.slane %v1072, 1
        %v1082 = vsel %vm430, %v1080, %v1081
        %v1083 = vrot.slane %v1077, 1
        %v1084 = vsel %vm430, %v1081, %v1083
        %1087 = vmatprep.subr.mxu0 0.0
        %1088 = vmatpush1.msra.mxu0 %v1046
        %1089 = vmatprep.subr.mxu0 0.0
        %1090 = vmatpush1.msra.mxu0 %v1045
        %1091 = vmatprep.subr.mxu0 0.0
        %1092 = vmatpush1.msra.mxu0 %v1044
        %1093 = vmatprep.subr.mxu0 0.0
        %1094 = vmatpush1.msra.mxu0 %v1043
        %1095 = vmatprep.subr.mxu0 0.0
        %1096 = vmatpush1.msra.mxu0 %v1042
        %1097 = vmatprep.subr.mxu0 0.0
        %1098 = vmatpush1.msra.mxu0 %v1041
        %1099 = vmatprep.subr.mxu0 0.0
        %1100 = vmatpush1.msra.mxu0 %v1040
        %1101 = vmatprep.subr.mxu0 0.0
        %1102 = vmatpush1.msra.mxu0 %v1039
        %1103 = vmatprep.subr.mxu0 0.0
        %1104 = vmatpush1.msra.mxu0 %v1038
        %1105 = vmatprep.subr.mxu0 0.0
        %1106 = vmatpush1.msra.mxu0 %v1037
        %1107 = vmatprep.subr.mxu0 0.0
        %1108 = vmatpush1.msra.mxu0 %v1036
        %1109 = vmatprep.subr.mxu0 0.0
        %1110 = vmatpush1.msra.mxu0 %v1035
        %1111 = vmatprep.subr.mxu0 0.0
        %1112 = vmatpush1.msra.mxu0 %v1034
        %1113 = vmatprep.subr.mxu0 0.0
        %1114 = vmatpush1.msra.mxu0 %v1033
        %1115 = vmatprep.subr.mxu0 0.0
        %1116 = vmatpush1.msra.mxu0 %v1032
        %1117 = vmatprep.subr.mxu0 0.0
        %1118 = vmatpush1.msra.mxu0 %v1031
        %1119 = vmatprep.subr.mxu0 0.0
        %1120 = vmatpush2.msra.mxu0 0.0
        %1121 = vmatprep.subr.mxu0 0.0
        %1122 = vmatpush2.msra.mxu0 0.0
        %1123 = vmatprep.subr.mxu0 0.0
        %1124 = vmatpush2.msra.mxu0 0.0
        %1125 = vmatprep.subr.mxu0 0.0
        %1126 = vmatpush2.msra.mxu0 0.0
        %1127 = vmatprep.subr.mxu0 0.0
        %1128 = vmatpush2.msra.mxu0 0.0
        %1129 = vmatprep.subr.mxu0 0.0
        %1130 = vmatpush2.msra.mxu0 0.0
        %1131 = vmatprep.subr.mxu0 0.0
        %1132 = vmatpush2.msra.mxu0 0.0
        %1133 = vmatprep.subr.mxu0 0.0
        %1134 = vmatpush2.msra.mxu0 0.0
        %1135 = vmatprep.subr.mxu0 0.0
        %1136 = vmatpush2.msra.mxu0 0.0
        %1137 = vmatprep.subr.mxu0 0.0
        %1138 = vmatpush2.msra.mxu0 0.0
        %1139 = vmatprep.subr.mxu0 0.0
        %1140 = vmatpush2.msra.mxu0 0.0
        %1141 = vmatprep.subr.mxu0 0.0
        %1142 = vmatpush2.msra.mxu0 0.0
        %1143 = vmatprep.subr.mxu0 0.0
        %1144 = vmatpush2.msra.mxu0 0.0
        %1145 = vmatprep.subr.mxu0 0.0
        %1146 = vmatpush2.msra.mxu0 0.0
        %1147 = vmatprep.subr.mxu0 0.0
        %1148 = vmatpush2.msra.mxu0 0.0
        %1149 = vmatprep.subr.mxu0 0.0
        %1150 = vmatpush2.msra.mxu0 0.0
        %1151 = vmatprep.mubr.f32.mxu0 0.0
        %1152 = vmatmul.mubr.f32.gmra.mxu0 %v1082
        %v1153 = vpop.f32.mrf.mxu0
        %v1154 = vadd.f32 0.0, %v1153
        %v1155 = vpop.f32.mrf.mxu0
        %1156 = vmatprep.mubr.f32.mxu0 0.0
        %1157 = vmatmul.mubr.f32.gmra.mxu0 %v1084
        %v1158 = vpop.f32.mrf.mxu0
        %v1159 = vadd.f32 0.0, %v1158
        %v1160 = vpop.f32.mrf.mxu0
        %1161 = vdwg.mxu0
        %1162 = vmatprep.subr.mxu0 0.0
        %1163 = vmatpush1.msra.mxu0 %v1029
        %1164 = vmatprep.subr.mxu0 0.0
        %1165 = vmatpush1.msra.mxu0 %v1028
        %1166 = vmatprep.subr.mxu0 0.0
        %1167 = vmatpush1.msra.mxu0 %v1027
        %1168 = vmatprep.subr.mxu0 0.0
        %1169 = vmatpush1.msra.mxu0 %v1026
        %1170 = vmatprep.subr.mxu0 0.0
        %1171 = vmatpush1.msra.mxu0 %v1025
        %1172 = vmatprep.subr.mxu0 0.0
        %1173 = vmatpush1.msra.mxu0 %v1024
        %1174 = vmatprep.subr.mxu0 0.0
        %1175 = vmatpush1.msra.mxu0 %v1023
        %1176 = vmatprep.subr.mxu0 0.0
        %1177 = vmatpush1.msra.mxu0 %v1022
        %1178 = vmatprep.subr.mxu0 0.0
        %1179 = vmatpush1.msra.mxu0 %v1021
        %1180 = vmatprep.subr.mxu0 0.0
        %1181 = vmatpush1.msra.mxu0 %v1020
        %1182 = vmatprep.subr.mxu0 0.0
        %1183 = vmatpush1.msra.mxu0 %v1019
        %1184 = vmatprep.subr.mxu0 0.0
        %1185 = vmatpush1.msra.mxu0 %v1018
        %1186 = vmatprep.subr.mxu0 0.0
        %1187 = vmatpush1.msra.mxu0 %v1017
        %1188 = vmatprep.subr.mxu0 0.0
        %1189 = vmatpush1.msra.mxu0 %v1016
        %1190 = vmatprep.subr.mxu0 0.0
        %1191 = vmatpush1.msra.mxu0 %v1015
        %1192 = vmatprep.subr.mxu0 0.0
        %1193 = vmatpush1.msra.mxu0 %v1014
        %1194 = vmatprep.subr.mxu0 0.0
        %1195 = vmatpush2.msra.mxu0 0.0
        %1196 = vmatprep.subr.mxu0 0.0
        %1197 = vmatpush2.msra.mxu0 0.0
        %1198 = vmatprep.subr.mxu0 0.0
        %1199 = vmatpush2.msra.mxu0 0.0
        %1200 = vmatprep.subr.mxu0 0.0
        %1201 = vmatpush2.msra.mxu0 0.0
        %1202 = vmatprep.subr.mxu0 0.0
        %1203 = vmatpush2.msra.mxu0 0.0
        %1204 = vmatprep.subr.mxu0 0.0
        %1205 = vmatpush2.msra.mxu0 0.0
        %1206 = vmatprep.subr.mxu0 0.0
        %1207 = vmatpush2.msra.mxu0 0.0
        %1208 = vmatprep.subr.mxu0 0.0
        %1209 = vmatpush2.msra.mxu0 0.0
        %1210 = vmatprep.subr.mxu0 0.0
        %1211 = vmatpush2.msra.mxu0 0.0
        %1212 = vmatprep.subr.mxu0 0.0
        %1213 = vmatpush2.msra.mxu0 0.0
        %1214 = vmatprep.subr.mxu0 0.0
        %1215 = vmatpush2.msra.mxu0 0.0
        %1216 = vmatprep.subr.mxu0 0.0
        %1217 = vmatpush2.msra.mxu0 0.0
        %1218 = vmatprep.subr.mxu0 0.0
        %1219 = vmatpush2.msra.mxu0 0.0
        %1220 = vmatprep.subr.mxu0 0.0
        %1221 = vmatpush2.msra.mxu0 0.0
        %1222 = vmatprep.subr.mxu0 0.0
        %1223 = vmatpush2.msra.mxu0 0.0
        %1224 = vmatprep.subr.mxu0 0.0
        %1225 = vmatpush2.msra.mxu0 0.0
        %1226 = vmatprep.mubr.f32.mxu0 0.0
        %1227 = vmatmul.mubr.f32.gmra.mxu0 %v1076
        %v1228 = vpop.f32.mrf.mxu0
        %v1229 = vadd.f32 %v1154, %v1228
        %v1230 = vpop.f32.mrf.mxu0
        %1231 = vmatprep.mubr.f32.mxu0 0.0
        %1232 = vmatmul.mubr.f32.gmra.mxu0 %v1072
        %v1233 = vpop.f32.mrf.mxu0
        %v1234 = vadd.f32 %v1159, %v1233
        %v1235 = vpop.f32.mrf.mxu0
        %1236 = vdwg.mxu0
        %v1237 = vrot.slane %v1076, 2
        %v1238 = vrot.slane %v1072, 2
        %v1239 = vsel %vm595, %v1237, %v1238
        %v1240 = vrot.slane %v1077, 2
        %v1241 = vsel %vm595, %v1238, %v1240
        %1244 = vmatprep.subr.mxu0 0.0
        %1245 = vmatpush1.msra.mxu0 %v1063
        %1246 = vmatprep.subr.mxu0 0.0
        %1247 = vmatpush1.msra.mxu0 %v1062
        %1248 = vmatprep.subr.mxu0 0.0
        %1249 = vmatpush1.msra.mxu0 %v1061
        %1250 = vmatprep.subr.mxu0 0.0
        %1251 = vmatpush1.msra.mxu0 %v1060
        %1252 = vmatprep.subr.mxu0 0.0
        %1253 = vmatpush1.msra.mxu0 %v1059
        %1254 = vmatprep.subr.mxu0 0.0
        %1255 = vmatpush1.msra.mxu0 %v1058
        %1256 = vmatprep.subr.mxu0 0.0
        %1257 = vmatpush1.msra.mxu0 %v1057
        %1258 = vmatprep.subr.mxu0 0.0
        %1259 = vmatpush1.msra.mxu0 %v1056
        %1260 = vmatprep.subr.mxu0 0.0
        %1261 = vmatpush1.msra.mxu0 %v1055
        %1262 = vmatprep.subr.mxu0 0.0
        %1263 = vmatpush1.msra.mxu0 %v1054
        %1264 = vmatprep.subr.mxu0 0.0
        %1265 = vmatpush1.msra.mxu0 %v1053
        %1266 = vmatprep.subr.mxu0 0.0
        %1267 = vmatpush1.msra.mxu0 %v1052
        %1268 = vmatprep.subr.mxu0 0.0
        %1269 = vmatpush1.msra.mxu0 %v1051
        %1270 = vmatprep.subr.mxu0 0.0
        %1271 = vmatpush1.msra.mxu0 %v1050
        %1272 = vmatprep.subr.mxu0 0.0
        %1273 = vmatpush1.msra.mxu0 %v1049
        %1274 = vmatprep.subr.mxu0 0.0
        %1275 = vmatpush1.msra.mxu0 %v1048
        %1276 = vmatprep.subr.mxu0 0.0
        %1277 = vmatpush2.msra.mxu0 0.0
        %1278 = vmatprep.subr.mxu0 0.0
        %1279 = vmatpush2.msra.mxu0 0.0
        %1280 = vmatprep.subr.mxu0 0.0
        %1281 = vmatpush2.msra.mxu0 0.0
        %1282 = vmatprep.subr.mxu0 0.0
        %1283 = vmatpush2.msra.mxu0 0.0
        %1284 = vmatprep.subr.mxu0 0.0
        %1285 = vmatpush2.msra.mxu0 0.0
        %1286 = vmatprep.subr.mxu0 0.0
        %1287 = vmatpush2.msra.mxu0 0.0
        %1288 = vmatprep.subr.mxu0 0.0
        %1289 = vmatpush2.msra.mxu0 0.0
        %1290 = vmatprep.subr.mxu0 0.0
        %1291 = vmatpush2.msra.mxu0 0.0
        %1292 = vmatprep.subr.mxu0 0.0
        %1293 = vmatpush2.msra.mxu0 0.0
        %1294 = vmatprep.subr.mxu0 0.0
        %1295 = vmatpush2.msra.mxu0 0.0
        %1296 = vmatprep.subr.mxu0 0.0
        %1297 = vmatpush2.msra.mxu0 0.0
        %1298 = vmatprep.subr.mxu0 0.0
        %1299 = vmatpush2.msra.mxu0 0.0
        %1300 = vmatprep.subr.mxu0 0.0
        %1301 = vmatpush2.msra.mxu0 0.0
        %1302 = vmatprep.subr.mxu0 0.0
        %1303 = vmatpush2.msra.mxu0 0.0
        %1304 = vmatprep.subr.mxu0 0.0
        %1305 = vmatpush2.msra.mxu0 0.0
        %1306 = vmatprep.subr.mxu0 0.0
        %1307 = vmatpush2.msra.mxu0 0.0
        %1308 = vmatprep.mubr.f32.mxu0 0.0
        %1309 = vmatmul.mubr.f32.gmra.mxu0 %v1239
        %v1310 = vpop.f32.mrf.mxu0
        %v1311 = vadd.f32 0.0, %v1310
        %v1312 = vpop.f32.mrf.mxu0
        %1313 = vmatprep.mubr.f32.mxu0 0.0
        %1314 = vmatmul.mubr.f32.gmra.mxu0 %v1241
        %v1315 = vpop.f32.mrf.mxu0
        %v1316 = vadd.f32 0.0, %v1315
        %v1317 = vpop.f32.mrf.mxu0
        %1318 = vdwg.mxu0
        %v1319 = vadd.f32 %v1229, %v1311
        %v1320 = vadd.f32 %v1234, %v1316
        %v1322 = vlaneseq
        %v1323 = vshrl.u32 %v1322, 7
        %v1324 = vsub.s32 0, %v1323
        %v1325 = vrot.slane %v1065, %v1324
        %v1327 = vmul.f32 %v1319, %v1325
        %v1328 = vmul.f32 %v1320, %v1325
        %v1330 = vlaneseq
        %v1331 = vshrl.u32 %v1330, 7
        %v1332 = vsub.s32 0, %v1331
        %v1333 = vrot.slane %v1067, %v1332
        %v1335 = vadd.f32 %v1327, %v1333
        %v1336 = vadd.f32 %v1328, %v1333
        %v1337 = vadd.f32 %v1335, %v688
        %v1338 = vadd.f32 %v1336, %v689
        %v1339 = vmax.f32 %v1337, 0.0
        %v1340 = vmax.f32 %v1338, 0.0
        %s1341 = scalar_lea.vmem [#allocation8], 768
        %v1342 = vld [vmem:[%s1341] sm:$0xff]
        %v1343 = vld [vmem:[%s1341 + $0x8] sm:$0xff]
        %v1344 = vld [vmem:[%s1341 + $0x10] sm:$0xff]
        %v1345 = vld [vmem:[%s1341 + $0x18] sm:$0xff]
        %v1346 = vld [vmem:[%s1341 + $0x20] sm:$0xff]
        %v1347 = vld [vmem:[%s1341 + $0x28] sm:$0xff]
        %v1348 = vld [vmem:[%s1341 + $0x30] sm:$0xff]
        %v1349 = vld [vmem:[%s1341 + $0x38] sm:$0xff]
        %v1350 = vld [vmem:[%s1341 + $0x40] sm:$0xff]
        %v1351 = vld [vmem:[%s1341 + $0x48] sm:$0xff]
        %v1352 = vld [vmem:[%s1341 + $0x50] sm:$0xff]
        %v1353 = vld [vmem:[%s1341 + $0x58] sm:$0xff]
        %v1354 = vld [vmem:[%s1341 + $0x60] sm:$0xff]
        %v1355 = vld [vmem:[%s1341 + $0x68] sm:$0xff]
        %v1356 = vld [vmem:[%s1341 + $0x70] sm:$0xff]
        %v1357 = vld [vmem:[%s1341 + $0x78] sm:$0xff]
        %s1358 = scalar_lea.vmem [#allocation8], 896
        %v1359 = vld [vmem:[%s1358] sm:$0xff]
        %v1360 = vld [vmem:[%s1358 + $0x8] sm:$0xff]
        %v1361 = vld [vmem:[%s1358 + $0x10] sm:$0xff]
        %v1362 = vld [vmem:[%s1358 + $0x18] sm:$0xff]
        %v1363 = vld [vmem:[%s1358 + $0x20] sm:$0xff]
        %v1364 = vld [vmem:[%s1358 + $0x28] sm:$0xff]
        %v1365 = vld [vmem:[%s1358 + $0x30] sm:$0xff]
        %v1366 = vld [vmem:[%s1358 + $0x38] sm:$0xff]
        %v1367 = vld [vmem:[%s1358 + $0x40] sm:$0xff]
        %v1368 = vld [vmem:[%s1358 + $0x48] sm:$0xff]
        %v1369 = vld [vmem:[%s1358 + $0x50] sm:$0xff]
        %v1370 = vld [vmem:[%s1358 + $0x58] sm:$0xff]
        %v1371 = vld [vmem:[%s1358 + $0x60] sm:$0xff]
        %v1372 = vld [vmem:[%s1358 + $0x68] sm:$0xff]
        %v1373 = vld [vmem:[%s1358 + $0x70] sm:$0xff]
        %v1374 = vld [vmem:[%s1358 + $0x78] sm:$0xff]
        %s1375 = scalar_lea.vmem [#allocation8], 1024
        %v1376 = vld [vmem:[%s1375] sm:$0xff]
        %v1377 = vld [vmem:[%s1375 + $0x8] sm:$0xff]
        %v1378 = vld [vmem:[%s1375 + $0x10] sm:$0xff]
        %v1379 = vld [vmem:[%s1375 + $0x18] sm:$0xff]
        %v1380 = vld [vmem:[%s1375 + $0x20] sm:$0xff]
        %v1381 = vld [vmem:[%s1375 + $0x28] sm:$0xff]
        %v1382 = vld [vmem:[%s1375 + $0x30] sm:$0xff]
        %v1383 = vld [vmem:[%s1375 + $0x38] sm:$0xff]
        %v1384 = vld [vmem:[%s1375 + $0x40] sm:$0xff]
        %v1385 = vld [vmem:[%s1375 + $0x48] sm:$0xff]
        %v1386 = vld [vmem:[%s1375 + $0x50] sm:$0xff]
        %v1387 = vld [vmem:[%s1375 + $0x58] sm:$0xff]
        %v1388 = vld [vmem:[%s1375 + $0x60] sm:$0xff]
        %v1389 = vld [vmem:[%s1375 + $0x68] sm:$0xff]
        %v1390 = vld [vmem:[%s1375 + $0x70] sm:$0xff]
        %v1391 = vld [vmem:[%s1375 + $0x78] sm:$0xff]
        %s1392 = scalar_lea.vmem [#allocation10], 2
        %v1393 = vld [vmem:[%s1392] sm:$0x1]
        %s1394 = scalar_lea.vmem [#allocation11], 2
        %v1395 = vld [vmem:[%s1394] sm:$0x1]
        %v1398 = vrot.slane %v1339, 7
        %v1399 = vrot.slane %v1340, 7
        %v1400 = vsel %vm420, %v1398, %v1399
        %v1404 = vsel %vm420, 0.0, %v1398
        %v1405 = vsel %vm420, %v1399, 0.0
        %v1408 = vrot.slane %v1404, 1
        %v1409 = vrot.slane %v1400, 1
        %v1410 = vsel %vm430, %v1408, %v1409
        %v1411 = vrot.slane %v1405, 1
        %v1412 = vsel %vm430, %v1409, %v1411
        %1415 = vmatprep.subr.mxu0 0.0
        %1416 = vmatpush1.msra.mxu0 %v1374
        %1417 = vmatprep.subr.mxu0 0.0
        %1418 = vmatpush1.msra.mxu0 %v1373
        %1419 = vmatprep.subr.mxu0 0.0
        %1420 = vmatpush1.msra.mxu0 %v1372
        %1421 = vmatprep.subr.mxu0 0.0
        %1422 = vmatpush1.msra.mxu0 %v1371
        %1423 = vmatprep.subr.mxu0 0.0
        %1424 = vmatpush1.msra.mxu0 %v1370
        %1425 = vmatprep.subr.mxu0 0.0
        %1426 = vmatpush1.msra.mxu0 %v1369
        %1427 = vmatprep.subr.mxu0 0.0
        %1428 = vmatpush1.msra.mxu0 %v1368
        %1429 = vmatprep.subr.mxu0 0.0
        %1430 = vmatpush1.msra.mxu0 %v1367
        %1431 = vmatprep.subr.mxu0 0.0
        %1432 = vmatpush1.msra.mxu0 %v1366
        %1433 = vmatprep.subr.mxu0 0.0
        %1434 = vmatpush1.msra.mxu0 %v1365
        %1435 = vmatprep.subr.mxu0 0.0
        %1436 = vmatpush1.msra.mxu0 %v1364
        %1437 = vmatprep.subr.mxu0 0.0
        %1438 = vmatpush1.msra.mxu0 %v1363
        %1439 = vmatprep.subr.mxu0 0.0
        %1440 = vmatpush1.msra.mxu0 %v1362
        %1441 = vmatprep.subr.mxu0 0.0
        %1442 = vmatpush1.msra.mxu0 %v1361
        %1443 = vmatprep.subr.mxu0 0.0
        %1444 = vmatpush1.msra.mxu0 %v1360
        %1445 = vmatprep.subr.mxu0 0.0
        %1446 = vmatpush1.msra.mxu0 %v1359
        %1447 = vmatprep.subr.mxu0 0.0
        %1448 = vmatpush2.msra.mxu0 0.0
        %1449 = vmatprep.subr.mxu0 0.0
        %1450 = vmatpush2.msra.mxu0 0.0
        %1451 = vmatprep.subr.mxu0 0.0
        %1452 = vmatpush2.msra.mxu0 0.0
        %1453 = vmatprep.subr.mxu0 0.0
        %1454 = vmatpush2.msra.mxu0 0.0
        %1455 = vmatprep.subr.mxu0 0.0
        %1456 = vmatpush2.msra.mxu0 0.0
        %1457 = vmatprep.subr.mxu0 0.0
        %1458 = vmatpush2.msra.mxu0 0.0
        %1459 = vmatprep.subr.mxu0 0.0
        %1460 = vmatpush2.msra.mxu0 0.0
        %1461 = vmatprep.subr.mxu0 0.0
        %1462 = vmatpush2.msra.mxu0 0.0
        %1463 = vmatprep.subr.mxu0 0.0
        %1464 = vmatpush2.msra.mxu0 0.0
        %1465 = vmatprep.subr.mxu0 0.0
        %1466 = vmatpush2.msra.mxu0 0.0
        %1467 = vmatprep.subr.mxu0 0.0
        %1468 = vmatpush2.msra.mxu0 0.0
        %1469 = vmatprep.subr.mxu0 0.0
        %1470 = vmatpush2.msra.mxu0 0.0
        %1471 = vmatprep.subr.mxu0 0.0
        %1472 = vmatpush2.msra.mxu0 0.0
        %1473 = vmatprep.subr.mxu0 0.0
        %1474 = vmatpush2.msra.mxu0 0.0
        %1475 = vmatprep.subr.mxu0 0.0
        %1476 = vmatpush2.msra.mxu0 0.0
        %1477 = vmatprep.subr.mxu0 0.0
        %1478 = vmatpush2.msra.mxu0 0.0
        %1479 = vmatprep.mubr.f32.mxu0 0.0
        %1480 = vmatmul.mubr.f32.gmra.mxu0 %v1410
        %v1481 = vpop.f32.mrf.mxu0
        %v1482 = vadd.f32 0.0, %v1481
        %v1483 = vpop.f32.mrf.mxu0
        %1484 = vmatprep.mubr.f32.mxu0 0.0
        %1485 = vmatmul.mubr.f32.gmra.mxu0 %v1412
        %v1486 = vpop.f32.mrf.mxu0
        %v1487 = vadd.f32 0.0, %v1486
        %v1488 = vpop.f32.mrf.mxu0
        %1489 = vdwg.mxu0
        %1490 = vmatprep.subr.mxu0 0.0
        %1491 = vmatpush1.msra.mxu0 %v1357
        %1492 = vmatprep.subr.mxu0 0.0
        %1493 = vmatpush1.msra.mxu0 %v1356
        %1494 = vmatprep.subr.mxu0 0.0
        %1495 = vmatpush1.msra.mxu0 %v1355
        %1496 = vmatprep.subr.mxu0 0.0
        %1497 = vmatpush1.msra.mxu0 %v1354
        %1498 = vmatprep.subr.mxu0 0.0
        %1499 = vmatpush1.msra.mxu0 %v1353
        %1500 = vmatprep.subr.mxu0 0.0
        %1501 = vmatpush1.msra.mxu0 %v1352
        %1502 = vmatprep.subr.mxu0 0.0
        %1503 = vmatpush1.msra.mxu0 %v1351
        %1504 = vmatprep.subr.mxu0 0.0
        %1505 = vmatpush1.msra.mxu0 %v1350
        %1506 = vmatprep.subr.mxu0 0.0
        %1507 = vmatpush1.msra.mxu0 %v1349
        %1508 = vmatprep.subr.mxu0 0.0
        %1509 = vmatpush1.msra.mxu0 %v1348
        %1510 = vmatprep.subr.mxu0 0.0
        %1511 = vmatpush1.msra.mxu0 %v1347
        %1512 = vmatprep.subr.mxu0 0.0
        %1513 = vmatpush1.msra.mxu0 %v1346
        %1514 = vmatprep.subr.mxu0 0.0
        %1515 = vmatpush1.msra.mxu0 %v1345
        %1516 = vmatprep.subr.mxu0 0.0
        %1517 = vmatpush1.msra.mxu0 %v1344
        %1518 = vmatprep.subr.mxu0 0.0
        %1519 = vmatpush1.msra.mxu0 %v1343
        %1520 = vmatprep.subr.mxu0 0.0
        %1521 = vmatpush1.msra.mxu0 %v1342
        %1522 = vmatprep.subr.mxu0 0.0
        %1523 = vmatpush2.msra.mxu0 0.0
        %1524 = vmatprep.subr.mxu0 0.0
        %1525 = vmatpush2.msra.mxu0 0.0
        %1526 = vmatprep.subr.mxu0 0.0
        %1527 = vmatpush2.msra.mxu0 0.0
        %1528 = vmatprep.subr.mxu0 0.0
        %1529 = vmatpush2.msra.mxu0 0.0
        %1530 = vmatprep.subr.mxu0 0.0
        %1531 = vmatpush2.msra.mxu0 0.0
        %1532 = vmatprep.subr.mxu0 0.0
        %1533 = vmatpush2.msra.mxu0 0.0
        %1534 = vmatprep.subr.mxu0 0.0
        %1535 = vmatpush2.msra.mxu0 0.0
        %1536 = vmatprep.subr.mxu0 0.0
        %1537 = vmatpush2.msra.mxu0 0.0
        %1538 = vmatprep.subr.mxu0 0.0
        %1539 = vmatpush2.msra.mxu0 0.0
        %1540 = vmatprep.subr.mxu0 0.0
        %1541 = vmatpush2.msra.mxu0 0.0
        %1542 = vmatprep.subr.mxu0 0.0
        %1543 = vmatpush2.msra.mxu0 0.0
        %1544 = vmatprep.subr.mxu0 0.0
        %1545 = vmatpush2.msra.mxu0 0.0
        %1546 = vmatprep.subr.mxu0 0.0
        %1547 = vmatpush2.msra.mxu0 0.0
        %1548 = vmatprep.subr.mxu0 0.0
        %1549 = vmatpush2.msra.mxu0 0.0
        %1550 = vmatprep.subr.mxu0 0.0
        %1551 = vmatpush2.msra.mxu0 0.0
        %1552 = vmatprep.subr.mxu0 0.0
        %1553 = vmatpush2.msra.mxu0 0.0
        %1554 = vmatprep.mubr.f32.mxu0 0.0
        %1555 = vmatmul.mubr.f32.gmra.mxu0 %v1404
        %v1556 = vpop.f32.mrf.mxu0
        %v1557 = vadd.f32 %v1482, %v1556
        %v1558 = vpop.f32.mrf.mxu0
        %1559 = vmatprep.mubr.f32.mxu0 0.0
        %1560 = vmatmul.mubr.f32.gmra.mxu0 %v1400
        %v1561 = vpop.f32.mrf.mxu0
        %v1562 = vadd.f32 %v1487, %v1561
        %v1563 = vpop.f32.mrf.mxu0
        %1564 = vdwg.mxu0
        %v1565 = vrot.slane %v1404, 2
        %v1566 = vrot.slane %v1400, 2
        %v1567 = vsel %vm595, %v1565, %v1566
        %v1568 = vrot.slane %v1405, 2
        %v1569 = vsel %vm595, %v1566, %v1568
        %1572 = vmatprep.subr.mxu0 0.0
        %1573 = vmatpush1.msra.mxu0 %v1391
        %1574 = vmatprep.subr.mxu0 0.0
        %1575 = vmatpush1.msra.mxu0 %v1390
        %1576 = vmatprep.subr.mxu0 0.0
        %1577 = vmatpush1.msra.mxu0 %v1389
        %1578 = vmatprep.subr.mxu0 0.0
        %1579 = vmatpush1.msra.mxu0 %v1388
        %1580 = vmatprep.subr.mxu0 0.0
        %1581 = vmatpush1.msra.mxu0 %v1387
        %1582 = vmatprep.subr.mxu0 0.0
        %1583 = vmatpush1.msra.mxu0 %v1386
        %1584 = vmatprep.subr.mxu0 0.0
        %1585 = vmatpush1.msra.mxu0 %v1385
        %1586 = vmatprep.subr.mxu0 0.0
        %1587 = vmatpush1.msra.mxu0 %v1384
        %1588 = vmatprep.subr.mxu0 0.0
        %1589 = vmatpush1.msra.mxu0 %v1383
        %1590 = vmatprep.subr.mxu0 0.0
        %1591 = vmatpush1.msra.mxu0 %v1382
        %1592 = vmatprep.subr.mxu0 0.0
        %1593 = vmatpush1.msra.mxu0 %v1381
        %1594 = vmatprep.subr.mxu0 0.0
        %1595 = vmatpush1.msra.mxu0 %v1380
        %1596 = vmatprep.subr.mxu0 0.0
        %1597 = vmatpush1.msra.mxu0 %v1379
        %1598 = vmatprep.subr.mxu0 0.0
        %1599 = vmatpush1.msra.mxu0 %v1378
        %1600 = vmatprep.subr.mxu0 0.0
        %1601 = vmatpush1.msra.mxu0 %v1377
        %1602 = vmatprep.subr.mxu0 0.0
        %1603 = vmatpush1.msra.mxu0 %v1376
        %1604 = vmatprep.subr.mxu0 0.0
        %1605 = vmatpush2.msra.mxu0 0.0
        %1606 = vmatprep.subr.mxu0 0.0
        %1607 = vmatpush2.msra.mxu0 0.0
        %1608 = vmatprep.subr.mxu0 0.0
        %1609 = vmatpush2.msra.mxu0 0.0
        %1610 = vmatprep.subr.mxu0 0.0
        %1611 = vmatpush2.msra.mxu0 0.0
        %1612 = vmatprep.subr.mxu0 0.0
        %1613 = vmatpush2.msra.mxu0 0.0
        %1614 = vmatprep.subr.mxu0 0.0
        %1615 = vmatpush2.msra.mxu0 0.0
        %1616 = vmatprep.subr.mxu0 0.0
        %1617 = vmatpush2.msra.mxu0 0.0
        %1618 = vmatprep.subr.mxu0 0.0
        %1619 = vmatpush2.msra.mxu0 0.0
        %1620 = vmatprep.subr.mxu0 0.0
        %1621 = vmatpush2.msra.mxu0 0.0
        %1622 = vmatprep.subr.mxu0 0.0
        %1623 = vmatpush2.msra.mxu0 0.0
        %1624 = vmatprep.subr.mxu0 0.0
        %1625 = vmatpush2.msra.mxu0 0.0
        %1626 = vmatprep.subr.mxu0 0.0
        %1627 = vmatpush2.msra.mxu0 0.0
        %1628 = vmatprep.subr.mxu0 0.0
        %1629 = vmatpush2.msra.mxu0 0.0
        %1630 = vmatprep.subr.mxu0 0.0
        %1631 = vmatpush2.msra.mxu0 0.0
        %1632 = vmatprep.subr.mxu0 0.0
        %1633 = vmatpush2.msra.mxu0 0.0
        %1634 = vmatprep.subr.mxu0 0.0
        %1635 = vmatpush2.msra.mxu0 0.0
        %1636 = vmatprep.mubr.f32.mxu0 0.0
        %1637 = vmatmul.mubr.f32.gmra.mxu0 %v1567
        %v1638 = vpop.f32.mrf.mxu0
        %v1639 = vadd.f32 0.0, %v1638
        %v1640 = vpop.f32.mrf.mxu0
        %1641 = vmatprep.mubr.f32.mxu0 0.0
        %1642 = vmatmul.mubr.f32.gmra.mxu0 %v1569
        %v1643 = vpop.f32.mrf.mxu0
        %v1644 = vadd.f32 0.0, %v1643
        %v1645 = vpop.f32.mrf.mxu0
        %1646 = vdwg.mxu0
        %v1647 = vadd.f32 %v1557, %v1639
        %v1648 = vadd.f32 %v1562, %v1644
        %v1650 = vlaneseq
        %v1651 = vshrl.u32 %v1650, 7
        %v1652 = vsub.s32 0, %v1651
        %v1653 = vrot.slane %v1393, %v1652
        %v1655 = vmul.f32 %v1647, %v1653
        %v1656 = vmul.f32 %v1648, %v1653
        %v1658 = vlaneseq
        %v1659 = vshrl.u32 %v1658, 7
        %v1660 = vsub.s32 0, %v1659
        %v1661 = vrot.slane %v1395, %v1660
        %v1663 = vadd.f32 %v1655, %v1661
        %v1664 = vadd.f32 %v1656, %v1661
        %v1665 = vmax.f32 %v1663, 0.0
        %v1666 = vmax.f32 %v1664, 0.0
        %s1667 = scalar_lea.vmem [#allocation8], 1152
        %v1668 = vld [vmem:[%s1667] sm:$0xff]
        %v1669 = vld [vmem:[%s1667 + $0x8] sm:$0xff]
        %v1670 = vld [vmem:[%s1667 + $0x10] sm:$0xff]
        %v1671 = vld [vmem:[%s1667 + $0x18] sm:$0xff]
        %v1672 = vld [vmem:[%s1667 + $0x20] sm:$0xff]
        %v1673 = vld [vmem:[%s1667 + $0x28] sm:$0xff]
        %v1674 = vld [vmem:[%s1667 + $0x30] sm:$0xff]
        %v1675 = vld [vmem:[%s1667 + $0x38] sm:$0xff]
        %v1676 = vld [vmem:[%s1667 + $0x40] sm:$0xff]
        %v1677 = vld [vmem:[%s1667 + $0x48] sm:$0xff]
        %v1678 = vld [vmem:[%s1667 + $0x50] sm:$0xff]
        %v1679 = vld [vmem:[%s1667 + $0x58] sm:$0xff]
        %v1680 = vld [vmem:[%s1667 + $0x60] sm:$0xff]
        %v1681 = vld [vmem:[%s1667 + $0x68] sm:$0xff]
        %v1682 = vld [vmem:[%s1667 + $0x70] sm:$0xff]
        %v1683 = vld [vmem:[%s1667 + $0x78] sm:$0xff]
        %s1684 = scalar_lea.vmem [#allocation8], 1280
        %v1685 = vld [vmem:[%s1684] sm:$0xff]
        %v1686 = vld [vmem:[%s1684 + $0x8] sm:$0xff]
        %v1687 = vld [vmem:[%s1684 + $0x10] sm:$0xff]
        %v1688 = vld [vmem:[%s1684 + $0x18] sm:$0xff]
        %v1689 = vld [vmem:[%s1684 + $0x20] sm:$0xff]
        %v1690 = vld [vmem:[%s1684 + $0x28] sm:$0xff]
        %v1691 = vld [vmem:[%s1684 + $0x30] sm:$0xff]
        %v1692 = vld [vmem:[%s1684 + $0x38] sm:$0xff]
        %v1693 = vld [vmem:[%s1684 + $0x40] sm:$0xff]
        %v1694 = vld [vmem:[%s1684 + $0x48] sm:$0xff]
        %v1695 = vld [vmem:[%s1684 + $0x50] sm:$0xff]
        %v1696 = vld [vmem:[%s1684 + $0x58] sm:$0xff]
        %v1697 = vld [vmem:[%s1684 + $0x60] sm:$0xff]
        %v1698 = vld [vmem:[%s1684 + $0x68] sm:$0xff]
        %v1699 = vld [vmem:[%s1684 + $0x70] sm:$0xff]
        %v1700 = vld [vmem:[%s1684 + $0x78] sm:$0xff]
        %s1701 = scalar_lea.vmem [#allocation8], 1408
        %v1702 = vld [vmem:[%s1701] sm:$0xff]
        %v1703 = vld [vmem:[%s1701 + $0x8] sm:$0xff]
        %v1704 = vld [vmem:[%s1701 + $0x10] sm:$0xff]
        %v1705 = vld [vmem:[%s1701 + $0x18] sm:$0xff]
        %v1706 = vld [vmem:[%s1701 + $0x20] sm:$0xff]
        %v1707 = vld [vmem:[%s1701 + $0x28] sm:$0xff]
        %v1708 = vld [vmem:[%s1701 + $0x30] sm:$0xff]
        %v1709 = vld [vmem:[%s1701 + $0x38] sm:$0xff]
        %v1710 = vld [vmem:[%s1701 + $0x40] sm:$0xff]
        %v1711 = vld [vmem:[%s1701 + $0x48] sm:$0xff]
        %v1712 = vld [vmem:[%s1701 + $0x50] sm:$0xff]
        %v1713 = vld [vmem:[%s1701 + $0x58] sm:$0xff]
        %v1714 = vld [vmem:[%s1701 + $0x60] sm:$0xff]
        %v1715 = vld [vmem:[%s1701 + $0x68] sm:$0xff]
        %v1716 = vld [vmem:[%s1701 + $0x70] sm:$0xff]
        %v1717 = vld [vmem:[%s1701 + $0x78] sm:$0xff]
        %s1718 = scalar_lea.vmem [#allocation10], 3
        %v1719 = vld [vmem:[%s1718] sm:$0x1]
        %s1720 = scalar_lea.vmem [#allocation11], 3
        %v1721 = vld [vmem:[%s1720] sm:$0x1]
        %v1724 = vrot.slane %v1665, 7
        %v1725 = vrot.slane %v1666, 7
        %v1726 = vsel %vm420, %v1724, %v1725
        %v1730 = vsel %vm420, 0.0, %v1724
        %v1731 = vsel %vm420, %v1725, 0.0
        %v1734 = vrot.slane %v1730, 1
        %v1735 = vrot.slane %v1726, 1
        %v1736 = vsel %vm430, %v1734, %v1735
        %v1737 = vrot.slane %v1731, 1
        %v1738 = vsel %vm430, %v1735, %v1737
        %1741 = vmatprep.subr.mxu0 0.0
        %1742 = vmatpush1.msra.mxu0 %v1700
        %1743 = vmatprep.subr.mxu0 0.0
        %1744 = vmatpush1.msra.mxu0 %v1699
        %1745 = vmatprep.subr.mxu0 0.0
        %1746 = vmatpush1.msra.mxu0 %v1698
        %1747 = vmatprep.subr.mxu0 0.0
        %1748 = vmatpush1.msra.mxu0 %v1697
        %1749 = vmatprep.subr.mxu0 0.0
        %1750 = vmatpush1.msra.mxu0 %v1696
        %1751 = vmatprep.subr.mxu0 0.0
        %1752 = vmatpush1.msra.mxu0 %v1695
        %1753 = vmatprep.subr.mxu0 0.0
        %1754 = vmatpush1.msra.mxu0 %v1694
        %1755 = vmatprep.subr.mxu0 0.0
        %1756 = vmatpush1.msra.mxu0 %v1693
        %1757 = vmatprep.subr.mxu0 0.0
        %1758 = vmatpush1.msra.mxu0 %v1692
        %1759 = vmatprep.subr.mxu0 0.0
        %1760 = vmatpush1.msra.mxu0 %v1691
        %1761 = vmatprep.subr.mxu0 0.0
        %1762 = vmatpush1.msra.mxu0 %v1690
        %1763 = vmatprep.subr.mxu0 0.0
        %1764 = vmatpush1.msra.mxu0 %v1689
        %1765 = vmatprep.subr.mxu0 0.0
        %1766 = vmatpush1.msra.mxu0 %v1688
        %1767 = vmatprep.subr.mxu0 0.0
        %1768 = vmatpush1.msra.mxu0 %v1687
        %1769 = vmatprep.subr.mxu0 0.0
        %1770 = vmatpush1.msra.mxu0 %v1686
        %1771 = vmatprep.subr.mxu0 0.0
        %1772 = vmatpush1.msra.mxu0 %v1685
        %1773 = vmatprep.subr.mxu0 0.0
        %1774 = vmatpush2.msra.mxu0 0.0
        %1775 = vmatprep.subr.mxu0 0.0
        %1776 = vmatpush2.msra.mxu0 0.0
        %1777 = vmatprep.subr.mxu0 0.0
        %1778 = vmatpush2.msra.mxu0 0.0
        %1779 = vmatprep.subr.mxu0 0.0
        %1780 = vmatpush2.msra.mxu0 0.0
        %1781 = vmatprep.subr.mxu0 0.0
        %1782 = vmatpush2.msra.mxu0 0.0
        %1783 = vmatprep.subr.mxu0 0.0
        %1784 = vmatpush2.msra.mxu0 0.0
        %1785 = vmatprep.subr.mxu0 0.0
        %1786 = vmatpush2.msra.mxu0 0.0
        %1787 = vmatprep.subr.mxu0 0.0
        %1788 = vmatpush2.msra.mxu0 0.0
        %1789 = vmatprep.subr.mxu0 0.0
        %1790 = vmatpush2.msra.mxu0 0.0
        %1791 = vmatprep.subr.mxu0 0.0
        %1792 = vmatpush2.msra.mxu0 0.0
        %1793 = vmatprep.subr.mxu0 0.0
        %1794 = vmatpush2.msra.mxu0 0.0
        %1795 = vmatprep.subr.mxu0 0.0
        %1796 = vmatpush2.msra.mxu0 0.0
        %1797 = vmatprep.subr.mxu0 0.0
        %1798 = vmatpush2.msra.mxu0 0.0
        %1799 = vmatprep.subr.mxu0 0.0
        %1800 = vmatpush2.msra.mxu0 0.0
        %1801 = vmatprep.subr.mxu0 0.0
        %1802 = vmatpush2.msra.mxu0 0.0
        %1803 = vmatprep.subr.mxu0 0.0
        %1804 = vmatpush2.msra.mxu0 0.0
        %1805 = vmatprep.mubr.f32.mxu0 0.0
        %1806 = vmatmul.mubr.f32.gmra.mxu0 %v1736
        %v1807 = vpop.f32.mrf.mxu0
        %v1808 = vadd.f32 0.0, %v1807
        %v1809 = vpop.f32.mrf.mxu0
        %1810 = vmatprep.mubr.f32.mxu0 0.0
        %1811 = vmatmul.mubr.f32.gmra.mxu0 %v1738
        %v1812 = vpop.f32.mrf.mxu0
        %v1813 = vadd.f32 0.0, %v1812
        %v1814 = vpop.f32.mrf.mxu0
        %1815 = vdwg.mxu0
        %1816 = vmatprep.subr.mxu0 0.0
        %1817 = vmatpush1.msra.mxu0 %v1683
        %1818 = vmatprep.subr.mxu0 0.0
        %1819 = vmatpush1.msra.mxu0 %v1682
        %1820 = vmatprep.subr.mxu0 0.0
        %1821 = vmatpush1.msra.mxu0 %v1681
        %1822 = vmatprep.subr.mxu0 0.0
        %1823 = vmatpush1.msra.mxu0 %v1680
        %1824 = vmatprep.subr.mxu0 0.0
        %1825 = vmatpush1.msra.mxu0 %v1679
        %1826 = vmatprep.subr.mxu0 0.0
        %1827 = vmatpush1.msra.mxu0 %v1678
        %1828 = vmatprep.subr.mxu0 0.0
        %1829 = vmatpush1.msra.mxu0 %v1677
        %1830 = vmatprep.subr.mxu0 0.0
        %1831 = vmatpush1.msra.mxu0 %v1676
        %1832 = vmatprep.subr.mxu0 0.0
        %1833 = vmatpush1.msra.mxu0 %v1675
        %1834 = vmatprep.subr.mxu0 0.0
        %1835 = vmatpush1.msra.mxu0 %v1674
        %1836 = vmatprep.subr.mxu0 0.0
        %1837 = vmatpush1.msra.mxu0 %v1673
        %1838 = vmatprep.subr.mxu0 0.0
        %1839 = vmatpush1.msra.mxu0 %v1672
        %1840 = vmatprep.subr.mxu0 0.0
        %1841 = vmatpush1.msra.mxu0 %v1671
        %1842 = vmatprep.subr.mxu0 0.0
        %1843 = vmatpush1.msra.mxu0 %v1670
        %1844 = vmatprep.subr.mxu0 0.0
        %1845 = vmatpush1.msra.mxu0 %v1669
        %1846 = vmatprep.subr.mxu0 0.0
        %1847 = vmatpush1.msra.mxu0 %v1668
        %1848 = vmatprep.subr.mxu0 0.0
        %1849 = vmatpush2.msra.mxu0 0.0
        %1850 = vmatprep.subr.mxu0 0.0
        %1851 = vmatpush2.msra.mxu0 0.0
        %1852 = vmatprep.subr.mxu0 0.0
        %1853 = vmatpush2.msra.mxu0 0.0
        %1854 = vmatprep.subr.mxu0 0.0
        %1855 = vmatpush2.msra.mxu0 0.0
        %1856 = vmatprep.subr.mxu0 0.0
        %1857 = vmatpush2.msra.mxu0 0.0
        %1858 = vmatprep.subr.mxu0 0.0
        %1859 = vmatpush2.msra.mxu0 0.0
        %1860 = vmatprep.subr.mxu0 0.0
        %1861 = vmatpush2.msra.mxu0 0.0
        %1862 = vmatprep.subr.mxu0 0.0
        %1863 = vmatpush2.msra.mxu0 0.0
        %1864 = vmatprep.subr.mxu0 0.0
        %1865 = vmatpush2.msra.mxu0 0.0
        %1866 = vmatprep.subr.mxu0 0.0
        %1867 = vmatpush2.msra.mxu0 0.0
        %1868 = vmatprep.subr.mxu0 0.0
        %1869 = vmatpush2.msra.mxu0 0.0
        %1870 = vmatprep.subr.mxu0 0.0
        %1871 = vmatpush2.msra.mxu0 0.0
        %1872 = vmatprep.subr.mxu0 0.0
        %1873 = vmatpush2.msra.mxu0 0.0
        %1874 = vmatprep.subr.mxu0 0.0
        %1875 = vmatpush2.msra.mxu0 0.0
        %1876 = vmatprep.subr.mxu0 0.0
        %1877 = vmatpush2.msra.mxu0 0.0
        %1878 = vmatprep.subr.mxu0 0.0
        %1879 = vmatpush2.msra.mxu0 0.0
        %1880 = vmatprep.mubr.f32.mxu0 0.0
        %1881 = vmatmul.mubr.f32.gmra.mxu0 %v1730
        %v1882 = vpop.f32.mrf.mxu0
        %v1883 = vadd.f32 %v1808, %v1882
        %v1884 = vpop.f32.mrf.mxu0
        %1885 = vmatprep.mubr.f32.mxu0 0.0
        %1886 = vmatmul.mubr.f32.gmra.mxu0 %v1726
        %v1887 = vpop.f32.mrf.mxu0
        %v1888 = vadd.f32 %v1813, %v1887
        %v1889 = vpop.f32.mrf.mxu0
        %1890 = vdwg.mxu0
        %v1891 = vrot.slane %v1730, 2
        %v1892 = vrot.slane %v1726, 2
        %v1893 = vsel %vm595, %v1891, %v1892
        %v1894 = vrot.slane %v1731, 2
        %v1895 = vsel %vm595, %v1892, %v1894
        %1898 = vmatprep.subr.mxu0 0.0
        %1899 = vmatpush1.msra.mxu0 %v1717
        %1900 = vmatprep.subr.mxu0 0.0
        %1901 = vmatpush1.msra.mxu0 %v1716
        %1902 = vmatprep.subr.mxu0 0.0
        %1903 = vmatpush1.msra.mxu0 %v1715
        %1904 = vmatprep.subr.mxu0 0.0
        %1905 = vmatpush1.msra.mxu0 %v1714
        %1906 = vmatprep.subr.mxu0 0.0
        %1907 = vmatpush1.msra.mxu0 %v1713
        %1908 = vmatprep.subr.mxu0 0.0
        %1909 = vmatpush1.msra.mxu0 %v1712
        %1910 = vmatprep.subr.mxu0 0.0
        %1911 = vmatpush1.msra.mxu0 %v1711
        %1912 = vmatprep.subr.mxu0 0.0
        %1913 = vmatpush1.msra.mxu0 %v1710
        %1914 = vmatprep.subr.mxu0 0.0
        %1915 = vmatpush1.msra.mxu0 %v1709
        %1916 = vmatprep.subr.mxu0 0.0
        %1917 = vmatpush1.msra.mxu0 %v1708
        %1918 = vmatprep.subr.mxu0 0.0
        %1919 = vmatpush1.msra.mxu0 %v1707
        %1920 = vmatprep.subr.mxu0 0.0
        %1921 = vmatpush1.msra.mxu0 %v1706
        %1922 = vmatprep.subr.mxu0 0.0
        %1923 = vmatpush1.msra.mxu0 %v1705
        %1924 = vmatprep.subr.mxu0 0.0
        %1925 = vmatpush1.msra.mxu0 %v1704
        %1926 = vmatprep.subr.mxu0 0.0
        %1927 = vmatpush1.msra.mxu0 %v1703
        %1928 = vmatprep.subr.mxu0 0.0
        %1929 = vmatpush1.msra.mxu0 %v1702
        %1930 = vmatprep.subr.mxu0 0.0
        %1931 = vmatpush2.msra.mxu0 0.0
        %1932 = vmatprep.subr.mxu0 0.0
        %1933 = vmatpush2.msra.mxu0 0.0
        %1934 = vmatprep.subr.mxu0 0.0
        %1935 = vmatpush2.msra.mxu0 0.0
        %1936 = vmatprep.subr.mxu0 0.0
        %1937 = vmatpush2.msra.mxu0 0.0
        %1938 = vmatprep.subr.mxu0 0.0
        %1939 = vmatpush2.msra.mxu0 0.0
        %1940 = vmatprep.subr.mxu0 0.0
        %1941 = vmatpush2.msra.mxu0 0.0
        %1942 = vmatprep.subr.mxu0 0.0
        %1943 = vmatpush2.msra.mxu0 0.0
        %1944 = vmatprep.subr.mxu0 0.0
        %1945 = vmatpush2.msra.mxu0 0.0
        %1946 = vmatprep.subr.mxu0 0.0
        %1947 = vmatpush2.msra.mxu0 0.0
        %1948 = vmatprep.subr.mxu0 0.0
        %1949 = vmatpush2.msra.mxu0 0.0
        %1950 = vmatprep.subr.mxu0 0.0
        %1951 = vmatpush2.msra.mxu0 0.0
        %1952 = vmatprep.subr.mxu0 0.0
        %1953 = vmatpush2.msra.mxu0 0.0
        %1954 = vmatprep.subr.mxu0 0.0
        %1955 = vmatpush2.msra.mxu0 0.0
        %1956 = vmatprep.subr.mxu0 0.0
        %1957 = vmatpush2.msra.mxu0 0.0
        %1958 = vmatprep.subr.mxu0 0.0
        %1959 = vmatpush2.msra.mxu0 0.0
        %1960 = vmatprep.subr.mxu0 0.0
        %1961 = vmatpush2.msra.mxu0 0.0
        %1962 = vmatprep.mubr.f32.mxu0 0.0
        %1963 = vmatmul.mubr.f32.gmra.mxu0 %v1893
        %v1964 = vpop.f32.mrf.mxu0
        %v1965 = vadd.f32 0.0, %v1964
        %v1966 = vpop.f32.mrf.mxu0
        %1967 = vmatprep.mubr.f32.mxu0 0.0
        %1968 = vmatmul.mubr.f32.gmra.mxu0 %v1895
        %v1969 = vpop.f32.mrf.mxu0
        %v1970 = vadd.f32 0.0, %v1969
        %v1971 = vpop.f32.mrf.mxu0
        %1972 = vdwg.mxu0
        %v1973 = vadd.f32 %v1883, %v1965
        %v1974 = vadd.f32 %v1888, %v1970
        %v1976 = vlaneseq
        %v1977 = vshrl.u32 %v1976, 7
        %v1978 = vsub.s32 0, %v1977
        %v1979 = vrot.slane %v1719, %v1978
        %v1981 = vmul.f32 %v1973, %v1979
        %v1982 = vmul.f32 %v1974, %v1979
        %v1984 = vlaneseq
        %v1985 = vshrl.u32 %v1984, 7
        %v1986 = vsub.s32 0, %v1985
        %v1987 = vrot.slane %v1721, %v1986
        %v1989 = vadd.f32 %v1981, %v1987
        %v1990 = vadd.f32 %v1982, %v1987
        %v1991 = vadd.f32 %v1989, %v1339
        %v1992 = vadd.f32 %v1990, %v1340
        %v1993 = vmax.f32 %v1991, 0.0
        %v1994 = vmax.f32 %v1992, 0.0
        %v1995 = vadd.f32 %v1993, %v688
        %v1996 = vadd.f32 %v1994, %v689
        %v1997 = vmax.f32 %v1995, 0.0
        %v1998 = vmax.f32 %v1996, 0.0
        %s1999 = scalar_lea.vmem [#allocation8], 1536
        %v2000 = vld [vmem:[%s1999] sm:$0xff]
        %v2001 = vld [vmem:[%s1999 + $0x8] sm:$0xff]
        %v2002 = vld [vmem:[%s1999 + $0x10] sm:$0xff]
        %v2003 = vld [vmem:[%s1999 + $0x18] sm:$0xff]
        %v2004 = vld [vmem:[%s1999 + $0x20] sm:$0xff]
        %v2005 = vld [vmem:[%s1999 + $0x28] sm:$0xff]
        %v2006 = vld [vmem:[%s1999 + $0x30] sm:$0xff]
        %v2007 = vld [vmem:[%s1999 + $0x38] sm:$0xff]
        %v2008 = vld [vmem:[%s1999 + $0x40] sm:$0xff]
        %v2009 = vld [vmem:[%s1999 + $0x48] sm:$0xff]
        %v2010 = vld [vmem:[%s1999 + $0x50] sm:$0xff]
        %v2011 = vld [vmem:[%s1999 + $0x58] sm:$0xff]
        %v2012 = vld [vmem:[%s1999 + $0x60] sm:$0xff]
        %v2013 = vld [vmem:[%s1999 + $0x68] sm:$0xff]
        %v2014 = vld [vmem:[%s1999 + $0x70] sm:$0xff]
        %v2015 = vld [vmem:[%s1999 + $0x78] sm:$0xff]
        %s2016 = scalar_lea.vmem [#allocation8], 1664
        %v2017 = vld [vmem:[%s2016] sm:$0xff]
        %v2018 = vld [vmem:[%s2016 + $0x8] sm:$0xff]
        %v2019 = vld [vmem:[%s2016 + $0x10] sm:$0xff]
        %v2020 = vld [vmem:[%s2016 + $0x18] sm:$0xff]
        %v2021 = vld [vmem:[%s2016 + $0x20] sm:$0xff]
        %v2022 = vld [vmem:[%s2016 + $0x28] sm:$0xff]
        %v2023 = vld [vmem:[%s2016 + $0x30] sm:$0xff]
        %v2024 = vld [vmem:[%s2016 + $0x38] sm:$0xff]
        %v2025 = vld [vmem:[%s2016 + $0x40] sm:$0xff]
        %v2026 = vld [vmem:[%s2016 + $0x48] sm:$0xff]
        %v2027 = vld [vmem:[%s2016 + $0x50] sm:$0xff]
        %v2028 = vld [vmem:[%s2016 + $0x58] sm:$0xff]
        %v2029 = vld [vmem:[%s2016 + $0x60] sm:$0xff]
        %v2030 = vld [vmem:[%s2016 + $0x68] sm:$0xff]
        %v2031 = vld [vmem:[%s2016 + $0x70] sm:$0xff]
        %v2032 = vld [vmem:[%s2016 + $0x78] sm:$0xff]
        %s2033 = scalar_lea.vmem [#allocation8], 1792
        %v2034 = vld [vmem:[%s2033] sm:$0xff]
        %v2035 = vld [vmem:[%s2033 + $0x8] sm:$0xff]
        %v2036 = vld [vmem:[%s2033 + $0x10] sm:$0xff]
        %v2037 = vld [vmem:[%s2033 + $0x18] sm:$0xff]
        %v2038 = vld [vmem:[%s2033 + $0x20] sm:$0xff]
        %v2039 = vld [vmem:[%s2033 + $0x28] sm:$0xff]
        %v2040 = vld [vmem:[%s2033 + $0x30] sm:$0xff]
        %v2041 = vld [vmem:[%s2033 + $0x38] sm:$0xff]
        %v2042 = vld [vmem:[%s2033 + $0x40] sm:$0xff]
        %v2043 = vld [vmem:[%s2033 + $0x48] sm:$0xff]
        %v2044 = vld [vmem:[%s2033 + $0x50] sm:$0xff]
        %v2045 = vld [vmem:[%s2033 + $0x58] sm:$0xff]
        %v2046 = vld [vmem:[%s2033 + $0x60] sm:$0xff]
        %v2047 = vld [vmem:[%s2033 + $0x68] sm:$0xff]
        %v2048 = vld [vmem:[%s2033 + $0x70] sm:$0xff]
        %v2049 = vld [vmem:[%s2033 + $0x78] sm:$0xff]
        %s2050 = scalar_lea.vmem [#allocation10], 4
        %v2051 = vld [vmem:[%s2050] sm:$0x1]
        %s2052 = scalar_lea.vmem [#allocation11], 4
        %v2053 = vld [vmem:[%s2052] sm:$0x1]
        %v2056 = vrot.slane %v1997, 7
        %v2057 = vrot.slane %v1998, 7
        %v2058 = vsel %vm420, %v2056, %v2057
        %v2062 = vsel %vm420, 0.0, %v2056
        %v2063 = vsel %vm420, %v2057, 0.0
        %v2066 = vrot.slane %v2062, 1
        %v2067 = vrot.slane %v2058, 1
        %v2068 = vsel %vm430, %v2066, %v2067
        %v2069 = vrot.slane %v2063, 1
        %v2070 = vsel %vm430, %v2067, %v2069
        %2073 = vmatprep.subr.mxu0 0.0
        %2074 = vmatpush1.msra.mxu0 %v2032
        %2075 = vmatprep.subr.mxu0 0.0
        %2076 = vmatpush1.msra.mxu0 %v2031
        %2077 = vmatprep.subr.mxu0 0.0
        %2078 = vmatpush1.msra.mxu0 %v2030
        %2079 = vmatprep.subr.mxu0 0.0
        %2080 = vmatpush1.msra.mxu0 %v2029
        %2081 = vmatprep.subr.mxu0 0.0
        %2082 = vmatpush1.msra.mxu0 %v2028
        %2083 = vmatprep.subr.mxu0 0.0
        %2084 = vmatpush1.msra.mxu0 %v2027
        %2085 = vmatprep.subr.mxu0 0.0
        %2086 = vmatpush1.msra.mxu0 %v2026
        %2087 = vmatprep.subr.mxu0 0.0
        %2088 = vmatpush1.msra.mxu0 %v2025
        %2089 = vmatprep.subr.mxu0 0.0
        %2090 = vmatpush1.msra.mxu0 %v2024
        %2091 = vmatprep.subr.mxu0 0.0
        %2092 = vmatpush1.msra.mxu0 %v2023
        %2093 = vmatprep.subr.mxu0 0.0
        %2094 = vmatpush1.msra.mxu0 %v2022
        %2095 = vmatprep.subr.mxu0 0.0
        %2096 = vmatpush1.msra.mxu0 %v2021
        %2097 = vmatprep.subr.mxu0 0.0
        %2098 = vmatpush1.msra.mxu0 %v2020
        %2099 = vmatprep.subr.mxu0 0.0
        %2100 = vmatpush1.msra.mxu0 %v2019
        %2101 = vmatprep.subr.mxu0 0.0
        %2102 = vmatpush1.msra.mxu0 %v2018
        %2103 = vmatprep.subr.mxu0 0.0
        %2104 = vmatpush1.msra.mxu0 %v2017
        %2105 = vmatprep.subr.mxu0 0.0
        %2106 = vmatpush2.msra.mxu0 0.0
        %2107 = vmatprep.subr.mxu0 0.0
        %2108 = vmatpush2.msra.mxu0 0.0
        %2109 = vmatprep.subr.mxu0 0.0
        %2110 = vmatpush2.msra.mxu0 0.0
        %2111 = vmatprep.subr.mxu0 0.0
        %2112 = vmatpush2.msra.mxu0 0.0
        %2113 = vmatprep.subr.mxu0 0.0
        %2114 = vmatpush2.msra.mxu0 0.0
        %2115 = vmatprep.subr.mxu0 0.0
        %2116 = vmatpush2.msra.mxu0 0.0
        %2117 = vmatprep.subr.mxu0 0.0
        %2118 = vmatpush2.msra.mxu0 0.0
        %2119 = vmatprep.subr.mxu0 0.0
        %2120 = vmatpush2.msra.mxu0 0.0
        %2121 = vmatprep.subr.mxu0 0.0
        %2122 = vmatpush2.msra.mxu0 0.0
        %2123 = vmatprep.subr.mxu0 0.0
        %2124 = vmatpush2.msra.mxu0 0.0
        %2125 = vmatprep.subr.mxu0 0.0
        %2126 = vmatpush2.msra.mxu0 0.0
        %2127 = vmatprep.subr.mxu0 0.0
        %2128 = vmatpush2.msra.mxu0 0.0
        %2129 = vmatprep.subr.mxu0 0.0
        %2130 = vmatpush2.msra.mxu0 0.0
        %2131 = vmatprep.subr.mxu0 0.0
        %2132 = vmatpush2.msra.mxu0 0.0
        %2133 = vmatprep.subr.mxu0 0.0
        %2134 = vmatpush2.msra.mxu0 0.0
        %2135 = vmatprep.subr.mxu0 0.0
        %2136 = vmatpush2.msra.mxu0 0.0
        %2137 = vmatprep.mubr.f32.mxu0 0.0
        %2138 = vmatmul.mubr.f32.gmra.mxu0 %v2068
        %v2139 = vpop.f32.mrf.mxu0
        %v2140 = vadd.f32 0.0, %v2139
        %v2141 = vpop.f32.mrf.mxu0
        %2142 = vmatprep.mubr.f32.mxu0 0.0
        %2143 = vmatmul.mubr.f32.gmra.mxu0 %v2070
        %v2144 = vpop.f32.mrf.mxu0
        %v2145 = vadd.f32 0.0, %v2144
        %v2146 = vpop.f32.mrf.mxu0
        %2147 = vdwg.mxu0
        %2148 = vmatprep.subr.mxu0 0.0
        %2149 = vmatpush1.msra.mxu0 %v2015
        %2150 = vmatprep.subr.mxu0 0.0
        %2151 = vmatpush1.msra.mxu0 %v2014
        %2152 = vmatprep.subr.mxu0 0.0
        %2153 = vmatpush1.msra.mxu0 %v2013
        %2154 = vmatprep.subr.mxu0 0.0
        %2155 = vmatpush1.msra.mxu0 %v2012
        %2156 = vmatprep.subr.mxu0 0.0
        %2157 = vmatpush1.msra.mxu0 %v2011
        %2158 = vmatprep.subr.mxu0 0.0
        %2159 = vmatpush1.msra.mxu0 %v2010
        %2160 = vmatprep.subr.mxu0 0.0
        %2161 = vmatpush1.msra.mxu0 %v2009
        %2162 = vmatprep.subr.mxu0 0.0
        %2163 = vmatpush1.msra.mxu0 %v2008
        %2164 = vmatprep.subr.mxu0 0.0
        %2165 = vmatpush1.msra.mxu0 %v2007
        %2166 = vmatprep.subr.mxu0 0.0
        %2167 = vmatpush1.msra.mxu0 %v2006
        %2168 = vmatprep.subr.mxu0 0.0
        %2169 = vmatpush1.msra.mxu0 %v2005
        %2170 = vmatprep.subr.mxu0 0.0
        %2171 = vmatpush1.msra.mxu0 %v2004
        %2172 = vmatprep.subr.mxu0 0.0
        %2173 = vmatpush1.msra.mxu0 %v2003
        %2174 = vmatprep.subr.mxu0 0.0
        %2175 = vmatpush1.msra.mxu0 %v2002
        %2176 = vmatprep.subr.mxu0 0.0
        %2177 = vmatpush1.msra.mxu0 %v2001
        %2178 = vmatprep.subr.mxu0 0.0
        %2179 = vmatpush1.msra.mxu0 %v2000
        %2180 = vmatprep.subr.mxu0 0.0
        %2181 = vmatpush2.msra.mxu0 0.0
        %2182 = vmatprep.subr.mxu0 0.0
        %2183 = vmatpush2.msra.mxu0 0.0
        %2184 = vmatprep.subr.mxu0 0.0
        %2185 = vmatpush2.msra.mxu0 0.0
        %2186 = vmatprep.subr.mxu0 0.0
        %2187 = vmatpush2.msra.mxu0 0.0
        %2188 = vmatprep.subr.mxu0 0.0
        %2189 = vmatpush2.msra.mxu0 0.0
        %2190 = vmatprep.subr.mxu0 0.0
        %2191 = vmatpush2.msra.mxu0 0.0
        %2192 = vmatprep.subr.mxu0 0.0
        %2193 = vmatpush2.msra.mxu0 0.0
        %2194 = vmatprep.subr.mxu0 0.0
        %2195 = vmatpush2.msra.mxu0 0.0
        %2196 = vmatprep.subr.mxu0 0.0
        %2197 = vmatpush2.msra.mxu0 0.0
        %2198 = vmatprep.subr.mxu0 0.0
        %2199 = vmatpush2.msra.mxu0 0.0
        %2200 = vmatprep.subr.mxu0 0.0
        %2201 = vmatpush2.msra.mxu0 0.0
        %2202 = vmatprep.subr.mxu0 0.0
        %2203 = vmatpush2.msra.mxu0 0.0
        %2204 = vmatprep.subr.mxu0 0.0
        %2205 = vmatpush2.msra.mxu0 0.0
        %2206 = vmatprep.subr.mxu0 0.0
        %2207 = vmatpush2.msra.mxu0 0.0
        %2208 = vmatprep.subr.mxu0 0.0
        %2209 = vmatpush2.msra.mxu0 0.0
        %2210 = vmatprep.subr.mxu0 0.0
        %2211 = vmatpush2.msra.mxu0 0.0
        %2212 = vmatprep.mubr.f32.mxu0 0.0
        %2213 = vmatmul.mubr.f32.gmra.mxu0 %v2062
        %v2214 = vpop.f32.mrf.mxu0
        %v2215 = vadd.f32 %v2140, %v2214
        %v2216 = vpop.f32.mrf.mxu0
        %2217 = vmatprep.mubr.f32.mxu0 0.0
        %2218 = vmatmul.mubr.f32.gmra.mxu0 %v2058
        %v2219 = vpop.f32.mrf.mxu0
        %v2220 = vadd.f32 %v2145, %v2219
        %v2221 = vpop.f32.mrf.mxu0
        %2222 = vdwg.mxu0
        %v2223 = vrot.slane %v2062, 2
        %v2224 = vrot.slane %v2058, 2
        %v2225 = vsel %vm595, %v2223, %v2224
        %v2226 = vrot.slane %v2063, 2
        %v2227 = vsel %vm595, %v2224, %v2226
        %2230 = vmatprep.subr.mxu0 0.0
        %2231 = vmatpush1.msra.mxu0 %v2049
        %2232 = vmatprep.subr.mxu0 0.0
        %2233 = vmatpush1.msra.mxu0 %v2048
        %2234 = vmatprep.subr.mxu0 0.0
        %2235 = vmatpush1.msra.mxu0 %v2047
        %2236 = vmatprep.subr.mxu0 0.0
        %2237 = vmatpush1.msra.mxu0 %v2046
        %2238 = vmatprep.subr.mxu0 0.0
        %2239 = vmatpush1.msra.mxu0 %v2045
        %2240 = vmatprep.subr.mxu0 0.0
        %2241 = vmatpush1.msra.mxu0 %v2044
        %2242 = vmatprep.subr.mxu0 0.0
        %2243 = vmatpush1.msra.mxu0 %v2043
        %2244 = vmatprep.subr.mxu0 0.0
        %2245 = vmatpush1.msra.mxu0 %v2042
        %2246 = vmatprep.subr.mxu0 0.0
        %2247 = vmatpush1.msra.mxu0 %v2041
        %2248 = vmatprep.subr.mxu0 0.0
        %2249 = vmatpush1.msra.mxu0 %v2040
        %2250 = vmatprep.subr.mxu0 0.0
        %2251 = vmatpush1.msra.mxu0 %v2039
        %2252 = vmatprep.subr.mxu0 0.0
        %2253 = vmatpush1.msra.mxu0 %v2038
        %2254 = vmatprep.subr.mxu0 0.0
        %2255 = vmatpush1.msra.mxu0 %v2037
        %2256 = vmatprep.subr.mxu0 0.0
        %2257 = vmatpush1.msra.mxu0 %v2036
        %2258 = vmatprep.subr.mxu0 0.0
        %2259 = vmatpush1.msra.mxu0 %v2035
        %2260 = vmatprep.subr.mxu0 0.0
        %2261 = vmatpush1.msra.mxu0 %v2034
        %2262 = vmatprep.subr.mxu0 0.0
        %2263 = vmatpush2.msra.mxu0 0.0
        %2264 = vmatprep.subr.mxu0 0.0
        %2265 = vmatpush2.msra.mxu0 0.0
        %2266 = vmatprep.subr.mxu0 0.0
        %2267 = vmatpush2.msra.mxu0 0.0
        %2268 = vmatprep.subr.mxu0 0.0
        %2269 = vmatpush2.msra.mxu0 0.0
        %2270 = vmatprep.subr.mxu0 0.0
        %2271 = vmatpush2.msra.mxu0 0.0
        %2272 = vmatprep.subr.mxu0 0.0
        %2273 = vmatpush2.msra.mxu0 0.0
        %2274 = vmatprep.subr.mxu0 0.0
        %2275 = vmatpush2.msra.mxu0 0.0
        %2276 = vmatprep.subr.mxu0 0.0
        %2277 = vmatpush2.msra.mxu0 0.0
        %2278 = vmatprep.subr.mxu0 0.0
        %2279 = vmatpush2.msra.mxu0 0.0
        %2280 = vmatprep.subr.mxu0 0.0
        %2281 = vmatpush2.msra.mxu0 0.0
        %2282 = vmatprep.subr.mxu0 0.0
        %2283 = vmatpush2.msra.mxu0 0.0
        %2284 = vmatprep.subr.mxu0 0.0
        %2285 = vmatpush2.msra.mxu0 0.0
        %2286 = vmatprep.subr.mxu0 0.0
        %2287 = vmatpush2.msra.mxu0 0.0
        %2288 = vmatprep.subr.mxu0 0.0
        %2289 = vmatpush2.msra.mxu0 0.0
        %2290 = vmatprep.subr.mxu0 0.0
        %2291 = vmatpush2.msra.mxu0 0.0
        %2292 = vmatprep.subr.mxu0 0.0
        %2293 = vmatpush2.msra.mxu0 0.0
        %2294 = vmatprep.mubr.f32.mxu0 0.0
        %2295 = vmatmul.mubr.f32.gmra.mxu0 %v2225
        %v2296 = vpop.f32.mrf.mxu0
        %v2297 = vadd.f32 0.0, %v2296
        %v2298 = vpop.f32.mrf.mxu0
        %2299 = vmatprep.mubr.f32.mxu0 0.0
        %2300 = vmatmul.mubr.f32.gmra.mxu0 %v2227
        %v2301 = vpop.f32.mrf.mxu0
        %v2302 = vadd.f32 0.0, %v2301
        %v2303 = vpop.f32.mrf.mxu0
        %2304 = vdwg.mxu0
        %v2305 = vadd.f32 %v2215, %v2297
        %v2306 = vadd.f32 %v2220, %v2302
        %v2308 = vlaneseq
        %v2309 = vshrl.u32 %v2308, 7
        %v2310 = vsub.s32 0, %v2309
        %v2311 = vrot.slane %v2051, %v2310
        %v2313 = vmul.f32 %v2305, %v2311
        %v2314 = vmul.f32 %v2306, %v2311
        %v2316 = vlaneseq
        %v2317 = vshrl.u32 %v2316, 7
        %v2318 = vsub.s32 0, %v2317
        %v2319 = vrot.slane %v2053, %v2318
        %v2321 = vadd.f32 %v2313, %v2319
        %v2322 = vadd.f32 %v2314, %v2319
        %v2323 = vmax.f32 %v2321, 0.0
        %v2324 = vmax.f32 %v2322, 0.0
        %s2325 = scalar_lea.vmem [#allocation8], 1920
        %v2326 = vld [vmem:[%s2325] sm:$0xff]
        %v2327 = vld [vmem:[%s2325 + $0x8] sm:$0xff]
        %v2328 = vld [vmem:[%s2325 + $0x10] sm:$0xff]
        %v2329 = vld [vmem:[%s2325 + $0x18] sm:$0xff]
        %v2330 = vld [vmem:[%s2325 + $0x20] sm:$0xff]
        %v2331 = vld [vmem:[%s2325 + $0x28] sm:$0xff]
        %v2332 = vld [vmem:[%s2325 + $0x30] sm:$0xff]
        %v2333 = vld [vmem:[%s2325 + $0x38] sm:$0xff]
        %v2334 = vld [vmem:[%s2325 + $0x40] sm:$0xff]
        %v2335 = vld [vmem:[%s2325 + $0x48] sm:$0xff]
        %v2336 = vld [vmem:[%s2325 + $0x50] sm:$0xff]
        %v2337 = vld [vmem:[%s2325 + $0x58] sm:$0xff]
        %v2338 = vld [vmem:[%s2325 + $0x60] sm:$0xff]
        %v2339 = vld [vmem:[%s2325 + $0x68] sm:$0xff]
        %v2340 = vld [vmem:[%s2325 + $0x70] sm:$0xff]
        %v2341 = vld [vmem:[%s2325 + $0x78] sm:$0xff]
        %s2342 = scalar_lea.vmem [#allocation8], 2048
        %v2343 = vld [vmem:[%s2342] sm:$0xff]
        %v2344 = vld [vmem:[%s2342 + $0x8] sm:$0xff]
        %v2345 = vld [vmem:[%s2342 + $0x10] sm:$0xff]
        %v2346 = vld [vmem:[%s2342 + $0x18] sm:$0xff]
        %v2347 = vld [vmem:[%s2342 + $0x20] sm:$0xff]
        %v2348 = vld [vmem:[%s2342 + $0x28] sm:$0xff]
        %v2349 = vld [vmem:[%s2342 + $0x30] sm:$0xff]
        %v2350 = vld [vmem:[%s2342 + $0x38] sm:$0xff]
        %v2351 = vld [vmem:[%s2342 + $0x40] sm:$0xff]
        %v2352 = vld [vmem:[%s2342 + $0x48] sm:$0xff]
        %v2353 = vld [vmem:[%s2342 + $0x50] sm:$0xff]
        %v2354 = vld [vmem:[%s2342 + $0x58] sm:$0xff]
        %v2355 = vld [vmem:[%s2342 + $0x60] sm:$0xff]
        %v2356 = vld [vmem:[%s2342 + $0x68] sm:$0xff]
        %v2357 = vld [vmem:[%s2342 + $0x70] sm:$0xff]
        %v2358 = vld [vmem:[%s2342 + $0x78] sm:$0xff]
        %s2359 = scalar_lea.vmem [#allocation8], 2176
        %v2360 = vld [vmem:[%s2359] sm:$0xff]
        %v2361 = vld [vmem:[%s2359 + $0x8] sm:$0xff]
        %v2362 = vld [vmem:[%s2359 + $0x10] sm:$0xff]
        %v2363 = vld [vmem:[%s2359 + $0x18] sm:$0xff]
        %v2364 = vld [vmem:[%s2359 + $0x20] sm:$0xff]
        %v2365 = vld [vmem:[%s2359 + $0x28] sm:$0xff]
        %v2366 = vld [vmem:[%s2359 + $0x30] sm:$0xff]
        %v2367 = vld [vmem:[%s2359 + $0x38] sm:$0xff]
        %v2368 = vld [vmem:[%s2359 + $0x40] sm:$0xff]
        %v2369 = vld [vmem:[%s2359 + $0x48] sm:$0xff]
        %v2370 = vld [vmem:[%s2359 + $0x50] sm:$0xff]
        %v2371 = vld [vmem:[%s2359 + $0x58] sm:$0xff]
        %v2372 = vld [vmem:[%s2359 + $0x60] sm:$0xff]
        %v2373 = vld [vmem:[%s2359 + $0x68] sm:$0xff]
        %v2374 = vld [vmem:[%s2359 + $0x70] sm:$0xff]
        %v2375 = vld [vmem:[%s2359 + $0x78] sm:$0xff]
        %s2376 = scalar_lea.vmem [#allocation10], 5
        %v2377 = vld [vmem:[%s2376] sm:$0x1]
        %s2378 = scalar_lea.vmem [#allocation11], 5
        %v2379 = vld [vmem:[%s2378] sm:$0x1]
        %v2382 = vrot.slane %v2323, 7
        %v2383 = vrot.slane %v2324, 7
        %v2384 = vsel %vm420, %v2382, %v2383
        %v2388 = vsel %vm420, 0.0, %v2382
        %v2389 = vsel %vm420, %v2383, 0.0
        %v2392 = vrot.slane %v2388, 1
        %v2393 = vrot.slane %v2384, 1
        %v2394 = vsel %vm430, %v2392, %v2393
        %v2395 = vrot.slane %v2389, 1
        %v2396 = vsel %vm430, %v2393, %v2395
        %2399 = vmatprep.subr.mxu0 0.0
        %2400 = vmatpush1.msra.mxu0 %v2358
        %2401 = vmatprep.subr.mxu0 0.0
        %2402 = vmatpush1.msra.mxu0 %v2357
        %2403 = vmatprep.subr.mxu0 0.0
        %2404 = vmatpush1.msra.mxu0 %v2356
        %2405 = vmatprep.subr.mxu0 0.0
        %2406 = vmatpush1.msra.mxu0 %v2355
        %2407 = vmatprep.subr.mxu0 0.0
        %2408 = vmatpush1.msra.mxu0 %v2354
        %2409 = vmatprep.subr.mxu0 0.0
        %2410 = vmatpush1.msra.mxu0 %v2353
        %2411 = vmatprep.subr.mxu0 0.0
        %2412 = vmatpush1.msra.mxu0 %v2352
        %2413 = vmatprep.subr.mxu0 0.0
        %2414 = vmatpush1.msra.mxu0 %v2351
        %2415 = vmatprep.subr.mxu0 0.0
        %2416 = vmatpush1.msra.mxu0 %v2350
        %2417 = vmatprep.subr.mxu0 0.0
        %2418 = vmatpush1.msra.mxu0 %v2349
        %2419 = vmatprep.subr.mxu0 0.0
        %2420 = vmatpush1.msra.mxu0 %v2348
        %2421 = vmatprep.subr.mxu0 0.0
        %2422 = vmatpush1.msra.mxu0 %v2347
        %2423 = vmatprep.subr.mxu0 0.0
        %2424 = vmatpush1.msra.mxu0 %v2346
        %2425 = vmatprep.subr.mxu0 0.0
        %2426 = vmatpush1.msra.mxu0 %v2345
        %2427 = vmatprep.subr.mxu0 0.0
        %2428 = vmatpush1.msra.mxu0 %v2344
        %2429 = vmatprep.subr.mxu0 0.0
        %2430 = vmatpush1.msra.mxu0 %v2343
        %2431 = vmatprep.subr.mxu0 0.0
        %2432 = vmatpush2.msra.mxu0 0.0
        %2433 = vmatprep.subr.mxu0 0.0
        %2434 = vmatpush2.msra.mxu0 0.0
        %2435 = vmatprep.subr.mxu0 0.0
        %2436 = vmatpush2.msra.mxu0 0.0
        %2437 = vmatprep.subr.mxu0 0.0
        %2438 = vmatpush2.msra.mxu0 0.0
        %2439 = vmatprep.subr.mxu0 0.0
        %2440 = vmatpush2.msra.mxu0 0.0
        %2441 = vmatprep.subr.mxu0 0.0
        %2442 = vmatpush2.msra.mxu0 0.0
        %2443 = vmatprep.subr.mxu0 0.0
        %2444 = vmatpush2.msra.mxu0 0.0
        %2445 = vmatprep.subr.mxu0 0.0
        %2446 = vmatpush2.msra.mxu0 0.0
        %2447 = vmatprep.subr.mxu0 0.0
        %2448 = vmatpush2.msra.mxu0 0.0
        %2449 = vmatprep.subr.mxu0 0.0
        %2450 = vmatpush2.msra.mxu0 0.0
        %2451 = vmatprep.subr.mxu0 0.0
        %2452 = vmatpush2.msra.mxu0 0.0
        %2453 = vmatprep.subr.mxu0 0.0
        %2454 = vmatpush2.msra.mxu0 0.0
        %2455 = vmatprep.subr.mxu0 0.0
        %2456 = vmatpush2.msra.mxu0 0.0
        %2457 = vmatprep.subr.mxu0 0.0
        %2458 = vmatpush2.msra.mxu0 0.0
        %2459 = vmatprep.subr.mxu0 0.0
        %2460 = vmatpush2.msra.mxu0 0.0
        %2461 = vmatprep.subr.mxu0 0.0
        %2462 = vmatpush2.msra.mxu0 0.0
        %2463 = vmatprep.mubr.f32.mxu0 0.0
        %2464 = vmatmul.mubr.f32.gmra.mxu0 %v2394
        %v2465 = vpop.f32.mrf.mxu0
        %v2466 = vadd.f32 0.0, %v2465
        %v2467 = vpop.f32.mrf.mxu0
        %2468 = vmatprep.mubr.f32.mxu0 0.0
        %2469 = vmatmul.mubr.f32.gmra.mxu0 %v2396
        %v2470 = vpop.f32.mrf.mxu0
        %v2471 = vadd.f32 0.0, %v2470
        %v2472 = vpop.f32.mrf.mxu0
        %2473 = vdwg.mxu0
        %2474 = vmatprep.subr.mxu0 0.0
        %2475 = vmatpush1.msra.mxu0 %v2341
        %2476 = vmatprep.subr.mxu0 0.0
        %2477 = vmatpush1.msra.mxu0 %v2340
        %2478 = vmatprep.subr.mxu0 0.0
        %2479 = vmatpush1.msra.mxu0 %v2339
        %2480 = vmatprep.subr.mxu0 0.0
        %2481 = vmatpush1.msra.mxu0 %v2338
        %2482 = vmatprep.subr.mxu0 0.0
        %2483 = vmatpush1.msra.mxu0 %v2337
        %2484 = vmatprep.subr.mxu0 0.0
        %2485 = vmatpush1.msra.mxu0 %v2336
        %2486 = vmatprep.subr.mxu0 0.0
        %2487 = vmatpush1.msra.mxu0 %v2335
        %2488 = vmatprep.subr.mxu0 0.0
        %2489 = vmatpush1.msra.mxu0 %v2334
        %2490 = vmatprep.subr.mxu0 0.0
        %2491 = vmatpush1.msra.mxu0 %v2333
        %2492 = vmatprep.subr.mxu0 0.0
        %2493 = vmatpush1.msra.mxu0 %v2332
        %2494 = vmatprep.subr.mxu0 0.0
        %2495 = vmatpush1.msra.mxu0 %v2331
        %2496 = vmatprep.subr.mxu0 0.0
        %2497 = vmatpush1.msra.mxu0 %v2330
        %2498 = vmatprep.subr.mxu0 0.0
        %2499 = vmatpush1.msra.mxu0 %v2329
        %2500 = vmatprep.subr.mxu0 0.0
        %2501 = vmatpush1.msra.mxu0 %v2328
        %2502 = vmatprep.subr.mxu0 0.0
        %2503 = vmatpush1.msra.mxu0 %v2327
        %2504 = vmatprep.subr.mxu0 0.0
        %2505 = vmatpush1.msra.mxu0 %v2326
        %2506 = vmatprep.subr.mxu0 0.0
        %2507 = vmatpush2.msra.mxu0 0.0
        %2508 = vmatprep.subr.mxu0 0.0
        %2509 = vmatpush2.msra.mxu0 0.0
        %2510 = vmatprep.subr.mxu0 0.0
        %2511 = vmatpush2.msra.mxu0 0.0
        %2512 = vmatprep.subr.mxu0 0.0
        %2513 = vmatpush2.msra.mxu0 0.0
        %2514 = vmatprep.subr.mxu0 0.0
        %2515 = vmatpush2.msra.mxu0 0.0
        %2516 = vmatprep.subr.mxu0 0.0
        %2517 = vmatpush2.msra.mxu0 0.0
        %2518 = vmatprep.subr.mxu0 0.0
        %2519 = vmatpush2.msra.mxu0 0.0
        %2520 = vmatprep.subr.mxu0 0.0
        %2521 = vmatpush2.msra.mxu0 0.0
        %2522 = vmatprep.subr.mxu0 0.0
        %2523 = vmatpush2.msra.mxu0 0.0
        %2524 = vmatprep.subr.mxu0 0.0
        %2525 = vmatpush2.msra.mxu0 0.0
        %2526 = vmatprep.subr.mxu0 0.0
        %2527 = vmatpush2.msra.mxu0 0.0
        %2528 = vmatprep.subr.mxu0 0.0
        %2529 = vmatpush2.msra.mxu0 0.0
        %2530 = vmatprep.subr.mxu0 0.0
        %2531 = vmatpush2.msra.mxu0 0.0
        %2532 = vmatprep.subr.mxu0 0.0
        %2533 = vmatpush2.msra.mxu0 0.0
        %2534 = vmatprep.subr.mxu0 0.0
        %2535 = vmatpush2.msra.mxu0 0.0
        %2536 = vmatprep.subr.mxu0 0.0
        %2537 = vmatpush2.msra.mxu0 0.0
        %2538 = vmatprep.mubr.f32.mxu0 0.0
        %2539 = vmatmul.mubr.f32.gmra.mxu0 %v2388
        %v2540 = vpop.f32.mrf.mxu0
        %v2541 = vadd.f32 %v2466, %v2540
        %v2542 = vpop.f32.mrf.mxu0
        %2543 = vmatprep.mubr.f32.mxu0 0.0
        %2544 = vmatmul.mubr.f32.gmra.mxu0 %v2384
        %v2545 = vpop.f32.mrf.mxu0
        %v2546 = vadd.f32 %v2471, %v2545
        %v2547 = vpop.f32.mrf.mxu0
        %2548 = vdwg.mxu0
        %v2549 = vrot.slane %v2388, 2
        %v2550 = vrot.slane %v2384, 2
        %v2551 = vsel %vm595, %v2549, %v2550
        %v2552 = vrot.slane %v2389, 2
        %v2553 = vsel %vm595, %v2550, %v2552
        %2556 = vmatprep.subr.mxu0 0.0
        %2557 = vmatpush1.msra.mxu0 %v2375
        %2558 = vmatprep.subr.mxu0 0.0
        %2559 = vmatpush1.msra.mxu0 %v2374
        %2560 = vmatprep.subr.mxu0 0.0
        %2561 = vmatpush1.msra.mxu0 %v2373
        %2562 = vmatprep.subr.mxu0 0.0
        %2563 = vmatpush1.msra.mxu0 %v2372
        %2564 = vmatprep.subr.mxu0 0.0
        %2565 = vmatpush1.msra.mxu0 %v2371
        %2566 = vmatprep.subr.mxu0 0.0
        %2567 = vmatpush1.msra.mxu0 %v2370
        %2568 = vmatprep.subr.mxu0 0.0
        %2569 = vmatpush1.msra.mxu0 %v2369
        %2570 = vmatprep.subr.mxu0 0.0
        %2571 = vmatpush1.msra.mxu0 %v2368
        %2572 = vmatprep.subr.mxu0 0.0
        %2573 = vmatpush1.msra.mxu0 %v2367
        %2574 = vmatprep.subr.mxu0 0.0
        %2575 = vmatpush1.msra.mxu0 %v2366
        %2576 = vmatprep.subr.mxu0 0.0
        %2577 = vmatpush1.msra.mxu0 %v2365
        %2578 = vmatprep.subr.mxu0 0.0
        %2579 = vmatpush1.msra.mxu0 %v2364
        %2580 = vmatprep.subr.mxu0 0.0
        %2581 = vmatpush1.msra.mxu0 %v2363
        %2582 = vmatprep.subr.mxu0 0.0
        %2583 = vmatpush1.msra.mxu0 %v2362
        %2584 = vmatprep.subr.mxu0 0.0
        %2585 = vmatpush1.msra.mxu0 %v2361
        %2586 = vmatprep.subr.mxu0 0.0
        %2587 = vmatpush1.msra.mxu0 %v2360
        %2588 = vmatprep.subr.mxu0 0.0
        %2589 = vmatpush2.msra.mxu0 0.0
        %2590 = vmatprep.subr.mxu0 0.0
        %2591 = vmatpush2.msra.mxu0 0.0
        %2592 = vmatprep.subr.mxu0 0.0
        %2593 = vmatpush2.msra.mxu0 0.0
        %2594 = vmatprep.subr.mxu0 0.0
        %2595 = vmatpush2.msra.mxu0 0.0
        %2596 = vmatprep.subr.mxu0 0.0
        %2597 = vmatpush2.msra.mxu0 0.0
        %2598 = vmatprep.subr.mxu0 0.0
        %2599 = vmatpush2.msra.mxu0 0.0
        %2600 = vmatprep.subr.mxu0 0.0
        %2601 = vmatpush2.msra.mxu0 0.0
        %2602 = vmatprep.subr.mxu0 0.0
        %2603 = vmatpush2.msra.mxu0 0.0
        %2604 = vmatprep.subr.mxu0 0.0
        %2605 = vmatpush2.msra.mxu0 0.0
        %2606 = vmatprep.subr.mxu0 0.0
        %2607 = vmatpush2.msra.mxu0 0.0
        %2608 = vmatprep.subr.mxu0 0.0
        %2609 = vmatpush2.msra.mxu0 0.0
        %2610 = vmatprep.subr.mxu0 0.0
        %2611 = vmatpush2.msra.mxu0 0.0
        %2612 = vmatprep.subr.mxu0 0.0
        %2613 = vmatpush2.msra.mxu0 0.0
        %2614 = vmatprep.subr.mxu0 0.0
        %2615 = vmatpush2.msra.mxu0 0.0
        %2616 = vmatprep.subr.mxu0 0.0
        %2617 = vmatpush2.msra.mxu0 0.0
        %2618 = vmatprep.subr.mxu0 0.0
        %2619 = vmatpush2.msra.mxu0 0.0
        %2620 = vmatprep.mubr.f32.mxu0 0.0
        %2621 = vmatmul.mubr.f32.gmra.mxu0 %v2551
        %v2622 = vpop.f32.mrf.mxu0
        %v2623 = vadd.f32 0.0, %v2622
        %v2624 = vpop.f32.mrf.mxu0
        %2625 = vmatprep.mubr.f32.mxu0 0.0
        %2626 = vmatmul.mubr.f32.gmra.mxu0 %v2553
        %v2627 = vpop.f32.mrf.mxu0
        %v2628 = vadd.f32 0.0, %v2627
        %v2629 = vpop.f32.mrf.mxu0
        %2630 = vdwg.mxu0
        %v2631 = vadd.f32 %v2541, %v2623
        %v2632 = vadd.f32 %v2546, %v2628
        %v2634 = vlaneseq
        %v2635 = vshrl.u32 %v2634, 7
        %v2636 = vsub.s32 0, %v2635
        %v2637 = vrot.slane %v2377, %v2636
        %v2639 = vmul.f32 %v2631, %v2637
        %v2640 = vmul.f32 %v2632, %v2637
        %v2642 = vlaneseq
        %v2643 = vshrl.u32 %v2642, 7
        %v2644 = vsub.s32 0, %v2643
        %v2645 = vrot.slane %v2379, %v2644
        %v2647 = vadd.f32 %v2639, %v2645
        %v2648 = vadd.f32 %v2640, %v2645
        %v2649 = vadd.f32 %v2647, %v1997
        %v2650 = vadd.f32 %v2648, %v1998
        %v2651 = vmax.f32 %v2649, 0.0
        %v2652 = vmax.f32 %v2650, 0.0
        %s2653 = scalar_lea.vmem [#allocation8], 2304
        %v2654 = vld [vmem:[%s2653] sm:$0xff]
        %v2655 = vld [vmem:[%s2653 + $0x8] sm:$0xff]
        %v2656 = vld [vmem:[%s2653 + $0x10] sm:$0xff]
        %v2657 = vld [vmem:[%s2653 + $0x18] sm:$0xff]
        %v2658 = vld [vmem:[%s2653 + $0x20] sm:$0xff]
        %v2659 = vld [vmem:[%s2653 + $0x28] sm:$0xff]
        %v2660 = vld [vmem:[%s2653 + $0x30] sm:$0xff]
        %v2661 = vld [vmem:[%s2653 + $0x38] sm:$0xff]
        %v2662 = vld [vmem:[%s2653 + $0x40] sm:$0xff]
        %v2663 = vld [vmem:[%s2653 + $0x48] sm:$0xff]
        %v2664 = vld [vmem:[%s2653 + $0x50] sm:$0xff]
        %v2665 = vld [vmem:[%s2653 + $0x58] sm:$0xff]
        %v2666 = vld [vmem:[%s2653 + $0x60] sm:$0xff]
        %v2667 = vld [vmem:[%s2653 + $0x68] sm:$0xff]
        %v2668 = vld [vmem:[%s2653 + $0x70] sm:$0xff]
        %v2669 = vld [vmem:[%s2653 + $0x78] sm:$0xff]
        %s2670 = scalar_lea.vmem [#allocation8], 2432
        %v2671 = vld [vmem:[%s2670] sm:$0xff]
        %v2672 = vld [vmem:[%s2670 + $0x8] sm:$0xff]
        %v2673 = vld [vmem:[%s2670 + $0x10] sm:$0xff]
        %v2674 = vld [vmem:[%s2670 + $0x18] sm:$0xff]
        %v2675 = vld [vmem:[%s2670 + $0x20] sm:$0xff]
        %v2676 = vld [vmem:[%s2670 + $0x28] sm:$0xff]
        %v2677 = vld [vmem:[%s2670 + $0x30] sm:$0xff]
        %v2678 = vld [vmem:[%s2670 + $0x38] sm:$0xff]
        %v2679 = vld [vmem:[%s2670 + $0x40] sm:$0xff]
        %v2680 = vld [vmem:[%s2670 + $0x48] sm:$0xff]
        %v2681 = vld [vmem:[%s2670 + $0x50] sm:$0xff]
        %v2682 = vld [vmem:[%s2670 + $0x58] sm:$0xff]
        %v2683 = vld [vmem:[%s2670 + $0x60] sm:$0xff]
        %v2684 = vld [vmem:[%s2670 + $0x68] sm:$0xff]
        %v2685 = vld [vmem:[%s2670 + $0x70] sm:$0xff]
        %v2686 = vld [vmem:[%s2670 + $0x78] sm:$0xff]
        %s2687 = scalar_lea.vmem [#allocation8], 2560
        %v2688 = vld [vmem:[%s2687] sm:$0xff]
        %v2689 = vld [vmem:[%s2687 + $0x8] sm:$0xff]
        %v2690 = vld [vmem:[%s2687 + $0x10] sm:$0xff]
        %v2691 = vld [vmem:[%s2687 + $0x18] sm:$0xff]
        %v2692 = vld [vmem:[%s2687 + $0x20] sm:$0xff]
        %v2693 = vld [vmem:[%s2687 + $0x28] sm:$0xff]
        %v2694 = vld [vmem:[%s2687 + $0x30] sm:$0xff]
        %v2695 = vld [vmem:[%s2687 + $0x38] sm:$0xff]
        %v2696 = vld [vmem:[%s2687 + $0x40] sm:$0xff]
        %v2697 = vld [vmem:[%s2687 + $0x48] sm:$0xff]
        %v2698 = vld [vmem:[%s2687 + $0x50] sm:$0xff]
        %v2699 = vld [vmem:[%s2687 + $0x58] sm:$0xff]
        %v2700 = vld [vmem:[%s2687 + $0x60] sm:$0xff]
        %v2701 = vld [vmem:[%s2687 + $0x68] sm:$0xff]
        %v2702 = vld [vmem:[%s2687 + $0x70] sm:$0xff]
        %v2703 = vld [vmem:[%s2687 + $0x78] sm:$0xff]
        %s2704 = scalar_lea.vmem [#allocation10], 6
        %v2705 = vld [vmem:[%s2704] sm:$0x1]
        %s2706 = scalar_lea.vmem [#allocation11], 6
        %v2707 = vld [vmem:[%s2706] sm:$0x1]
        %v2710 = vrot.slane %v2651, 7
        %v2711 = vrot.slane %v2652, 7
        %v2712 = vsel %vm420, %v2710, %v2711
        %v2716 = vsel %vm420, 0.0, %v2710
        %v2717 = vsel %vm420, %v2711, 0.0
        %v2720 = vrot.slane %v2716, 1
        %v2721 = vrot.slane %v2712, 1
        %v2722 = vsel %vm430, %v2720, %v2721
        %v2723 = vrot.slane %v2717, 1
        %v2724 = vsel %vm430, %v2721, %v2723
        %2727 = vmatprep.subr.mxu0 0.0
        %2728 = vmatpush1.msra.mxu0 %v2686
        %2729 = vmatprep.subr.mxu0 0.0
        %2730 = vmatpush1.msra.mxu0 %v2685
        %2731 = vmatprep.subr.mxu0 0.0
        %2732 = vmatpush1.msra.mxu0 %v2684
        %2733 = vmatprep.subr.mxu0 0.0
        %2734 = vmatpush1.msra.mxu0 %v2683
        %2735 = vmatprep.subr.mxu0 0.0
        %2736 = vmatpush1.msra.mxu0 %v2682
        %2737 = vmatprep.subr.mxu0 0.0
        %2738 = vmatpush1.msra.mxu0 %v2681
        %2739 = vmatprep.subr.mxu0 0.0
        %2740 = vmatpush1.msra.mxu0 %v2680
        %2741 = vmatprep.subr.mxu0 0.0
        %2742 = vmatpush1.msra.mxu0 %v2679
        %2743 = vmatprep.subr.mxu0 0.0
        %2744 = vmatpush1.msra.mxu0 %v2678
        %2745 = vmatprep.subr.mxu0 0.0
        %2746 = vmatpush1.msra.mxu0 %v2677
        %2747 = vmatprep.subr.mxu0 0.0
        %2748 = vmatpush1.msra.mxu0 %v2676
        %2749 = vmatprep.subr.mxu0 0.0
        %2750 = vmatpush1.msra.mxu0 %v2675
        %2751 = vmatprep.subr.mxu0 0.0
        %2752 = vmatpush1.msra.mxu0 %v2674
        %2753 = vmatprep.subr.mxu0 0.0
        %2754 = vmatpush1.msra.mxu0 %v2673
        %2755 = vmatprep.subr.mxu0 0.0
        %2756 = vmatpush1.msra.mxu0 %v2672
        %2757 = vmatprep.subr.mxu0 0.0
        %2758 = vmatpush1.msra.mxu0 %v2671
        %2759 = vmatprep.subr.mxu0 0.0
        %2760 = vmatpush2.msra.mxu0 0.0
        %2761 = vmatprep.subr.mxu0 0.0
        %2762 = vmatpush2.msra.mxu0 0.0
        %2763 = vmatprep.subr.mxu0 0.0
        %2764 = vmatpush2.msra.mxu0 0.0
        %2765 = vmatprep.subr.mxu0 0.0
        %2766 = vmatpush2.msra.mxu0 0.0
        %2767 = vmatprep.subr.mxu0 0.0
        %2768 = vmatpush2.msra.mxu0 0.0
        %2769 = vmatprep.subr.mxu0 0.0
        %2770 = vmatpush2.msra.mxu0 0.0
        %2771 = vmatprep.subr.mxu0 0.0
        %2772 = vmatpush2.msra.mxu0 0.0
        %2773 = vmatprep.subr.mxu0 0.0
        %2774 = vmatpush2.msra.mxu0 0.0
        %2775 = vmatprep.subr.mxu0 0.0
        %2776 = vmatpush2.msra.mxu0 0.0
        %2777 = vmatprep.subr.mxu0 0.0
        %2778 = vmatpush2.msra.mxu0 0.0
        %2779 = vmatprep.subr.mxu0 0.0
        %2780 = vmatpush2.msra.mxu0 0.0
        %2781 = vmatprep.subr.mxu0 0.0
        %2782 = vmatpush2.msra.mxu0 0.0
        %2783 = vmatprep.subr.mxu0 0.0
        %2784 = vmatpush2.msra.mxu0 0.0
        %2785 = vmatprep.subr.mxu0 0.0
        %2786 = vmatpush2.msra.mxu0 0.0
        %2787 = vmatprep.subr.mxu0 0.0
        %2788 = vmatpush2.msra.mxu0 0.0
        %2789 = vmatprep.subr.mxu0 0.0
        %2790 = vmatpush2.msra.mxu0 0.0
        %2791 = vmatprep.mubr.f32.mxu0 0.0
        %2792 = vmatmul.mubr.f32.gmra.mxu0 %v2722
        %v2793 = vpop.f32.mrf.mxu0
        %v2794 = vadd.f32 0.0, %v2793
        %v2795 = vpop.f32.mrf.mxu0
        %2796 = vmatprep.mubr.f32.mxu0 0.0
        %2797 = vmatmul.mubr.f32.gmra.mxu0 %v2724
        %v2798 = vpop.f32.mrf.mxu0
        %v2799 = vadd.f32 0.0, %v2798
        %v2800 = vpop.f32.mrf.mxu0
        %2801 = vdwg.mxu0
        %2802 = vmatprep.subr.mxu0 0.0
        %2803 = vmatpush1.msra.mxu0 %v2669
        %2804 = vmatprep.subr.mxu0 0.0
        %2805 = vmatpush1.msra.mxu0 %v2668
        %2806 = vmatprep.subr.mxu0 0.0
        %2807 = vmatpush1.msra.mxu0 %v2667
        %2808 = vmatprep.subr.mxu0 0.0
        %2809 = vmatpush1.msra.mxu0 %v2666
        %2810 = vmatprep.subr.mxu0 0.0
        %2811 = vmatpush1.msra.mxu0 %v2665
        %2812 = vmatprep.subr.mxu0 0.0
        %2813 = vmatpush1.msra.mxu0 %v2664
        %2814 = vmatprep.subr.mxu0 0.0
        %2815 = vmatpush1.msra.mxu0 %v2663
        %2816 = vmatprep.subr.mxu0 0.0
        %2817 = vmatpush1.msra.mxu0 %v2662
        %2818 = vmatprep.subr.mxu0 0.0
        %2819 = vmatpush1.msra.mxu0 %v2661
        %2820 = vmatprep.subr.mxu0 0.0
        %2821 = vmatpush1.msra.mxu0 %v2660
        %2822 = vmatprep.subr.mxu0 0.0
        %2823 = vmatpush1.msra.mxu0 %v2659
        %2824 = vmatprep.subr.mxu0 0.0
        %2825 = vmatpush1.msra.mxu0 %v2658
        %2826 = vmatprep.subr.mxu0 0.0
        %2827 = vmatpush1.msra.mxu0 %v2657
        %2828 = vmatprep.subr.mxu0 0.0
        %2829 = vmatpush1.msra.mxu0 %v2656
        %2830 = vmatprep.subr.mxu0 0.0
        %2831 = vmatpush1.msra.mxu0 %v2655
        %2832 = vmatprep.subr.mxu0 0.0
        %2833 = vmatpush1.msra.mxu0 %v2654
        %2834 = vmatprep.subr.mxu0 0.0
        %2835 = vmatpush2.msra.mxu0 0.0
        %2836 = vmatprep.subr.mxu0 0.0
        %2837 = vmatpush2.msra.mxu0 0.0
        %2838 = vmatprep.subr.mxu0 0.0
        %2839 = vmatpush2.msra.mxu0 0.0
        %2840 = vmatprep.subr.mxu0 0.0
        %2841 = vmatpush2.msra.mxu0 0.0
        %2842 = vmatprep.subr.mxu0 0.0
        %2843 = vmatpush2.msra.mxu0 0.0
        %2844 = vmatprep.subr.mxu0 0.0
        %2845 = vmatpush2.msra.mxu0 0.0
        %2846 = vmatprep.subr.mxu0 0.0
        %2847 = vmatpush2.msra.mxu0 0.0
        %2848 = vmatprep.subr.mxu0 0.0
        %2849 = vmatpush2.msra.mxu0 0.0
        %2850 = vmatprep.subr.mxu0 0.0
        %2851 = vmatpush2.msra.mxu0 0.0
        %2852 = vmatprep.subr.mxu0 0.0
        %2853 = vmatpush2.msra.mxu0 0.0
        %2854 = vmatprep.subr.mxu0 0.0
        %2855 = vmatpush2.msra.mxu0 0.0
        %2856 = vmatprep.subr.mxu0 0.0
        %2857 = vmatpush2.msra.mxu0 0.0
        %2858 = vmatprep.subr.mxu0 0.0
        %2859 = vmatpush2.msra.mxu0 0.0
        %2860 = vmatprep.subr.mxu0 0.0
        %2861 = vmatpush2.msra.mxu0 0.0
        %2862 = vmatprep.subr.mxu0 0.0
        %2863 = vmatpush2.msra.mxu0 0.0
        %2864 = vmatprep.subr.mxu0 0.0
        %2865 = vmatpush2.msra.mxu0 0.0
        %2866 = vmatprep.mubr.f32.mxu0 0.0
        %2867 = vmatmul.mubr.f32.gmra.mxu0 %v2716
        %v2868 = vpop.f32.mrf.mxu0
        %v2869 = vadd.f32 %v2794, %v2868
        %v2870 = vpop.f32.mrf.mxu0
        %2871 = vmatprep.mubr.f32.mxu0 0.0
        %2872 = vmatmul.mubr.f32.gmra.mxu0 %v2712
        %v2873 = vpop.f32.mrf.mxu0
        %v2874 = vadd.f32 %v2799, %v2873
        %v2875 = vpop.f32.mrf.mxu0
        %2876 = vdwg.mxu0
        %v2877 = vrot.slane %v2716, 2
        %v2878 = vrot.slane %v2712, 2
        %v2879 = vsel %vm595, %v2877, %v2878
        %v2880 = vrot.slane %v2717, 2
        %v2881 = vsel %vm595, %v2878, %v2880
        %2884 = vmatprep.subr.mxu0 0.0
        %2885 = vmatpush1.msra.mxu0 %v2703
        %2886 = vmatprep.subr.mxu0 0.0
        %2887 = vmatpush1.msra.mxu0 %v2702
        %2888 = vmatprep.subr.mxu0 0.0
        %2889 = vmatpush1.msra.mxu0 %v2701
        %2890 = vmatprep.subr.mxu0 0.0
        %2891 = vmatpush1.msra.mxu0 %v2700
        %2892 = vmatprep.subr.mxu0 0.0
        %2893 = vmatpush1.msra.mxu0 %v2699
        %2894 = vmatprep.subr.mxu0 0.0
        %2895 = vmatpush1.msra.mxu0 %v2698
        %2896 = vmatprep.subr.mxu0 0.0
        %2897 = vmatpush1.msra.mxu0 %v2697
        %2898 = vmatprep.subr.mxu0 0.0
        %2899 = vmatpush1.msra.mxu0 %v2696
        %2900 = vmatprep.subr.mxu0 0.0
        %2901 = vmatpush1.msra.mxu0 %v2695
        %2902 = vmatprep.subr.mxu0 0.0
        %2903 = vmatpush1.msra.mxu0 %v2694
        %2904 = vmatprep.subr.mxu0 0.0
        %2905 = vmatpush1.msra.mxu0 %v2693
        %2906 = vmatprep.subr.mxu0 0.0
        %2907 = vmatpush1.msra.mxu0 %v2692
        %2908 = vmatprep.subr.mxu0 0.0
        %2909 = vmatpush1.msra.mxu0 %v2691
        %2910 = vmatprep.subr.mxu0 0.0
        %2911 = vmatpush1.msra.mxu0 %v2690
        %2912 = vmatprep.subr.mxu0 0.0
        %2913 = vmatpush1.msra.mxu0 %v2689
        %2914 = vmatprep.subr.mxu0 0.0
        %2915 = vmatpush1.msra.mxu0 %v2688
        %2916 = vmatprep.subr.mxu0 0.0
        %2917 = vmatpush2.msra.mxu0 0.0
        %2918 = vmatprep.subr.mxu0 0.0
        %2919 = vmatpush2.msra.mxu0 0.0
        %2920 = vmatprep.subr.mxu0 0.0
        %2921 = vmatpush2.msra.mxu0 0.0
        %2922 = vmatprep.subr.mxu0 0.0
        %2923 = vmatpush2.msra.mxu0 0.0
        %2924 = vmatprep.subr.mxu0 0.0
        %2925 = vmatpush2.msra.mxu0 0.0
        %2926 = vmatprep.subr.mxu0 0.0
        %2927 = vmatpush2.msra.mxu0 0.0
        %2928 = vmatprep.subr.mxu0 0.0
        %2929 = vmatpush2.msra.mxu0 0.0
        %2930 = vmatprep.subr.mxu0 0.0
        %2931 = vmatpush2.msra.mxu0 0.0
        %2932 = vmatprep.subr.mxu0 0.0
        %2933 = vmatpush2.msra.mxu0 0.0
        %2934 = vmatprep.subr.mxu0 0.0
        %2935 = vmatpush2.msra.mxu0 0.0
        %2936 = vmatprep.subr.mxu0 0.0
        %2937 = vmatpush2.msra.mxu0 0.0
        %2938 = vmatprep.subr.mxu0 0.0
        %2939 = vmatpush2.msra.mxu0 0.0
        %2940 = vmatprep.subr.mxu0 0.0
        %2941 = vmatpush2.msra.mxu0 0.0
        %2942 = vmatprep.subr.mxu0 0.0
        %2943 = vmatpush2.msra.mxu0 0.0
        %2944 = vmatprep.subr.mxu0 0.0
        %2945 = vmatpush2.msra.mxu0 0.0
        %2946 = vmatprep.subr.mxu0 0.0
        %2947 = vmatpush2.msra.mxu0 0.0
        %2948 = vmatprep.mubr.f32.mxu0 0.0
        %2949 = vmatmul.mubr.f32.gmra.mxu0 %v2879
        %v2950 = vpop.f32.mrf.mxu0
        %v2951 = vadd.f32 0.0, %v2950
        %v2952 = vpop.f32.mrf.mxu0
        %2953 = vmatprep.mubr.f32.mxu0 0.0
        %2954 = vmatmul.mubr.f32.gmra.mxu0 %v2881
        %v2955 = vpop.f32.mrf.mxu0
        %v2956 = vadd.f32 0.0, %v2955
        %v2957 = vpop.f32.mrf.mxu0
        %2958 = vdwg.mxu0
        %v2959 = vadd.f32 %v2869, %v2951
        %v2960 = vadd.f32 %v2874, %v2956
        %v2962 = vlaneseq
        %v2963 = vshrl.u32 %v2962, 7
        %v2964 = vsub.s32 0, %v2963
        %v2965 = vrot.slane %v2705, %v2964
        %v2967 = vmul.f32 %v2959, %v2965
        %v2968 = vmul.f32 %v2960, %v2965
        %v2970 = vlaneseq
        %v2971 = vshrl.u32 %v2970, 7
        %v2972 = vsub.s32 0, %v2971
        %v2973 = vrot.slane %v2707, %v2972
        %v2975 = vadd.f32 %v2967, %v2973
        %v2976 = vadd.f32 %v2968, %v2973
        %v2977 = vmax.f32 %v2975, 0.0
        %v2978 = vmax.f32 %v2976, 0.0
        %s2979 = scalar_lea.vmem [#allocation8], 2688
        %v2980 = vld [vmem:[%s2979] sm:$0xff]
        %v2981 = vld [vmem:[%s2979 + $0x8] sm:$0xff]
        %v2982 = vld [vmem:[%s2979 + $0x10] sm:$0xff]
        %v2983 = vld [vmem:[%s2979 + $0x18] sm:$0xff]
        %v2984 = vld [vmem:[%s2979 + $0x20] sm:$0xff]
        %v2985 = vld [vmem:[%s2979 + $0x28] sm:$0xff]
        %v2986 = vld [vmem:[%s2979 + $0x30] sm:$0xff]
        %v2987 = vld [vmem:[%s2979 + $0x38] sm:$0xff]
        %v2988 = vld [vmem:[%s2979 + $0x40] sm:$0xff]
        %v2989 = vld [vmem:[%s2979 + $0x48] sm:$0xff]
        %v2990 = vld [vmem:[%s2979 + $0x50] sm:$0xff]
        %v2991 = vld [vmem:[%s2979 + $0x58] sm:$0xff]
        %v2992 = vld [vmem:[%s2979 + $0x60] sm:$0xff]
        %v2993 = vld [vmem:[%s2979 + $0x68] sm:$0xff]
        %v2994 = vld [vmem:[%s2979 + $0x70] sm:$0xff]
        %v2995 = vld [vmem:[%s2979 + $0x78] sm:$0xff]
        %s2996 = scalar_lea.vmem [#allocation8], 2816
        %v2997 = vld [vmem:[%s2996] sm:$0xff]
        %v2998 = vld [vmem:[%s2996 + $0x8] sm:$0xff]
        %v2999 = vld [vmem:[%s2996 + $0x10] sm:$0xff]
        %v3000 = vld [vmem:[%s2996 + $0x18] sm:$0xff]
        %v3001 = vld [vmem:[%s2996 + $0x20] sm:$0xff]
        %v3002 = vld [vmem:[%s2996 + $0x28] sm:$0xff]
        %v3003 = vld [vmem:[%s2996 + $0x30] sm:$0xff]
        %v3004 = vld [vmem:[%s2996 + $0x38] sm:$0xff]
        %v3005 = vld [vmem:[%s2996 + $0x40] sm:$0xff]
        %v3006 = vld [vmem:[%s2996 + $0x48] sm:$0xff]
        %v3007 = vld [vmem:[%s2996 + $0x50] sm:$0xff]
        %v3008 = vld [vmem:[%s2996 + $0x58] sm:$0xff]
        %v3009 = vld [vmem:[%s2996 + $0x60] sm:$0xff]
        %v3010 = vld [vmem:[%s2996 + $0x68] sm:$0xff]
        %v3011 = vld [vmem:[%s2996 + $0x70] sm:$0xff]
        %v3012 = vld [vmem:[%s2996 + $0x78] sm:$0xff]
        %s3013 = scalar_lea.vmem [#allocation8], 2944
        %v3014 = vld [vmem:[%s3013] sm:$0xff]
        %v3015 = vld [vmem:[%s3013 + $0x8] sm:$0xff]
        %v3016 = vld [vmem:[%s3013 + $0x10] sm:$0xff]
        %v3017 = vld [vmem:[%s3013 + $0x18] sm:$0xff]
        %v3018 = vld [vmem:[%s3013 + $0x20] sm:$0xff]
        %v3019 = vld [vmem:[%s3013 + $0x28] sm:$0xff]
        %v3020 = vld [vmem:[%s3013 + $0x30] sm:$0xff]
        %v3021 = vld [vmem:[%s3013 + $0x38] sm:$0xff]
        %v3022 = vld [vmem:[%s3013 + $0x40] sm:$0xff]
        %v3023 = vld [vmem:[%s3013 + $0x48] sm:$0xff]
        %v3024 = vld [vmem:[%s3013 + $0x50] sm:$0xff]
        %v3025 = vld [vmem:[%s3013 + $0x58] sm:$0xff]
        %v3026 = vld [vmem:[%s3013 + $0x60] sm:$0xff]
        %v3027 = vld [vmem:[%s3013 + $0x68] sm:$0xff]
        %v3028 = vld [vmem:[%s3013 + $0x70] sm:$0xff]
        %v3029 = vld [vmem:[%s3013 + $0x78] sm:$0xff]
        %s3030 = scalar_lea.vmem [#allocation10], 7
        %v3031 = vld [vmem:[%s3030] sm:$0x1]
        %s3032 = scalar_lea.vmem [#allocation11], 7
        %v3033 = vld [vmem:[%s3032] sm:$0x1]
        %v3036 = vrot.slane %v2977, 7
        %v3037 = vrot.slane %v2978, 7
        %v3038 = vsel %vm420, %v3036, %v3037
        %v3042 = vsel %vm420, 0.0, %v3036
        %v3043 = vsel %vm420, %v3037, 0.0
        %v3046 = vrot.slane %v3042, 1
        %v3047 = vrot.slane %v3038, 1
        %v3048 = vsel %vm430, %v3046, %v3047
        %v3049 = vrot.slane %v3043, 1
        %v3050 = vsel %vm430, %v3047, %v3049
        %3053 = vmatprep.subr.mxu0 0.0
        %3054 = vmatpush1.msra.mxu0 %v3012
        %3055 = vmatprep.subr.mxu0 0.0
        %3056 = vmatpush1.msra.mxu0 %v3011
        %3057 = vmatprep.subr.mxu0 0.0
        %3058 = vmatpush1.msra.mxu0 %v3010
        %3059 = vmatprep.subr.mxu0 0.0
        %3060 = vmatpush1.msra.mxu0 %v3009
        %3061 = vmatprep.subr.mxu0 0.0
        %3062 = vmatpush1.msra.mxu0 %v3008
        %3063 = vmatprep.subr.mxu0 0.0
        %3064 = vmatpush1.msra.mxu0 %v3007
        %3065 = vmatprep.subr.mxu0 0.0
        %3066 = vmatpush1.msra.mxu0 %v3006
        %3067 = vmatprep.subr.mxu0 0.0
        %3068 = vmatpush1.msra.mxu0 %v3005
        %3069 = vmatprep.subr.mxu0 0.0
        %3070 = vmatpush1.msra.mxu0 %v3004
        %3071 = vmatprep.subr.mxu0 0.0
        %3072 = vmatpush1.msra.mxu0 %v3003
        %3073 = vmatprep.subr.mxu0 0.0
        %3074 = vmatpush1.msra.mxu0 %v3002
        %3075 = vmatprep.subr.mxu0 0.0
        %3076 = vmatpush1.msra.mxu0 %v3001
        %3077 = vmatprep.subr.mxu0 0.0
        %3078 = vmatpush1.msra.mxu0 %v3000
        %3079 = vmatprep.subr.mxu0 0.0
        %3080 = vmatpush1.msra.mxu0 %v2999
        %3081 = vmatprep.subr.mxu0 0.0
        %3082 = vmatpush1.msra.mxu0 %v2998
        %3083 = vmatprep.subr.mxu0 0.0
        %3084 = vmatpush1.msra.mxu0 %v2997
        %3085 = vmatprep.subr.mxu0 0.0
        %3086 = vmatpush2.msra.mxu0 0.0
        %3087 = vmatprep.subr.mxu0 0.0
        %3088 = vmatpush2.msra.mxu0 0.0
        %3089 = vmatprep.subr.mxu0 0.0
        %3090 = vmatpush2.msra.mxu0 0.0
        %3091 = vmatprep.subr.mxu0 0.0
        %3092 = vmatpush2.msra.mxu0 0.0
        %3093 = vmatprep.subr.mxu0 0.0
        %3094 = vmatpush2.msra.mxu0 0.0
        %3095 = vmatprep.subr.mxu0 0.0
        %3096 = vmatpush2.msra.mxu0 0.0
        %3097 = vmatprep.subr.mxu0 0.0
        %3098 = vmatpush2.msra.mxu0 0.0
        %3099 = vmatprep.subr.mxu0 0.0
        %3100 = vmatpush2.msra.mxu0 0.0
        %3101 = vmatprep.subr.mxu0 0.0
        %3102 = vmatpush2.msra.mxu0 0.0
        %3103 = vmatprep.subr.mxu0 0.0
        %3104 = vmatpush2.msra.mxu0 0.0
        %3105 = vmatprep.subr.mxu0 0.0
        %3106 = vmatpush2.msra.mxu0 0.0
        %3107 = vmatprep.subr.mxu0 0.0
        %3108 = vmatpush2.msra.mxu0 0.0
        %3109 = vmatprep.subr.mxu0 0.0
        %3110 = vmatpush2.msra.mxu0 0.0
        %3111 = vmatprep.subr.mxu0 0.0
        %3112 = vmatpush2.msra.mxu0 0.0
        %3113 = vmatprep.subr.mxu0 0.0
        %3114 = vmatpush2.msra.mxu0 0.0
        %3115 = vmatprep.subr.mxu0 0.0
        %3116 = vmatpush2.msra.mxu0 0.0
        %3117 = vmatprep.mubr.f32.mxu0 0.0
        %3118 = vmatmul.mubr.f32.gmra.mxu0 %v3048
        %v3119 = vpop.f32.mrf.mxu0
        %v3120 = vadd.f32 0.0, %v3119
        %v3121 = vpop.f32.mrf.mxu0
        %3122 = vmatprep.mubr.f32.mxu0 0.0
        %3123 = vmatmul.mubr.f32.gmra.mxu0 %v3050
        %v3124 = vpop.f32.mrf.mxu0
        %v3125 = vadd.f32 0.0, %v3124
        %v3126 = vpop.f32.mrf.mxu0
        %3127 = vdwg.mxu0
        %3128 = vmatprep.subr.mxu0 0.0
        %3129 = vmatpush1.msra.mxu0 %v2995
        %3130 = vmatprep.subr.mxu0 0.0
        %3131 = vmatpush1.msra.mxu0 %v2994
        %3132 = vmatprep.subr.mxu0 0.0
        %3133 = vmatpush1.msra.mxu0 %v2993
        %3134 = vmatprep.subr.mxu0 0.0
        %3135 = vmatpush1.msra.mxu0 %v2992
        %3136 = vmatprep.subr.mxu0 0.0
        %3137 = vmatpush1.msra.mxu0 %v2991
        %3138 = vmatprep.subr.mxu0 0.0
        %3139 = vmatpush1.msra.mxu0 %v2990
        %3140 = vmatprep.subr.mxu0 0.0
        %3141 = vmatpush1.msra.mxu0 %v2989
        %3142 = vmatprep.subr.mxu0 0.0
        %3143 = vmatpush1.msra.mxu0 %v2988
        %3144 = vmatprep.subr.mxu0 0.0
        %3145 = vmatpush1.msra.mxu0 %v2987
        %3146 = vmatprep.subr.mxu0 0.0
        %3147 = vmatpush1.msra.mxu0 %v2986
        %3148 = vmatprep.subr.mxu0 0.0
        %3149 = vmatpush1.msra.mxu0 %v2985
        %3150 = vmatprep.subr.mxu0 0.0
        %3151 = vmatpush1.msra.mxu0 %v2984
        %3152 = vmatprep.subr.mxu0 0.0
        %3153 = vmatpush1.msra.mxu0 %v2983
        %3154 = vmatprep.subr.mxu0 0.0
        %3155 = vmatpush1.msra.mxu0 %v2982
        %3156 = vmatprep.subr.mxu0 0.0
        %3157 = vmatpush1.msra.mxu0 %v2981
        %3158 = vmatprep.subr.mxu0 0.0
        %3159 = vmatpush1.msra.mxu0 %v2980
        %3160 = vmatprep.subr.mxu0 0.0
        %3161 = vmatpush2.msra.mxu0 0.0
        %3162 = vmatprep.subr.mxu0 0.0
        %3163 = vmatpush2.msra.mxu0 0.0
        %3164 = vmatprep.subr.mxu0 0.0
        %3165 = vmatpush2.msra.mxu0 0.0
        %3166 = vmatprep.subr.mxu0 0.0
        %3167 = vmatpush2.msra.mxu0 0.0
        %3168 = vmatprep.subr.mxu0 0.0
        %3169 = vmatpush2.msra.mxu0 0.0
        %3170 = vmatprep.subr.mxu0 0.0
        %3171 = vmatpush2.msra.mxu0 0.0
        %3172 = vmatprep.subr.mxu0 0.0
        %3173 = vmatpush2.msra.mxu0 0.0
        %3174 = vmatprep.subr.mxu0 0.0
        %3175 = vmatpush2.msra.mxu0 0.0
        %3176 = vmatprep.subr.mxu0 0.0
        %3177 = vmatpush2.msra.mxu0 0.0
        %3178 = vmatprep.subr.mxu0 0.0
        %3179 = vmatpush2.msra.mxu0 0.0
        %3180 = vmatprep.subr.mxu0 0.0
        %3181 = vmatpush2.msra.mxu0 0.0
        %3182 = vmatprep.subr.mxu0 0.0
        %3183 = vmatpush2.msra.mxu0 0.0
        %3184 = vmatprep.subr.mxu0 0.0
        %3185 = vmatpush2.msra.mxu0 0.0
        %3186 = vmatprep.subr.mxu0 0.0
        %3187 = vmatpush2.msra.mxu0 0.0
        %3188 = vmatprep.subr.mxu0 0.0
        %3189 = vmatpush2.msra.mxu0 0.0
        %3190 = vmatprep.subr.mxu0 0.0
        %3191 = vmatpush2.msra.mxu0 0.0
        %3192 = vmatprep.mubr.f32.mxu0 0.0
        %3193 = vmatmul.mubr.f32.gmra.mxu0 %v3042
        %v3194 = vpop.f32.mrf.mxu0
        %v3195 = vadd.f32 %v3120, %v3194
        %v3196 = vpop.f32.mrf.mxu0
        %3197 = vmatprep.mubr.f32.mxu0 0.0
        %3198 = vmatmul.mubr.f32.gmra.mxu0 %v3038
        %v3199 = vpop.f32.mrf.mxu0
        %v3200 = vadd.f32 %v3125, %v3199
        %v3201 = vpop.f32.mrf.mxu0
        %3202 = vdwg.mxu0
        %v3203 = vrot.slane %v3042, 2
        %v3204 = vrot.slane %v3038, 2
        %v3205 = vsel %vm595, %v3203, %v3204
        %v3206 = vrot.slane %v3043, 2
        %v3207 = vsel %vm595, %v3204, %v3206
        %3210 = vmatprep.subr.mxu0 0.0
        %3211 = vmatpush1.msra.mxu0 %v3029
        %3212 = vmatprep.subr.mxu0 0.0
        %3213 = vmatpush1.msra.mxu0 %v3028
        %3214 = vmatprep.subr.mxu0 0.0
        %3215 = vmatpush1.msra.mxu0 %v3027
        %3216 = vmatprep.subr.mxu0 0.0
        %3217 = vmatpush1.msra.mxu0 %v3026
        %3218 = vmatprep.subr.mxu0 0.0
        %3219 = vmatpush1.msra.mxu0 %v3025
        %3220 = vmatprep.subr.mxu0 0.0
        %3221 = vmatpush1.msra.mxu0 %v3024
        %3222 = vmatprep.subr.mxu0 0.0
        %3223 = vmatpush1.msra.mxu0 %v3023
        %3224 = vmatprep.subr.mxu0 0.0
        %3225 = vmatpush1.msra.mxu0 %v3022
        %3226 = vmatprep.subr.mxu0 0.0
        %3227 = vmatpush1.msra.mxu0 %v3021
        %3228 = vmatprep.subr.mxu0 0.0
        %3229 = vmatpush1.msra.mxu0 %v3020
        %3230 = vmatprep.subr.mxu0 0.0
        %3231 = vmatpush1.msra.mxu0 %v3019
        %3232 = vmatprep.subr.mxu0 0.0
        %3233 = vmatpush1.msra.mxu0 %v3018
        %3234 = vmatprep.subr.mxu0 0.0
        %3235 = vmatpush1.msra.mxu0 %v3017
        %3236 = vmatprep.subr.mxu0 0.0
        %3237 = vmatpush1.msra.mxu0 %v3016
        %3238 = vmatprep.subr.mxu0 0.0
        %3239 = vmatpush1.msra.mxu0 %v3015
        %3240 = vmatprep.subr.mxu0 0.0
        %3241 = vmatpush1.msra.mxu0 %v3014
        %3242 = vmatprep.subr.mxu0 0.0
        %3243 = vmatpush2.msra.mxu0 0.0
        %3244 = vmatprep.subr.mxu0 0.0
        %3245 = vmatpush2.msra.mxu0 0.0
        %3246 = vmatprep.subr.mxu0 0.0
        %3247 = vmatpush2.msra.mxu0 0.0
        %3248 = vmatprep.subr.mxu0 0.0
        %3249 = vmatpush2.msra.mxu0 0.0
        %3250 = vmatprep.subr.mxu0 0.0
        %3251 = vmatpush2.msra.mxu0 0.0
        %3252 = vmatprep.subr.mxu0 0.0
        %3253 = vmatpush2.msra.mxu0 0.0
        %3254 = vmatprep.subr.mxu0 0.0
        %3255 = vmatpush2.msra.mxu0 0.0
        %3256 = vmatprep.subr.mxu0 0.0
        %3257 = vmatpush2.msra.mxu0 0.0
        %3258 = vmatprep.subr.mxu0 0.0
        %3259 = vmatpush2.msra.mxu0 0.0
        %3260 = vmatprep.subr.mxu0 0.0
        %3261 = vmatpush2.msra.mxu0 0.0
        %3262 = vmatprep.subr.mxu0 0.0
        %3263 = vmatpush2.msra.mxu0 0.0
        %3264 = vmatprep.subr.mxu0 0.0
        %3265 = vmatpush2.msra.mxu0 0.0
        %3266 = vmatprep.subr.mxu0 0.0
        %3267 = vmatpush2.msra.mxu0 0.0
        %3268 = vmatprep.subr.mxu0 0.0
        %3269 = vmatpush2.msra.mxu0 0.0
        %3270 = vmatprep.subr.mxu0 0.0
        %3271 = vmatpush2.msra.mxu0 0.0
        %3272 = vmatprep.subr.mxu0 0.0
        %3273 = vmatpush2.msra.mxu0 0.0
        %3274 = vmatprep.mubr.f32.mxu0 0.0
        %3275 = vmatmul.mubr.f32.gmra.mxu0 %v3205
        %v3276 = vpop.f32.mrf.mxu0
        %v3277 = vadd.f32 0.0, %v3276
        %v3278 = vpop.f32.mrf.mxu0
        %3279 = vmatprep.mubr.f32.mxu0 0.0
        %3280 = vmatmul.mubr.f32.gmra.mxu0 %v3207
        %v3281 = vpop.f32.mrf.mxu0
        %v3282 = vadd.f32 0.0, %v3281
        %v3283 = vpop.f32.mrf.mxu0
        %3284 = vdwg.mxu0
        %v3285 = vadd.f32 %v3195, %v3277
        %v3286 = vadd.f32 %v3200, %v3282
        %v3288 = vlaneseq
        %v3289 = vshrl.u32 %v3288, 7
        %v3290 = vsub.s32 0, %v3289
        %v3291 = vrot.slane %v3031, %v3290
        %v3293 = vmul.f32 %v3285, %v3291
        %v3294 = vmul.f32 %v3286, %v3291
        %v3296 = vlaneseq
        %v3297 = vshrl.u32 %v3296, 7
        %v3298 = vsub.s32 0, %v3297
        %v3299 = vrot.slane %v3033, %v3298
        %v3301 = vadd.f32 %v3293, %v3299
        %v3302 = vadd.f32 %v3294, %v3299
        %v3303 = vadd.f32 %v3301, %v2651
        %v3304 = vadd.f32 %v3302, %v2652
        %v3305 = vmax.f32 %v3303, 0.0
        %v3306 = vmax.f32 %v3304, 0.0
        %v3307 = vadd.f32 %v3305, %v1997
        %v3308 = vadd.f32 %v3306, %v1998
        %v3309 = vmax.f32 %v3307, 0.0
        %v3310 = vmax.f32 %v3308, 0.0
        %v3311 = vld [vmem:[%s6] sm:$0xff]
        %v3312 = vld [vmem:[%s6 + $0x8] sm:$0xff]
        %v3313 = vld [vmem:[%s6 + $0x10] sm:$0xff]
        %v3314 = vld [vmem:[%s6 + $0x18] sm:$0xff]
        %v3315 = vld [vmem:[%s6 + $0x20] sm:$0xff]
        %v3316 = vld [vmem:[%s6 + $0x28] sm:$0xff]
        %v3317 = vld [vmem:[%s6 + $0x30] sm:$0xff]
        %v3318 = vld [vmem:[%s6 + $0x38] sm:$0xff]
        %v3319 = vld [vmem:[%s6 + $0x40] sm:$0xff]
        %v3320 = vld [vmem:[%s6 + $0x48] sm:$0xff]
        %v3321 = vld [vmem:[%s6 + $0x50] sm:$0xff]
        %v3322 = vld [vmem:[%s6 + $0x58] sm:$0xff]
        %v3323 = vld [vmem:[%s6 + $0x60] sm:$0xff]
        %v3324 = vld [vmem:[%s6 + $0x68] sm:$0xff]
        %v3325 = vld [vmem:[%s6 + $0x70] sm:$0xff]
        %v3326 = vld [vmem:[%s6 + $0x78] sm:$0xff]
        %s3327 = scalar_lea.vmem %s6, 128
        %v3328 = vld [vmem:[%s3327] sm:$0xff]
        %v3329 = vld [vmem:[%s3327 + $0x8] sm:$0xff]
        %v3330 = vld [vmem:[%s3327 + $0x10] sm:$0xff]
        %v3331 = vld [vmem:[%s3327 + $0x18] sm:$0xff]
        %v3332 = vld [vmem:[%s3327 + $0x20] sm:$0xff]
        %v3333 = vld [vmem:[%s3327 + $0x28] sm:$0xff]
        %v3334 = vld [vmem:[%s3327 + $0x30] sm:$0xff]
        %v3335 = vld [vmem:[%s3327 + $0x38] sm:$0xff]
        %v3336 = vld [vmem:[%s3327 + $0x40] sm:$0xff]
        %v3337 = vld [vmem:[%s3327 + $0x48] sm:$0xff]
        %v3338 = vld [vmem:[%s3327 + $0x50] sm:$0xff]
        %v3339 = vld [vmem:[%s3327 + $0x58] sm:$0xff]
        %v3340 = vld [vmem:[%s3327 + $0x60] sm:$0xff]
        %v3341 = vld [vmem:[%s3327 + $0x68] sm:$0xff]
        %v3342 = vld [vmem:[%s3327 + $0x70] sm:$0xff]
        %v3343 = vld [vmem:[%s3327 + $0x78] sm:$0xff]
        %s3344 = scalar_lea.vmem %s6, 256
        %v3345 = vld [vmem:[%s3344] sm:$0xff]
        %v3346 = vld [vmem:[%s3344 + $0x8] sm:$0xff]
        %v3347 = vld [vmem:[%s3344 + $0x10] sm:$0xff]
        %v3348 = vld [vmem:[%s3344 + $0x18] sm:$0xff]
        %v3349 = vld [vmem:[%s3344 + $0x20] sm:$0xff]
        %v3350 = vld [vmem:[%s3344 + $0x28] sm:$0xff]
        %v3351 = vld [vmem:[%s3344 + $0x30] sm:$0xff]
        %v3352 = vld [vmem:[%s3344 + $0x38] sm:$0xff]
        %v3353 = vld [vmem:[%s3344 + $0x40] sm:$0xff]
        %v3354 = vld [vmem:[%s3344 + $0x48] sm:$0xff]
        %v3355 = vld [vmem:[%s3344 + $0x50] sm:$0xff]
        %v3356 = vld [vmem:[%s3344 + $0x58] sm:$0xff]
        %v3357 = vld [vmem:[%s3344 + $0x60] sm:$0xff]
        %v3358 = vld [vmem:[%s3344 + $0x68] sm:$0xff]
        %v3359 = vld [vmem:[%s3344 + $0x70] sm:$0xff]
        %v3360 = vld [vmem:[%s3344 + $0x78] sm:$0xff]
        %v3361 = vld [vmem:[#allocation13] sm:$0x1]
        %v3364 = vrot.slane %v3309, 7
        %v3365 = vrot.slane %v3310, 7
        %v3366 = vsel %vm420, %v3364, %v3365
        %v3370 = vsel %vm420, 0.0, %v3364
        %v3371 = vsel %vm420, %v3365, 0.0
        %v3374 = vrot.slane %v3370, 1
        %v3375 = vrot.slane %v3366, 1
        %v3376 = vsel %vm430, %v3374, %v3375
        %v3377 = vrot.slane %v3371, 1
        %v3378 = vsel %vm430, %v3375, %v3377
        %3381 = vmatprep.subr.mxu0 0.0
        %3382 = vmatpush1.msra.mxu0 %v3343
        %3383 = vmatprep.subr.mxu0 0.0
        %3384 = vmatpush1.msra.mxu0 %v3342
        %3385 = vmatprep.subr.mxu0 0.0
        %3386 = vmatpush1.msra.mxu0 %v3341
        %3387 = vmatprep.subr.mxu0 0.0
        %3388 = vmatpush1.msra.mxu0 %v3340
        %3389 = vmatprep.subr.mxu0 0.0
        %3390 = vmatpush1.msra.mxu0 %v3339
        %3391 = vmatprep.subr.mxu0 0.0
        %3392 = vmatpush1.msra.mxu0 %v3338
        %3393 = vmatprep.subr.mxu0 0.0
        %3394 = vmatpush1.msra.mxu0 %v3337
        %3395 = vmatprep.subr.mxu0 0.0
        %3396 = vmatpush1.msra.mxu0 %v3336
        %3397 = vmatprep.subr.mxu0 0.0
        %3398 = vmatpush1.msra.mxu0 %v3335
        %3399 = vmatprep.subr.mxu0 0.0
        %3400 = vmatpush1.msra.mxu0 %v3334
        %3401 = vmatprep.subr.mxu0 0.0
        %3402 = vmatpush1.msra.mxu0 %v3333
        %3403 = vmatprep.subr.mxu0 0.0
        %3404 = vmatpush1.msra.mxu0 %v3332
        %3405 = vmatprep.subr.mxu0 0.0
        %3406 = vmatpush1.msra.mxu0 %v3331
        %3407 = vmatprep.subr.mxu0 0.0
        %3408 = vmatpush1.msra.mxu0 %v3330
        %3409 = vmatprep.subr.mxu0 0.0
        %3410 = vmatpush1.msra.mxu0 %v3329
        %3411 = vmatprep.subr.mxu0 0.0
        %3412 = vmatpush1.msra.mxu0 %v3328
        %3413 = vmatprep.subr.mxu0 0.0
        %3414 = vmatpush2.msra.mxu0 0.0
        %3415 = vmatprep.subr.mxu0 0.0
        %3416 = vmatpush2.msra.mxu0 0.0
        %3417 = vmatprep.subr.mxu0 0.0
        %3418 = vmatpush2.msra.mxu0 0.0
        %3419 = vmatprep.subr.mxu0 0.0
        %3420 = vmatpush2.msra.mxu0 0.0
        %3421 = vmatprep.subr.mxu0 0.0
        %3422 = vmatpush2.msra.mxu0 0.0
        %3423 = vmatprep.subr.mxu0 0.0
        %3424 = vmatpush2.msra.mxu0 0.0
        %3425 = vmatprep.subr.mxu0 0.0
        %3426 = vmatpush2.msra.mxu0 0.0
        %3427 = vmatprep.subr.mxu0 0.0
        %3428 = vmatpush2.msra.mxu0 0.0
        %3429 = vmatprep.subr.mxu0 0.0
        %3430 = vmatpush2.msra.mxu0 0.0
        %3431 = vmatprep.subr.mxu0 0.0
        %3432 = vmatpush2.msra.mxu0 0.0
        %3433 = vmatprep.subr.mxu0 0.0
        %3434 = vmatpush2.msra.mxu0 0.0
        %3435 = vmatprep.subr.mxu0 0.0
        %3436 = vmatpush2.msra.mxu0 0.0
        %3437 = vmatprep.subr.mxu0 0.0
        %3438 = vmatpush2.msra.mxu0 0.0
        %3439 = vmatprep.subr.mxu0 0.0
        %3440 = vmatpush2.msra.mxu0 0.0
        %3441 = vmatprep.subr.mxu0 0.0
        %3442 = vmatpush2.msra.mxu0 0.0
        %3443 = vmatprep.subr.mxu0 0.0
        %3444 = vmatpush2.msra.mxu0 0.0
        %3445 = vmatprep.mubr.f32.mxu0 0.0
        %3446 = vmatmul.mubr.f32.gmra.mxu0 %v3376
        %v3447 = vpop.f32.mrf.mxu0
        %v3448 = vadd.f32 0.0, %v3447
        %v3449 = vpop.f32.mrf.mxu0
        %3450 = vmatprep.mubr.f32.mxu0 0.0
        %3451 = vmatmul.mubr.f32.gmra.mxu0 %v3378
        %v3452 = vpop.f32.mrf.mxu0
        %v3453 = vadd.f32 0.0, %v3452
        %v3454 = vpop.f32.mrf.mxu0
        %3455 = vdwg.mxu0
        %3456 = vmatprep.subr.mxu0 0.0
        %3457 = vmatpush1.msra.mxu0 %v3326
        %3458 = vmatprep.subr.mxu0 0.0
        %3459 = vmatpush1.msra.mxu0 %v3325
        %3460 = vmatprep.subr.mxu0 0.0
        %3461 = vmatpush1.msra.mxu0 %v3324
        %3462 = vmatprep.subr.mxu0 0.0
        %3463 = vmatpush1.msra.mxu0 %v3323
        %3464 = vmatprep.subr.mxu0 0.0
        %3465 = vmatpush1.msra.mxu0 %v3322
        %3466 = vmatprep.subr.mxu0 0.0
        %3467 = vmatpush1.msra.mxu0 %v3321
        %3468 = vmatprep.subr.mxu0 0.0
        %3469 = vmatpush1.msra.mxu0 %v3320
        %3470 = vmatprep.subr.mxu0 0.0
        %3471 = vmatpush1.msra.mxu0 %v3319
        %3472 = vmatprep.subr.mxu0 0.0
        %3473 = vmatpush1.msra.mxu0 %v3318
        %3474 = vmatprep.subr.mxu0 0.0
        %3475 = vmatpush1.msra.mxu0 %v3317
        %3476 = vmatprep.subr.mxu0 0.0
        %3477 = vmatpush1.msra.mxu0 %v3316
        %3478 = vmatprep.subr.mxu0 0.0
        %3479 = vmatpush1.msra.mxu0 %v3315
        %3480 = vmatprep.subr.mxu0 0.0
        %3481 = vmatpush1.msra.mxu0 %v3314
        %3482 = vmatprep.subr.mxu0 0.0
        %3483 = vmatpush1.msra.mxu0 %v3313
        %3484 = vmatprep.subr.mxu0 0.0
        %3485 = vmatpush1.msra.mxu0 %v3312
        %3486 = vmatprep.subr.mxu0 0.0
        %3487 = vmatpush1.msra.mxu0 %v3311
        %3488 = vmatprep.subr.mxu0 0.0
        %3489 = vmatpush2.msra.mxu0 0.0
        %3490 = vmatprep.subr.mxu0 0.0
        %3491 = vmatpush2.msra.mxu0 0.0
        %3492 = vmatprep.subr.mxu0 0.0
        %3493 = vmatpush2.msra.mxu0 0.0
        %3494 = vmatprep.subr.mxu0 0.0
        %3495 = vmatpush2.msra.mxu0 0.0
        %3496 = vmatprep.subr.mxu0 0.0
        %3497 = vmatpush2.msra.mxu0 0.0
        %3498 = vmatprep.subr.mxu0 0.0
        %3499 = vmatpush2.msra.mxu0 0.0
        %3500 = vmatprep.subr.mxu0 0.0
        %3501 = vmatpush2.msra.mxu0 0.0
        %3502 = vmatprep.subr.mxu0 0.0
        %3503 = vmatpush2.msra.mxu0 0.0
        %3504 = vmatprep.subr.mxu0 0.0
        %3505 = vmatpush2.msra.mxu0 0.0
        %3506 = vmatprep.subr.mxu0 0.0
        %3507 = vmatpush2.msra.mxu0 0.0
        %3508 = vmatprep.subr.mxu0 0.0
        %3509 = vmatpush2.msra.mxu0 0.0
        %3510 = vmatprep.subr.mxu0 0.0
        %3511 = vmatpush2.msra.mxu0 0.0
        %3512 = vmatprep.subr.mxu0 0.0
        %3513 = vmatpush2.msra.mxu0 0.0
        %3514 = vmatprep.subr.mxu0 0.0
        %3515 = vmatpush2.msra.mxu0 0.0
        %3516 = vmatprep.subr.mxu0 0.0
        %3517 = vmatpush2.msra.mxu0 0.0
        %3518 = vmatprep.subr.mxu0 0.0
        %3519 = vmatpush2.msra.mxu0 0.0
        %3520 = vmatprep.mubr.f32.mxu0 0.0
        %3521 = vmatmul.mubr.f32.gmra.mxu0 %v3370
        %v3522 = vpop.f32.mrf.mxu0
        %v3523 = vadd.f32 %v3448, %v3522
        %v3524 = vpop.f32.mrf.mxu0
        %3525 = vmatprep.mubr.f32.mxu0 0.0
        %3526 = vmatmul.mubr.f32.gmra.mxu0 %v3366
        %v3527 = vpop.f32.mrf.mxu0
        %v3528 = vadd.f32 %v3453, %v3527
        %v3529 = vpop.f32.mrf.mxu0
        %3530 = vdwg.mxu0
        %v3531 = vrot.slane %v3370, 2
        %v3532 = vrot.slane %v3366, 2
        %v3533 = vsel %vm595, %v3531, %v3532
        %v3534 = vrot.slane %v3371, 2
        %v3535 = vsel %vm595, %v3532, %v3534
        %3538 = vmatprep.subr.mxu0 0.0
        %3539 = vmatpush1.msra.mxu0 %v3360
        %3540 = vmatprep.subr.mxu0 0.0
        %3541 = vmatpush1.msra.mxu0 %v3359
        %3542 = vmatprep.subr.mxu0 0.0
        %3543 = vmatpush1.msra.mxu0 %v3358
        %3544 = vmatprep.subr.mxu0 0.0
        %3545 = vmatpush1.msra.mxu0 %v3357
        %3546 = vmatprep.subr.mxu0 0.0
        %3547 = vmatpush1.msra.mxu0 %v3356
        %3548 = vmatprep.subr.mxu0 0.0
        %3549 = vmatpush1.msra.mxu0 %v3355
        %3550 = vmatprep.subr.mxu0 0.0
        %3551 = vmatpush1.msra.mxu0 %v3354
        %3552 = vmatprep.subr.mxu0 0.0
        %3553 = vmatpush1.msra.mxu0 %v3353
        %3554 = vmatprep.subr.mxu0 0.0
        %3555 = vmatpush1.msra.mxu0 %v3352
        %3556 = vmatprep.subr.mxu0 0.0
        %3557 = vmatpush1.msra.mxu0 %v3351
        %3558 = vmatprep.subr.mxu0 0.0
        %3559 = vmatpush1.msra.mxu0 %v3350
        %3560 = vmatprep.subr.mxu0 0.0
        %3561 = vmatpush1.msra.mxu0 %v3349
        %3562 = vmatprep.subr.mxu0 0.0
        %3563 = vmatpush1.msra.mxu0 %v3348
        %3564 = vmatprep.subr.mxu0 0.0
        %3565 = vmatpush1.msra.mxu0 %v3347
        %3566 = vmatprep.subr.mxu0 0.0
        %3567 = vmatpush1.msra.mxu0 %v3346
        %3568 = vmatprep.subr.mxu0 0.0
        %3569 = vmatpush1.msra.mxu0 %v3345
        %3570 = vmatprep.subr.mxu0 0.0
        %3571 = vmatpush2.msra.mxu0 0.0
        %3572 = vmatprep.subr.mxu0 0.0
        %3573 = vmatpush2.msra.mxu0 0.0
        %3574 = vmatprep.subr.mxu0 0.0
        %3575 = vmatpush2.msra.mxu0 0.0
        %3576 = vmatprep.subr.mxu0 0.0
        %3577 = vmatpush2.msra.mxu0 0.0
        %3578 = vmatprep.subr.mxu0 0.0
        %3579 = vmatpush2.msra.mxu0 0.0
        %3580 = vmatprep.subr.mxu0 0.0
        %3581 = vmatpush2.msra.mxu0 0.0
        %3582 = vmatprep.subr.mxu0 0.0
        %3583 = vmatpush2.msra.mxu0 0.0
        %3584 = vmatprep.subr.mxu0 0.0
        %3585 = vmatpush2.msra.mxu0 0.0
        %3586 = vmatprep.subr.mxu0 0.0
        %3587 = vmatpush2.msra.mxu0 0.0
        %3588 = vmatprep.subr.mxu0 0.0
        %3589 = vmatpush2.msra.mxu0 0.0
        %3590 = vmatprep.subr.mxu0 0.0
        %3591 = vmatpush2.msra.mxu0 0.0
        %3592 = vmatprep.subr.mxu0 0.0
        %3593 = vmatpush2.msra.mxu0 0.0
        %3594 = vmatprep.subr.mxu0 0.0
        %3595 = vmatpush2.msra.mxu0 0.0
        %3596 = vmatprep.subr.mxu0 0.0
        %3597 = vmatpush2.msra.mxu0 0.0
        %3598 = vmatprep.subr.mxu0 0.0
        %3599 = vmatpush2.msra.mxu0 0.0
        %3600 = vmatprep.subr.mxu0 0.0
        %3601 = vmatpush2.msra.mxu0 0.0
        %3602 = vmatprep.mubr.f32.mxu0 0.0
        %3603 = vmatmul.mubr.f32.gmra.mxu0 %v3533
        %v3604 = vpop.f32.mrf.mxu0
        %v3605 = vadd.f32 0.0, %v3604
        %v3606 = vpop.f32.mrf.mxu0
        %3607 = vmatprep.mubr.f32.mxu0 0.0
        %3608 = vmatmul.mubr.f32.gmra.mxu0 %v3535
        %v3609 = vpop.f32.mrf.mxu0
        %v3610 = vadd.f32 0.0, %v3609
        %v3611 = vpop.f32.mrf.mxu0
        %3612 = vdwg.mxu0
        %v3613 = vadd.f32 %v3523, %v3605
        %v3614 = vadd.f32 %v3528, %v3610
        %v3616 = vlaneseq
        %v3617 = vshrl.u32 %v3616, 7
        %v3618 = vsub.s32 0, %v3617
        %v3619 = vrot.slane %v3361, %v3618
        %v3621 = vadd.f32 %v3613, %v3619
        %v3622 = vadd.f32 %v3614, %v3619
        %v3623 = vadd.f32 %v3621, %v407
        %v3624 = vadd.f32 %v3622, %v408
        %v3625 = vmax.f32 %v3623, 0.0
        %v3626 = vmax.f32 %v3624, 0.0
        %3627 = vst.msk [vmem:[%s406] sm:$0xff] %vm436, %v3625
        %3628 = vst.msk [vmem:[%s406 + $0x8] sm:$0xff] %vm436, %v3626
        %s3629 = sand.u32 %s209, 1
        %s3630 = scalar_lea.sflag [#allocation4], %s3629
        %s3631 = sand.u32 %s209, 1
        %s3632 = smul.addr %s3631, 16
        %s3633 = scalar_lea.vmem [#allocation14], %s3632
        // Predicated region
        $region81: #{tpu_custom_call.1} parent=51 // pred_check
          %p3634 = pneg %p219
        $region82: #{tpu_custom_call.1} parent=51 // pred_check_branch
          %3636 = sbr.rel (%p3634) target = $region84
        $region83: #{tpu_custom_call.1} parent=51 // pred_region
          %s3638 = ssub.s32 256, 256
          %3639 = vsyncadd %s3630, %s3638
          %s3640 = smul.addr %s28, 2
          %s3641 = smul.addr %s3640, 128
          %s3642 = scalar_lea.hbm %s8, %s3641
          %s3643 = sshll.u32 %s3633, 4
          %s3644 = int_to_ptr.vmem [resolvable:$true] %s3643
          %3649 = dma.vmem_to_hbm [thread:$0]  %s3644, 256, %s3642, %s3630, 128, 128, 8
        $region84: #{tpu_custom_call.1} parent=51 // pred_fallthru
          _
      $region52: #{tpu_custom_call.1} parent=5 // pred_fallthru
        _
      %p3650 = scmp.le.s32.totalorder 2, %s23
      // Predicated region
      $region85: #{tpu_custom_call.1} parent=5 // pred_check
        %p3651 = pneg %p3650
      $region86: #{tpu_custom_call.1} parent=5 // pred_check_branch
        %3653 = sbr.rel (%p3651) target = $region88
      $region87: #{tpu_custom_call.1} parent=5 // pred_region
        %s3654 = ssub.s32 %s23, 2
        // Predicated region
        $region89: #{tpu_custom_call.1} parent=87 // pred_check
          %p3655 = pneg %p225
        $region90: #{tpu_custom_call.1} parent=87 // pred_check_branch
          %3657 = sbr.rel (%p3655) target = $region92
        $region91: #{tpu_custom_call.1} parent=87 // pred_region
          %s3658 = sand.u32 %s210, 1
          %s3659 = scalar_lea.sflag [#allocation4], %s3658
          %s3660 = sand.u32 %s210, 1
          %s3661 = smul.addr %s3660, 16
          %s3662 = scalar_lea.vmem [#allocation14], %s3661
          %3663 = dma.done %s3659, 256
        $region92: #{tpu_custom_call.1} parent=87 // pred_fallthru
          _
      $region88: #{tpu_custom_call.1} parent=5 // pred_fallthru
        _
    $region6: #{tpu_custom_call.1} parent=1 // loop_footer
      %s27 = sadd.s32 1, %s23
    $region7: #{tpu_custom_call.1} parent=1 // loop_footer_branch
      %22 = sbr.rel target = $region3
    $region8: #{tpu_custom_call.1} parent=1 // loop_exit
      _
    %3664 = vsyncpa [#allocation3], 1
    %s3665 = scalar_lea.sflag [#allocation3], 1
    %3666 = vsyncpa %s3665, 1
    %3667 = vsyncpa [#allocation6], 1
    %3668 = vsyncpa [#allocation9], 1
    %3669 = vsyncpa [#allocation12], 1
    %3670 = vsyncpa [#allocation4], 1
    %s3671 = scalar_lea.sflag [#allocation4], 1
    %3672 = vsyncpa %s3671, 1

</llo_original>
